<compile_context>
chip_gen: v6e
topology: v6e:2x2x1
jax: 0.10.0
libtpu: 0.0.40
codegen_flags: <defaults>
</compile_context>

<pallas_src>
import functools

import jax
import jax.numpy as jnp
from jax.experimental import pallas as pl
from jax.experimental.pallas import tpu as pltpu

NEG_SLOPE = 0.01


def _rup(n, m):
    return ((n + m - 1) // m) * m


# ---------------------------------------------------------------------------
# Fused whole-network kernel: one grid step = TB samples, flat (TB*P, C) layout
# ---------------------------------------------------------------------------

def _cae4_kernel(x_ref,
                 w1_ref, b1_ref, w2_ref, b2_ref, w3_ref, b3_ref, w4_ref, b4_ref,
                 w5_ref, b5_ref, w6_ref, b6_ref,
                 w7e_ref, w7o_ref, b7_ref,
                 w8e_ref, w8o_ref, b8_ref,
                 out_ref, extra_ref,
                 *, tb, pitch, c_in, l4, l5, l6, l7e, l7o,
                 activations, neg_slope):
    P = pitch
    R = tb * P
    C = c_in
    bf16 = jnp.bfloat16

    def lrelu(y):
        return jnp.where(y >= 0.0, y, neg_slope * y)

    def su(a, n):            # rows shifted up by n (a'[r] = a[r+n]), zero tail
        if n == 0:
            return a
        return jnp.concatenate(
            [a[n:, :], jnp.zeros((n, a.shape[1]), a.dtype)], axis=0)

    def sd(a, n):            # rows shifted down by n (a'[r] = a[r-n]), zero head
        if n == 0:
            return a
        return jnp.concatenate(
            [jnp.zeros((n, a.shape[1]), a.dtype), a[:-n, :]], axis=0)

    def dot(a, w):
        return jnp.dot(a, w, preferred_element_type=jnp.float32)

    row = jax.lax.broadcasted_iota(jnp.int32, (R, 1), 0) % P

    def mask_rows(a, valid):     # zero the per-sample garbage tail rows
        return jnp.where(row < valid, a, jnp.zeros_like(a))

    # ----- input: (TB, P, 4*C) f32, phase-major channels; cast to bf16 once -----
    xf = x_ref[...].reshape(R, 4 * C).astype(bf16)
    xf1 = su(xf, 1)

    # ----- conv1 (k=5, s=2): two output phases, shared folded weight -----
    w1 = w1_ref[...]
    b1 = b1_ref[...]
    act_e = jnp.concatenate([xf, xf1[:, :C]], axis=1)               # taps 0..4, even t
    act_o = jnp.concatenate([xf[:, 2 * C:], xf1[:, :3 * C]], axis=1)  # taps 0..4, odd t
    y1e = lrelu(dot(act_e, w1) + b1).astype(bf16)
    y1o = lrelu(dot(act_o, w1) + b1).astype(bf16)

    # ----- conv2 (k=5, s=2): consumes conv1's phases, single flat output -----
    a2 = lrelu(dot(jnp.concatenate(
        [y1e, y1o, su(y1e, 1), su(y1o, 1), su(y1e, 2)], axis=1),
        w2_ref[...]) + b2_ref[...]).astype(bf16)

    # ----- conv3 (k=4, s=1) -----
    a3 = lrelu(dot(jnp.concatenate(
        [a2, su(a2, 1), su(a2, 2), su(a2, 3)], axis=1),
        w3_ref[...]) + b3_ref[...]).astype(bf16)

    # ----- conv4 (k=4, s=1) -----
    a4f = lrelu(dot(jnp.concatenate(
        [a3, su(a3, 1), su(a3, 2), su(a3, 3)], axis=1),
        w4_ref[...]) + b4_ref[...])

    # extra_out: store the full (dense, aligned) block; wrapper slices valid rows
    extra_ref[...] = a4f.reshape(tb, P, a4f.shape[1])
    a4 = mask_rows(a4f, l4).astype(bf16)

    # ----- deconv4 (k=4, s=1) -----
    a5 = mask_rows(lrelu(dot(jnp.concatenate(
        [a4, sd(a4, 1), sd(a4, 2), sd(a4, 3)], axis=1),
        w5_ref[...]) + b5_ref[...]), l5).astype(bf16)

    # ----- deconv3 (k=4, s=1) -----
    a6 = mask_rows(lrelu(dot(jnp.concatenate(
        [a5, sd(a5, 1), sd(a5, 2), sd(a5, 3)], axis=1),
        w6_ref[...]) + b6_ref[...]), l6).astype(bf16)

    # ----- deconv2 (k=5, s=2): two output phases (taps {0,2,4} / {1,3}) -----
    b7 = b7_ref[...]
    y7e = mask_rows(lrelu(dot(jnp.concatenate(
        [a6, sd(a6, 1), sd(a6, 2)], axis=1), w7e_ref[...]) + b7), l7e).astype(bf16)
    y7o = mask_rows(lrelu(dot(jnp.concatenate(
        [a6, sd(a6, 1)], axis=1), w7o_ref[...]) + b7), l7o).astype(bf16)

    # ----- deconv1 (k=5, s=2, output_padding=1): four output phases -----
    y7e1 = sd(y7e, 1)
    y7o1 = sd(y7o, 1)
    w8e = w8e_ref[...]
    w8o = w8o_ref[...]
    b8 = b8_ref[...]
    z0 = dot(jnp.concatenate([y7e, y7o1, y7e1], axis=1), w8e) + b8   # t = 4u
    z1 = dot(jnp.concatenate([y7e, y7o1], axis=1), w8o) + b8         # t = 4u + 1
    z2 = dot(jnp.concatenate([y7o, y7e, y7o1], axis=1), w8e) + b8    # t = 4u + 2
    z3 = dot(jnp.concatenate([y7o, y7e], axis=1), w8o) + b8          # t = 4u + 3

    out = jnp.concatenate([z0, z1, z2, z3], axis=1)                  # (R, 4*C)
    if activations:
        out = 0.5 * jnp.tanh(0.5 * out) + 0.5                        # stable sigmoid
    out_ref[...] = out.reshape(tb, P, 4 * C)


# ---------------------------------------------------------------------------
# Wrapper: parameter init + forward
# ---------------------------------------------------------------------------

def init_params(key, input_channels, filter_multiplier):
    ic, fm = input_channels, filter_multiplier
    c1, c2, c3, c4 = ic * fm, ic * fm * 2, ic * fm * 4, ic * fm * 8
    keys = jax.random.split(key, 16)

    def u(kk, shape, fan_in):
        bound = 1.0 / (fan_in ** 0.5)
        return jax.random.uniform(kk, shape, jnp.float32, -bound, bound)

    p = {}
    # Conv1d weights (C_out, C_in, k); PyTorch fan_in = C_in * k
    p["conv1_w"] = u(keys[0], (c1, ic, 5), ic * 5)
    p["conv1_b"] = u(keys[1], (c1,), ic * 5)
    p["conv2_w"] = u(keys[2], (c2, c1, 5), c1 * 5)
    p["conv2_b"] = u(keys[3], (c2,), c1 * 5)
    p["conv3_w"] = u(keys[4], (c3, c2, 4), c2 * 4)
    p["conv3_b"] = u(keys[5], (c3,), c2 * 4)
    p["conv4_w"] = u(keys[6], (c4, c3, 4), c3 * 4)
    p["conv4_b"] = u(keys[7], (c4,), c3 * 4)
    # ConvTranspose1d weights (C_in, C_out, k); PyTorch fan_in = C_out * k
    p["deconv4_w"] = u(keys[8], (c4, c3, 4), c3 * 4)
    p["deconv4_b"] = u(keys[9], (c3,), c3 * 4)
    p["deconv3_w"] = u(keys[10], (c3, c2, 4), c2 * 4)
    p["deconv3_b"] = u(keys[11], (c2,), c2 * 4)
    p["deconv2_w"] = u(keys[12], (c2, c1, 5), c1 * 5)
    p["deconv2_b"] = u(keys[13], (c1,), c1 * 5)
    p["deconv1_w"] = u(keys[14], (c1, ic, 5), ic * 5)
    p["deconv1_b"] = u(keys[15], (ic,), ic * 5)
    return p


def cae4_forward(params, x_ncl, *, activations=True, leaky=True,
                 neg_slope=NEG_SLOPE, batch_tile=8):
    """x_ncl: (B, C_in, L) as in PyTorch.  Returns (out_ncl, extra_out_ncl)."""
    B, C_in, L = x_ncl.shape
    C4 = params["conv4_w"].shape[0]

    def co(l, k, s):                 # Conv1d output length (no padding)
        return (l - k) // s + 1

    def do(l, k, s, op):             # ConvTranspose1d output length (no padding)
        return (l - 1) * s + k + op

    L1 = co(L, 5, 2); L2 = co(L1, 5, 2); L3 = co(L2, 4, 1); L4 = co(L3, 4, 1)
    L5 = do(L4, 4, 1, 0); L6 = do(L5, 4, 1, 0)
    L7 = do(L6, 5, 2, 0); L8 = do(L7, 5, 2, 1)
    l1e, l1o = (L1 + 1) // 2, L1 // 2
    l7e, l7o = (L7 + 1) // 2, L7 // 2

    # Common per-sample row pitch P (multiple of 8): sample b of every layer
    # lives in rows [b*P, b*P + L_layer) of a flat (TB*P, C) activation.
    needed = max(-(-L // 4), l1e, l1o, L2, L3, L4, L5, L6, l7e, l7o, -(-L8 // 4))
    P = _rup(needed, 8)
    while not (4 * P >= L and 4 * P >= L8 and P - L4 >= 3 and P - L5 >= 3
               and P - L6 >= 2 and P - l7e >= 1 and P - l7o >= 1):
        P += 8

    TB = max(1, batch_tile)
    Bp = _rup(B, TB)
    ns = neg_slope if leaky else 0.0

    # NCL -> channels-last, pad batch/length, then fold the length axis into
    # 4 phases (phase-major channels): x_ph[b, q, m*C + c] = x[b, 4q + m, c].
    x_cl = jnp.transpose(x_ncl, (0, 2, 1)).astype(jnp.float32)
    x_cl = jnp.pad(x_cl, ((0, Bp - B), (0, 4 * P - L), (0, 0)))
    x_ph = x_cl.reshape(Bp, P, 4 * C_in)

    # Weight prep: tap-folded bf16 matmul operands, f32 row biases.
    def fold_conv(w):      # Conv1d (Cout, Cin, k) -> (k*Cin, Cout), tap-major rows
        k, ci, cout = w.shape[2], w.shape[1], w.shape[0]
        return jnp.transpose(w, (2, 1, 0)).reshape(k * ci, cout).astype(jnp.bfloat16)

    def fold_deconv(w, taps):  # ConvT1d (Cin, Cout, k), chosen taps -> (t*Cin, Cout)
        return jnp.concatenate([w[:, :, s] for s in taps], axis=0).astype(jnp.bfloat16)

    def brow(b):
        return b.reshape(1, -1).astype(jnp.float32)

    ops = [
        fold_conv(params["conv1_w"]), brow(params["conv1_b"]),
        fold_conv(params["conv2_w"]), brow(params["conv2_b"]),
        fold_conv(params["conv3_w"]), brow(params["conv3_b"]),
        fold_conv(params["conv4_w"]), brow(params["conv4_b"]),
        fold_deconv(params["deconv4_w"], (0, 1, 2, 3)), brow(params["deconv4_b"]),
        fold_deconv(params["deconv3_w"], (0, 1, 2, 3)), brow(params["deconv3_b"]),
        fold_deconv(params["deconv2_w"], (0, 2, 4)),
        fold_deconv(params["deconv2_w"], (1, 3)), brow(params["deconv2_b"]),
        fold_deconv(params["deconv1_w"], (0, 2, 4)),
        fold_deconv(params["deconv1_w"], (1, 3)), brow(params["deconv1_b"]),
    ]

    def batched(c):
        return pl.BlockSpec((TB, P, c), lambda i: (i, 0, 0))

    def resident(a):     # same block every grid step -> stays resident in VMEM
        return pl.BlockSpec(a.shape, lambda i, _n=a.ndim: (0,) * _n)

    kernel = functools.partial(
        _cae4_kernel, tb=TB, pitch=P, c_in=C_in,
        l4=L4, l5=L5, l6=L6, l7e=l7e, l7o=l7o,
        activations=activations, neg_slope=ns)

    out_ph, extra_ph = pl.pallas_call(
        kernel,
        grid=(Bp // TB,),
        in_specs=[batched(4 * C_in)] + [resident(a) for a in ops],
        out_specs=[batched(4 * C_in), batched(C4)],
        out_shape=(jax.ShapeDtypeStruct((Bp, P, 4 * C_in), jnp.float32),
                   jax.ShapeDtypeStruct((Bp, P, C4), jnp.float32)),
        compiler_params=pltpu.CompilerParams(
            dimension_semantics=("parallel",)),
    )(x_ph, *ops)

    # Undo the phase packing in XLA: out_ph[b, q, m*C + c] = y[b, 4q + m, c].
    recon = out_ph.reshape(Bp, 4 * P, C_in)[:B, :L8, :]
    recon = jnp.transpose(recon, (0, 2, 1))                    # (B, C_in, L8)
    extra = jnp.transpose(extra_ph[:B, :L4, :], (0, 2, 1))     # (B, C4, L4)
    return recon, extra


if __name__ == "__main__":
    input_channels = 4
    filter_multiplier = 4
    batch = 16           # > batch_tile so the grid has >= 2 steps (megacore/v7x)
    length = 64          # minimum valid length for this architecture is 37

    key = jax.random.PRNGKey(0)
    k_param, k_x = jax.random.split(key)
    params = init_params(k_param, input_channels, filter_multiplier)
    x = jax.random.uniform(k_x, (batch, input_channels, length), jnp.float32)

    fwd = jax.jit(functools.partial(cae4_forward, activations=True))
    out, extra = fwd(params, x)
    jax.block_until_ready(out)
    jax.block_until_ready(extra)

    # Shape checks against PyTorch CAE_4 semantics.
    L1 = (length - 5) // 2 + 1
    L2 = (L1 - 5) // 2 + 1
    L4 = L2 - 6
    L7 = (L2 - 1) * 2 + 5
    L8 = (L7 - 1) * 2 + 5 + 1
    C4 = input_channels * filter_multiplier * 8
    assert out.shape == (batch, input_channels, L8), out.shape
    assert extra.shape == (batch, C4, L4), extra.shape
    assert bool(jnp.all(jnp.isfinite(out))), "non-finite reconstruction"
    assert bool(jnp.all(jnp.isfinite(extra))), "non-finite extra_out"
    print("KERNEL_OK")
</pallas_src>

<mosaic_0001>
module attributes {stable_mosaic.version = 11 : i64} {
  func.func @_cae4_kernel(%arg0: i32, %arg1: memref<8x16x16xf32, #tpu.memory_space<vmem>>, %arg2: memref<20x16xbf16, #tpu.memory_space<vmem>>, %arg3: memref<1x16xf32, #tpu.memory_space<vmem>>, %arg4: memref<80x32xbf16, #tpu.memory_space<vmem>>, %arg5: memref<1x32xf32, #tpu.memory_space<vmem>>, %arg6: memref<128x64xbf16, #tpu.memory_space<vmem>>, %arg7: memref<1x64xf32, #tpu.memory_space<vmem>>, %arg8: memref<256x128xbf16, #tpu.memory_space<vmem>>, %arg9: memref<1x128xf32, #tpu.memory_space<vmem>>, %arg10: memref<512x64xbf16, #tpu.memory_space<vmem>>, %arg11: memref<1x64xf32, #tpu.memory_space<vmem>>, %arg12: memref<256x32xbf16, #tpu.memory_space<vmem>>, %arg13: memref<1x32xf32, #tpu.memory_space<vmem>>, %arg14: memref<96x16xbf16, #tpu.memory_space<vmem>>, %arg15: memref<64x16xbf16, #tpu.memory_space<vmem>>, %arg16: memref<1x16xf32, #tpu.memory_space<vmem>>, %arg17: memref<48x4xbf16, #tpu.memory_space<vmem>>, %arg18: memref<32x4xbf16, #tpu.memory_space<vmem>>, %arg19: memref<1x4xf32, #tpu.memory_space<vmem>>, %arg20: memref<8x16x16xf32, #tpu.memory_space<vmem>>, %arg21: memref<8x16x128xf32, #tpu.memory_space<vmem>>) attributes {dimension_semantics = [#tpu.dimension_semantics<parallel>], iteration_bounds = array<i64: 2>, scalar_prefetch = 0 : i64, scratch_operands = 0 : i64, tpu.core_type = #tpu.core_type<tc>, window_params = [{transform_indices = @transform_0, window_bounds = array<i64: 8, 16, 16>}, {pipeline_mode = #tpu.pipeline_mode<synchronous>, transform_indices = @transform_1, window_bounds = array<i64: 20, 16>}, {pipeline_mode = #tpu.pipeline_mode<synchronous>, transform_indices = @transform_2, window_bounds = array<i64: 1, 16>}, {pipeline_mode = #tpu.pipeline_mode<synchronous>, transform_indices = @transform_3, window_bounds = array<i64: 80, 32>}, {pipeline_mode = #tpu.pipeline_mode<synchronous>, transform_indices = @transform_4, window_bounds = array<i64: 1, 32>}, {pipeline_mode = #tpu.pipeline_mode<synchronous>, transform_indices = @transform_5, window_bounds = array<i64: 128, 64>}, {pipeline_mode = #tpu.pipeline_mode<synchronous>, transform_indices = @transform_6, window_bounds = array<i64: 1, 64>}, {pipeline_mode = #tpu.pipeline_mode<synchronous>, transform_indices = @transform_7, window_bounds = array<i64: 256, 128>}, {pipeline_mode = #tpu.pipeline_mode<synchronous>, transform_indices = @transform_8, window_bounds = array<i64: 1, 128>}, {pipeline_mode = #tpu.pipeline_mode<synchronous>, transform_indices = @transform_9, window_bounds = array<i64: 512, 64>}, {pipeline_mode = #tpu.pipeline_mode<synchronous>, transform_indices = @transform_10, window_bounds = array<i64: 1, 64>}, {pipeline_mode = #tpu.pipeline_mode<synchronous>, transform_indices = @transform_11, window_bounds = array<i64: 256, 32>}, {pipeline_mode = #tpu.pipeline_mode<synchronous>, transform_indices = @transform_12, window_bounds = array<i64: 1, 32>}, {pipeline_mode = #tpu.pipeline_mode<synchronous>, transform_indices = @transform_13, window_bounds = array<i64: 96, 16>}, {pipeline_mode = #tpu.pipeline_mode<synchronous>, transform_indices = @transform_14, window_bounds = array<i64: 64, 16>}, {pipeline_mode = #tpu.pipeline_mode<synchronous>, transform_indices = @transform_15, window_bounds = array<i64: 1, 16>}, {pipeline_mode = #tpu.pipeline_mode<synchronous>, transform_indices = @transform_16, window_bounds = array<i64: 48, 4>}, {pipeline_mode = #tpu.pipeline_mode<synchronous>, transform_indices = @transform_17, window_bounds = array<i64: 32, 4>}, {pipeline_mode = #tpu.pipeline_mode<synchronous>, transform_indices = @transform_18, window_bounds = array<i64: 1, 4>}, {transform_indices = @transform_19, window_bounds = array<i64: 8, 16, 16>}, {transform_indices = @transform_20, window_bounds = array<i64: 8, 16, 128>}]} {
    %0 = tpu.iota {dimensions = array<i32: 0>} : vector<128x1xi32>
    %c16_i32 = arith.constant 16 : i32
    %c0_i32 = arith.constant 0 : i32
    %1 = arith.cmpi eq, %c16_i32, %c0_i32 : i32
    %c1_i32 = arith.constant 1 : i32
    %2 = arith.select %1, %c1_i32, %c16_i32 : i32
    %3 = vector.broadcast %2 : i32 to vector<128x1xi32>
    %4 = arith.remsi %0, %3 : vector<128x1xi32>
    %c0_i32_0 = arith.constant 0 : i32
    %5 = vector.broadcast %c0_i32_0 : i32 to vector<128x1xi32>
    %6 = arith.cmpi ne, %4, %5 : vector<128x1xi32>
    %c0_i32_1 = arith.constant 0 : i32
    %7 = vector.broadcast %c0_i32_1 : i32 to vector<128x1xi32>
    %8 = arith.cmpi slt, %4, %7 : vector<128x1xi32>
    %c0_i32_2 = arith.constant 0 : i32
    %9 = arith.cmpi slt, %2, %c0_i32_2 : i32
    %10 = vector.broadcast %9 : i1 to vector<128x1xi1>
    %11 = vector.broadcast %10 : vector<128x1xi1> to vector<128x1xi1>
    %12 = arith.xori %8, %11 : vector<128x1xi1>
    %13 = arith.andi %12, %6 : vector<128x1xi1>
    %14 = vector.broadcast %2 : i32 to vector<128x1xi32>
    %15 = arith.addi %4, %14 : vector<128x1xi32>
    %16 = arith.select %13, %15, %4 : vector<128x1xi1>, vector<128x1xi32>
    %c0 = arith.constant 0 : index
    %c0_3 = arith.constant 0 : index
    %c0_4 = arith.constant 0 : index
    %17 = vector.load %arg1[%c0, %c0_3, %c0_4] : memref<8x16x16xf32, #tpu.memory_space<vmem>>, vector<8x16x16xf32>
    %18 = vector.shape_cast %17 : vector<8x16x16xf32> to vector<128x16xf32>
    %19 = arith.truncf %18 : vector<128x16xf32> to vector<128x16xbf16>
    %20 = vector.extract_strided_slice %19 {offsets = [1, 0], sizes = [127, 16], strides = [1, 1]} : vector<128x16xbf16> to vector<127x16xbf16>
    %cst = arith.constant 0.000000e+00 : bf16
    %21 = vector.broadcast %cst : bf16 to vector<1x16xbf16>
    %22 = tpu.concatenate %20, %21 in 0 : vector<127x16xbf16>, vector<1x16xbf16> -> vector<128x16xbf16>
    %c0_5 = arith.constant 0 : index
    %c0_6 = arith.constant 0 : index
    %23 = vector.load %arg2[%c0_5, %c0_6] : memref<20x16xbf16, #tpu.memory_space<vmem>>, vector<20x16xbf16>
    %c0_7 = arith.constant 0 : index
    %c0_8 = arith.constant 0 : index
    %24 = vector.load %arg3[%c0_7, %c0_8] : memref<1x16xf32, #tpu.memory_space<vmem>>, vector<1x16xf32>
    %25 = vector.extract_strided_slice %22 {offsets = [0, 0], sizes = [128, 4], strides = [1, 1]} : vector<128x16xbf16> to vector<128x4xbf16>
    %26 = tpu.concatenate %19, %25 in 1 : vector<128x16xbf16>, vector<128x4xbf16> -> vector<128x20xbf16>
    %27 = vector.extract_strided_slice %19 {offsets = [0, 8], sizes = [128, 8], strides = [1, 1]} : vector<128x16xbf16> to vector<128x8xbf16>
    %28 = vector.extract_strided_slice %22 {offsets = [0, 0], sizes = [128, 12], strides = [1, 1]} : vector<128x16xbf16> to vector<128x12xbf16>
    %29 = tpu.concatenate %27, %28 in 1 : vector<128x8xbf16>, vector<128x12xbf16> -> vector<128x20xbf16>
    %cst_9 = arith.constant dense<0.000000e+00> : vector<128x16xf32>
    %30 = tpu.matmul %26, %23, %cst_9 {dimension_numbers = #tpu.dot_dimension_numbers<[1], [0], [0], [1], [0, 0, 1, 1], [], []>} : vector<128x20xbf16>, vector<20x16xbf16>, vector<128x16xf32> -> vector<128x16xf32>
    %31 = vector.broadcast %24 : vector<1x16xf32> to vector<128x16xf32>
    %32 = arith.addf %30, %31 : vector<128x16xf32>
    %cst_10 = arith.constant 0.000000e+00 : f32
    %33 = vector.broadcast %cst_10 : f32 to vector<128x16xf32>
    %34 = arith.cmpf oge, %32, %33 : vector<128x16xf32>
    %cst_11 = arith.constant 0.00999999977 : f32
    %35 = vector.broadcast %cst_11 : f32 to vector<128x16xf32>
    %36 = arith.mulf %35, %32 : vector<128x16xf32>
    %37 = arith.select %34, %32, %36 : vector<128x16xi1>, vector<128x16xf32>
    %38 = arith.truncf %37 : vector<128x16xf32> to vector<128x16xbf16>
    %cst_12 = arith.constant dense<0.000000e+00> : vector<128x16xf32>
    %39 = tpu.matmul %29, %23, %cst_12 {dimension_numbers = #tpu.dot_dimension_numbers<[1], [0], [0], [1], [0, 0, 1, 1], [], []>} : vector<128x20xbf16>, vector<20x16xbf16>, vector<128x16xf32> -> vector<128x16xf32>
    %40 = vector.broadcast %24 : vector<1x16xf32> to vector<128x16xf32>
    %41 = arith.addf %39, %40 : vector<128x16xf32>
    %cst_13 = arith.constant 0.000000e+00 : f32
    %42 = vector.broadcast %cst_13 : f32 to vector<128x16xf32>
    %43 = arith.cmpf oge, %41, %42 : vector<128x16xf32>
    %cst_14 = arith.constant 0.00999999977 : f32
    %44 = vector.broadcast %cst_14 : f32 to vector<128x16xf32>
    %45 = arith.mulf %44, %41 : vector<128x16xf32>
    %46 = arith.select %43, %41, %45 : vector<128x16xi1>, vector<128x16xf32>
    %47 = arith.truncf %46 : vector<128x16xf32> to vector<128x16xbf16>
    %48 = vector.extract_strided_slice %38 {offsets = [1, 0], sizes = [127, 16], strides = [1, 1]} : vector<128x16xbf16> to vector<127x16xbf16>
    %cst_15 = arith.constant 0.000000e+00 : bf16
    %49 = vector.broadcast %cst_15 : bf16 to vector<1x16xbf16>
    %50 = tpu.concatenate %48, %49 in 0 : vector<127x16xbf16>, vector<1x16xbf16> -> vector<128x16xbf16>
    %51 = vector.extract_strided_slice %47 {offsets = [1, 0], sizes = [127, 16], strides = [1, 1]} : vector<128x16xbf16> to vector<127x16xbf16>
    %cst_16 = arith.constant 0.000000e+00 : bf16
    %52 = vector.broadcast %cst_16 : bf16 to vector<1x16xbf16>
    %53 = tpu.concatenate %51, %52 in 0 : vector<127x16xbf16>, vector<1x16xbf16> -> vector<128x16xbf16>
    %54 = vector.extract_strided_slice %38 {offsets = [2, 0], sizes = [126, 16], strides = [1, 1]} : vector<128x16xbf16> to vector<126x16xbf16>
    %cst_17 = arith.constant 0.000000e+00 : bf16
    %55 = vector.broadcast %cst_17 : bf16 to vector<2x16xbf16>
    %56 = tpu.concatenate %54, %55 in 0 : vector<126x16xbf16>, vector<2x16xbf16> -> vector<128x16xbf16>
    %57 = tpu.concatenate %38, %47, %50, %53, %56 in 1 : vector<128x16xbf16>, vector<128x16xbf16>, vector<128x16xbf16>, vector<128x16xbf16>, vector<128x16xbf16> -> vector<128x80xbf16>
    %c0_18 = arith.constant 0 : index
    %c0_19 = arith.constant 0 : index
    %58 = vector.load %arg4[%c0_18, %c0_19] : memref<80x32xbf16, #tpu.memory_space<vmem>>, vector<80x32xbf16>
    %cst_20 = arith.constant dense<0.000000e+00> : vector<128x32xf32>
    %59 = tpu.matmul %57, %58, %cst_20 {dimension_numbers = #tpu.dot_dimension_numbers<[1], [0], [0], [1], [0, 0, 1, 1], [], []>} : vector<128x80xbf16>, vector<80x32xbf16>, vector<128x32xf32> -> vector<128x32xf32>
    %c0_21 = arith.constant 0 : index
    %c0_22 = arith.constant 0 : index
    %60 = vector.load %arg5[%c0_21, %c0_22] : memref<1x32xf32, #tpu.memory_space<vmem>>, vector<1x32xf32>
    %61 = vector.broadcast %60 : vector<1x32xf32> to vector<128x32xf32>
    %62 = arith.addf %59, %61 : vector<128x32xf32>
    %cst_23 = arith.constant 0.000000e+00 : f32
    %63 = vector.broadcast %cst_23 : f32 to vector<128x32xf32>
    %64 = arith.cmpf oge, %62, %63 : vector<128x32xf32>
    %cst_24 = arith.constant 0.00999999977 : f32
    %65 = vector.broadcast %cst_24 : f32 to vector<128x32xf32>
    %66 = arith.mulf %65, %62 : vector<128x32xf32>
    %67 = arith.select %64, %62, %66 : vector<128x32xi1>, vector<128x32xf32>
    %68 = arith.truncf %67 : vector<128x32xf32> to vector<128x32xbf16>
    %69 = vector.extract_strided_slice %68 {offsets = [1, 0], sizes = [127, 32], strides = [1, 1]} : vector<128x32xbf16> to vector<127x32xbf16>
    %cst_25 = arith.constant 0.000000e+00 : bf16
    %70 = vector.broadcast %cst_25 : bf16 to vector<1x32xbf16>
    %71 = tpu.concatenate %69, %70 in 0 : vector<127x32xbf16>, vector<1x32xbf16> -> vector<128x32xbf16>
    %72 = vector.extract_strided_slice %68 {offsets = [2, 0], sizes = [126, 32], strides = [1, 1]} : vector<128x32xbf16> to vector<126x32xbf16>
    %cst_26 = arith.constant 0.000000e+00 : bf16
    %73 = vector.broadcast %cst_26 : bf16 to vector<2x32xbf16>
    %74 = tpu.concatenate %72, %73 in 0 : vector<126x32xbf16>, vector<2x32xbf16> -> vector<128x32xbf16>
    %75 = vector.extract_strided_slice %68 {offsets = [3, 0], sizes = [125, 32], strides = [1, 1]} : vector<128x32xbf16> to vector<125x32xbf16>
    %cst_27 = arith.constant 0.000000e+00 : bf16
    %76 = vector.broadcast %cst_27 : bf16 to vector<3x32xbf16>
    %77 = tpu.concatenate %75, %76 in 0 : vector<125x32xbf16>, vector<3x32xbf16> -> vector<128x32xbf16>
    %78 = tpu.concatenate %68, %71, %74, %77 in 1 : vector<128x32xbf16>, vector<128x32xbf16>, vector<128x32xbf16>, vector<128x32xbf16> -> vector<128x128xbf16>
    %c0_28 = arith.constant 0 : index
    %c0_29 = arith.constant 0 : index
    %79 = vector.load %arg6[%c0_28, %c0_29] : memref<128x64xbf16, #tpu.memory_space<vmem>>, vector<128x64xbf16>
    %cst_30 = arith.constant dense<0.000000e+00> : vector<128x64xf32>
    %80 = tpu.matmul %78, %79, %cst_30 {dimension_numbers = #tpu.dot_dimension_numbers<[1], [0], [0], [1], [0, 0, 1, 1], [], []>} : vector<128x128xbf16>, vector<128x64xbf16>, vector<128x64xf32> -> vector<128x64xf32>
    %c0_31 = arith.constant 0 : index
    %c0_32 = arith.constant 0 : index
    %81 = vector.load %arg7[%c0_31, %c0_32] : memref<1x64xf32, #tpu.memory_space<vmem>>, vector<1x64xf32>
    %82 = vector.broadcast %81 : vector<1x64xf32> to vector<128x64xf32>
    %83 = arith.addf %80, %82 : vector<128x64xf32>
    %cst_33 = arith.constant 0.000000e+00 : f32
    %84 = vector.broadcast %cst_33 : f32 to vector<128x64xf32>
    %85 = arith.cmpf oge, %83, %84 : vector<128x64xf32>
    %cst_34 = arith.constant 0.00999999977 : f32
    %86 = vector.broadcast %cst_34 : f32 to vector<128x64xf32>
    %87 = arith.mulf %86, %83 : vector<128x64xf32>
    %88 = arith.select %85, %83, %87 : vector<128x64xi1>, vector<128x64xf32>
    %89 = arith.truncf %88 : vector<128x64xf32> to vector<128x64xbf16>
    %90 = vector.extract_strided_slice %89 {offsets = [1, 0], sizes = [127, 64], strides = [1, 1]} : vector<128x64xbf16> to vector<127x64xbf16>
    %cst_35 = arith.constant 0.000000e+00 : bf16
    %91 = vector.broadcast %cst_35 : bf16 to vector<1x64xbf16>
    %92 = tpu.concatenate %90, %91 in 0 : vector<127x64xbf16>, vector<1x64xbf16> -> vector<128x64xbf16>
    %93 = vector.extract_strided_slice %89 {offsets = [2, 0], sizes = [126, 64], strides = [1, 1]} : vector<128x64xbf16> to vector<126x64xbf16>
    %cst_36 = arith.constant 0.000000e+00 : bf16
    %94 = vector.broadcast %cst_36 : bf16 to vector<2x64xbf16>
    %95 = tpu.concatenate %93, %94 in 0 : vector<126x64xbf16>, vector<2x64xbf16> -> vector<128x64xbf16>
    %96 = vector.extract_strided_slice %89 {offsets = [3, 0], sizes = [125, 64], strides = [1, 1]} : vector<128x64xbf16> to vector<125x64xbf16>
    %cst_37 = arith.constant 0.000000e+00 : bf16
    %97 = vector.broadcast %cst_37 : bf16 to vector<3x64xbf16>
    %98 = tpu.concatenate %96, %97 in 0 : vector<125x64xbf16>, vector<3x64xbf16> -> vector<128x64xbf16>
    %99 = tpu.concatenate %89, %92, %95, %98 in 1 : vector<128x64xbf16>, vector<128x64xbf16>, vector<128x64xbf16>, vector<128x64xbf16> -> vector<128x256xbf16>
    %c0_38 = arith.constant 0 : index
    %c0_39 = arith.constant 0 : index
    %100 = vector.load %arg8[%c0_38, %c0_39] : memref<256x128xbf16, #tpu.memory_space<vmem>>, vector<256x128xbf16>
    %cst_40 = arith.constant dense<0.000000e+00> : vector<128x128xf32>
    %101 = tpu.matmul %99, %100, %cst_40 {dimension_numbers = #tpu.dot_dimension_numbers<[1], [0], [0], [1], [0, 0, 1, 1], [], []>} : vector<128x256xbf16>, vector<256x128xbf16>, vector<128x128xf32> -> vector<128x128xf32>
    %c0_41 = arith.constant 0 : index
    %c0_42 = arith.constant 0 : index
    %102 = vector.load %arg9[%c0_41, %c0_42] : memref<1x128xf32, #tpu.memory_space<vmem>>, vector<1x128xf32>
    %103 = vector.broadcast %102 : vector<1x128xf32> to vector<128x128xf32>
    %104 = arith.addf %101, %103 : vector<128x128xf32>
    %cst_43 = arith.constant 0.000000e+00 : f32
    %105 = vector.broadcast %cst_43 : f32 to vector<128x128xf32>
    %106 = arith.cmpf oge, %104, %105 : vector<128x128xf32>
    %cst_44 = arith.constant 0.00999999977 : f32
    %107 = vector.broadcast %cst_44 : f32 to vector<128x128xf32>
    %108 = arith.mulf %107, %104 : vector<128x128xf32>
    %109 = arith.select %106, %104, %108 : vector<128x128xi1>, vector<128x128xf32>
    %110 = vector.shape_cast %109 : vector<128x128xf32> to vector<8x16x128xf32>
    %c0_45 = arith.constant 0 : index
    %c0_46 = arith.constant 0 : index
    %c0_47 = arith.constant 0 : index
    %111 = vector.load %arg21[%c0_45, %c0_46, %c0_47] : memref<8x16x128xf32, #tpu.memory_space<vmem>>, vector<8x16x128xf32>
    tpu.vector_store %arg21[%c0_45, %c0_46, %c0_47], %110 {strides = array<i32>} : memref<8x16x128xf32, #tpu.memory_space<vmem>>, vector<8x16x128xf32>,
    %c7_i32 = arith.constant 7 : i32
    %112 = vector.broadcast %c7_i32 : i32 to vector<128x1xi32>
    %113 = arith.cmpi slt, %16, %112 : vector<128x1xi32>
    %cst_48 = arith.constant 0.000000e+00 : f32
    %114 = vector.broadcast %cst_48 : f32 to vector<128x128xf32>
    %115 = vector.shape_cast %113 : vector<128x1xi1> to vector<128x1xi1>
    %116 = vector.broadcast %115 : vector<128x1xi1> to vector<128x128xi1>
    %117 = arith.select %116, %109, %114 : vector<128x128xi1>, vector<128x128xf32>
    %118 = arith.truncf %117 : vector<128x128xf32> to vector<128x128xbf16>
    %cst_49 = arith.constant 0.000000e+00 : bf16
    %119 = vector.broadcast %cst_49 : bf16 to vector<1x128xbf16>
    %120 = vector.extract_strided_slice %118 {offsets = [0, 0], sizes = [127, 128], strides = [1, 1]} : vector<128x128xbf16> to vector<127x128xbf16>
    %121 = tpu.concatenate %119, %120 in 0 : vector<1x128xbf16>, vector<127x128xbf16> -> vector<128x128xbf16>
    %cst_50 = arith.constant 0.000000e+00 : bf16
    %122 = vector.broadcast %cst_50 : bf16 to vector<2x128xbf16>
    %123 = vector.extract_strided_slice %118 {offsets = [0, 0], sizes = [126, 128], strides = [1, 1]} : vector<128x128xbf16> to vector<126x128xbf16>
    %124 = tpu.concatenate %122, %123 in 0 : vector<2x128xbf16>, vector<126x128xbf16> -> vector<128x128xbf16>
    %cst_51 = arith.constant 0.000000e+00 : bf16
    %125 = vector.broadcast %cst_51 : bf16 to vector<3x128xbf16>
    %126 = vector.extract_strided_slice %118 {offsets = [0, 0], sizes = [125, 128], strides = [1, 1]} : vector<128x128xbf16> to vector<125x128xbf16>
    %127 = tpu.concatenate %125, %126 in 0 : vector<3x128xbf16>, vector<125x128xbf16> -> vector<128x128xbf16>
    %128 = tpu.concatenate %118, %121, %124, %127 in 1 : vector<128x128xbf16>, vector<128x128xbf16>, vector<128x128xbf16>, vector<128x128xbf16> -> vector<128x512xbf16>
    %c0_52 = arith.constant 0 : index
    %c0_53 = arith.constant 0 : index
    %129 = vector.load %arg10[%c0_52, %c0_53] : memref<512x64xbf16, #tpu.memory_space<vmem>>, vector<512x64xbf16>
    %cst_54 = arith.constant dense<0.000000e+00> : vector<128x64xf32>
    %130 = tpu.matmul %128, %129, %cst_54 {dimension_numbers = #tpu.dot_dimension_numbers<[1], [0], [0], [1], [0, 0, 1, 1], [], []>} : vector<128x512xbf16>, vector<512x64xbf16>, vector<128x64xf32> -> vector<128x64xf32>
    %c0_55 = arith.constant 0 : index
    %c0_56 = arith.constant 0 : index
    %131 = vector.load %arg11[%c0_55, %c0_56] : memref<1x64xf32, #tpu.memory_space<vmem>>, vector<1x64xf32>
    %132 = vector.broadcast %131 : vector<1x64xf32> to vector<128x64xf32>
    %133 = arith.addf %130, %132 : vector<128x64xf32>
    %cst_57 = arith.constant 0.000000e+00 : f32
    %134 = vector.broadcast %cst_57 : f32 to vector<128x64xf32>
    %135 = arith.cmpf oge, %133, %134 : vector<128x64xf32>
    %cst_58 = arith.constant 0.00999999977 : f32
    %136 = vector.broadcast %cst_58 : f32 to vector<128x64xf32>
    %137 = arith.mulf %136, %133 : vector<128x64xf32>
    %138 = arith.select %135, %133, %137 : vector<128x64xi1>, vector<128x64xf32>
    %c10_i32 = arith.constant 10 : i32
    %139 = vector.broadcast %c10_i32 : i32 to vector<128x1xi32>
    %140 = arith.cmpi slt, %16, %139 : vector<128x1xi32>
    %cst_59 = arith.constant 0.000000e+00 : f32
    %141 = vector.broadcast %cst_59 : f32 to vector<128x64xf32>
    %142 = vector.shape_cast %140 : vector<128x1xi1> to vector<128x1xi1>
    %143 = vector.broadcast %142 : vector<128x1xi1> to vector<128x64xi1>
    %144 = arith.select %143, %138, %141 : vector<128x64xi1>, vector<128x64xf32>
    %145 = arith.truncf %144 : vector<128x64xf32> to vector<128x64xbf16>
    %cst_60 = arith.constant 0.000000e+00 : bf16
    %146 = vector.broadcast %cst_60 : bf16 to vector<1x64xbf16>
    %147 = vector.extract_strided_slice %145 {offsets = [0, 0], sizes = [127, 64], strides = [1, 1]} : vector<128x64xbf16> to vector<127x64xbf16>
    %148 = tpu.concatenate %146, %147 in 0 : vector<1x64xbf16>, vector<127x64xbf16> -> vector<128x64xbf16>
    %cst_61 = arith.constant 0.000000e+00 : bf16
    %149 = vector.broadcast %cst_61 : bf16 to vector<2x64xbf16>
    %150 = vector.extract_strided_slice %145 {offsets = [0, 0], sizes = [126, 64], strides = [1, 1]} : vector<128x64xbf16> to vector<126x64xbf16>
    %151 = tpu.concatenate %149, %150 in 0 : vector<2x64xbf16>, vector<126x64xbf16> -> vector<128x64xbf16>
    %cst_62 = arith.constant 0.000000e+00 : bf16
    %152 = vector.broadcast %cst_62 : bf16 to vector<3x64xbf16>
    %153 = vector.extract_strided_slice %145 {offsets = [0, 0], sizes = [125, 64], strides = [1, 1]} : vector<128x64xbf16> to vector<125x64xbf16>
    %154 = tpu.concatenate %152, %153 in 0 : vector<3x64xbf16>, vector<125x64xbf16> -> vector<128x64xbf16>
    %155 = tpu.concatenate %145, %148, %151, %154 in 1 : vector<128x64xbf16>, vector<128x64xbf16>, vector<128x64xbf16>, vector<128x64xbf16> -> vector<128x256xbf16>
    %c0_63 = arith.constant 0 : index
    %c0_64 = arith.constant 0 : index
    %156 = vector.load %arg12[%c0_63, %c0_64] : memref<256x32xbf16, #tpu.memory_space<vmem>>, vector<256x32xbf16>
    %cst_65 = arith.constant dense<0.000000e+00> : vector<128x32xf32>
    %157 = tpu.matmul %155, %156, %cst_65 {dimension_numbers = #tpu.dot_dimension_numbers<[1], [0], [0], [1], [0, 0, 1, 1], [], []>} : vector<128x256xbf16>, vector<256x32xbf16>, vector<128x32xf32> -> vector<128x32xf32>
    %c0_66 = arith.constant 0 : index
    %c0_67 = arith.constant 0 : index
    %158 = vector.load %arg13[%c0_66, %c0_67] : memref<1x32xf32, #tpu.memory_space<vmem>>, vector<1x32xf32>
    %159 = vector.broadcast %158 : vector<1x32xf32> to vector<128x32xf32>
    %160 = arith.addf %157, %159 : vector<128x32xf32>
    %cst_68 = arith.constant 0.000000e+00 : f32
    %161 = vector.broadcast %cst_68 : f32 to vector<128x32xf32>
    %162 = arith.cmpf oge, %160, %161 : vector<128x32xf32>
    %cst_69 = arith.constant 0.00999999977 : f32
    %163 = vector.broadcast %cst_69 : f32 to vector<128x32xf32>
    %164 = arith.mulf %163, %160 : vector<128x32xf32>
    %165 = arith.select %162, %160, %164 : vector<128x32xi1>, vector<128x32xf32>
    %c13_i32 = arith.constant 13 : i32
    %166 = vector.broadcast %c13_i32 : i32 to vector<128x1xi32>
    %167 = arith.cmpi slt, %16, %166 : vector<128x1xi32>
    %cst_70 = arith.constant 0.000000e+00 : f32
    %168 = vector.broadcast %cst_70 : f32 to vector<128x32xf32>
    %169 = vector.shape_cast %167 : vector<128x1xi1> to vector<128x1xi1>
    %170 = vector.broadcast %169 : vector<128x1xi1> to vector<128x32xi1>
    %171 = arith.select %170, %165, %168 : vector<128x32xi1>, vector<128x32xf32>
    %172 = arith.truncf %171 : vector<128x32xf32> to vector<128x32xbf16>
    %c0_71 = arith.constant 0 : index
    %c0_72 = arith.constant 0 : index
    %173 = vector.load %arg16[%c0_71, %c0_72] : memref<1x16xf32, #tpu.memory_space<vmem>>, vector<1x16xf32>
    %cst_73 = arith.constant 0.000000e+00 : bf16
    %174 = vector.broadcast %cst_73 : bf16 to vector<1x32xbf16>
    %175 = vector.extract_strided_slice %172 {offsets = [0, 0], sizes = [127, 32], strides = [1, 1]} : vector<128x32xbf16> to vector<127x32xbf16>
    %176 = tpu.concatenate %174, %175 in 0 : vector<1x32xbf16>, vector<127x32xbf16> -> vector<128x32xbf16>
    %cst_74 = arith.constant 0.000000e+00 : bf16
    %177 = vector.broadcast %cst_74 : bf16 to vector<2x32xbf16>
    %178 = vector.extract_strided_slice %172 {offsets = [0, 0], sizes = [126, 32], strides = [1, 1]} : vector<128x32xbf16> to vector<126x32xbf16>
    %179 = tpu.concatenate %177, %178 in 0 : vector<2x32xbf16>, vector<126x32xbf16> -> vector<128x32xbf16>
    %180 = tpu.concatenate %172, %176, %179 in 1 : vector<128x32xbf16>, vector<128x32xbf16>, vector<128x32xbf16> -> vector<128x96xbf16>
    %c0_75 = arith.constant 0 : index
    %c0_76 = arith.constant 0 : index
    %181 = vector.load %arg14[%c0_75, %c0_76] : memref<96x16xbf16, #tpu.memory_space<vmem>>, vector<96x16xbf16>
    %cst_77 = arith.constant dense<0.000000e+00> : vector<128x16xf32>
    %182 = tpu.matmul %180, %181, %cst_77 {dimension_numbers = #tpu.dot_dimension_numbers<[1], [0], [0], [1], [0, 0, 1, 1], [], []>} : vector<128x96xbf16>, vector<96x16xbf16>, vector<128x16xf32> -> vector<128x16xf32>
    %183 = vector.broadcast %173 : vector<1x16xf32> to vector<128x16xf32>
    %184 = arith.addf %182, %183 : vector<128x16xf32>
    %cst_78 = arith.constant 0.000000e+00 : f32
    %185 = vector.broadcast %cst_78 : f32 to vector<128x16xf32>
    %186 = arith.cmpf oge, %184, %185 : vector<128x16xf32>
    %cst_79 = arith.constant 0.00999999977 : f32
    %187 = vector.broadcast %cst_79 : f32 to vector<128x16xf32>
    %188 = arith.mulf %187, %184 : vector<128x16xf32>
    %189 = arith.select %186, %184, %188 : vector<128x16xi1>, vector<128x16xf32>
    %c15_i32 = arith.constant 15 : i32
    %190 = vector.broadcast %c15_i32 : i32 to vector<128x1xi32>
    %191 = arith.cmpi slt, %16, %190 : vector<128x1xi32>
    %cst_80 = arith.constant 0.000000e+00 : f32
    %192 = vector.broadcast %cst_80 : f32 to vector<128x16xf32>
    %193 = vector.shape_cast %191 : vector<128x1xi1> to vector<128x1xi1>
    %194 = vector.broadcast %193 : vector<128x1xi1> to vector<128x16xi1>
    %195 = arith.select %194, %189, %192 : vector<128x16xi1>, vector<128x16xf32>
    %196 = arith.truncf %195 : vector<128x16xf32> to vector<128x16xbf16>
    %cst_81 = arith.constant 0.000000e+00 : bf16
    %197 = vector.broadcast %cst_81 : bf16 to vector<1x32xbf16>
    %198 = vector.extract_strided_slice %172 {offsets = [0, 0], sizes = [127, 32], strides = [1, 1]} : vector<128x32xbf16> to vector<127x32xbf16>
    %199 = tpu.concatenate %197, %198 in 0 : vector<1x32xbf16>, vector<127x32xbf16> -> vector<128x32xbf16>
    %200 = tpu.concatenate %172, %199 in 1 : vector<128x32xbf16>, vector<128x32xbf16> -> vector<128x64xbf16>
    %c0_82 = arith.constant 0 : index
    %c0_83 = arith.constant 0 : index
    %201 = vector.load %arg15[%c0_82, %c0_83] : memref<64x16xbf16, #tpu.memory_space<vmem>>, vector<64x16xbf16>
    %cst_84 = arith.constant dense<0.000000e+00> : vector<128x16xf32>
    %202 = tpu.matmul %200, %201, %cst_84 {dimension_numbers = #tpu.dot_dimension_numbers<[1], [0], [0], [1], [0, 0, 1, 1], [], []>} : vector<128x64xbf16>, vector<64x16xbf16>, vector<128x16xf32> -> vector<128x16xf32>
    %203 = vector.broadcast %173 : vector<1x16xf32> to vector<128x16xf32>
    %204 = arith.addf %202, %203 : vector<128x16xf32>
    %cst_85 = arith.constant 0.000000e+00 : f32
    %205 = vector.broadcast %cst_85 : f32 to vector<128x16xf32>
    %206 = arith.cmpf oge, %204, %205 : vector<128x16xf32>
    %cst_86 = arith.constant 0.00999999977 : f32
    %207 = vector.broadcast %cst_86 : f32 to vector<128x16xf32>
    %208 = arith.mulf %207, %204 : vector<128x16xf32>
    %209 = arith.select %206, %204, %208 : vector<128x16xi1>, vector<128x16xf32>
    %c14_i32 = arith.constant 14 : i32
    %210 = vector.broadcast %c14_i32 : i32 to vector<128x1xi32>
    %211 = arith.cmpi slt, %16, %210 : vector<128x1xi32>
    %cst_87 = arith.constant 0.000000e+00 : f32
    %212 = vector.broadcast %cst_87 : f32 to vector<128x16xf32>
    %213 = vector.shape_cast %211 : vector<128x1xi1> to vector<128x1xi1>
    %214 = vector.broadcast %213 : vector<128x1xi1> to vector<128x16xi1>
    %215 = arith.select %214, %209, %212 : vector<128x16xi1>, vector<128x16xf32>
    %216 = arith.truncf %215 : vector<128x16xf32> to vector<128x16xbf16>
    %cst_88 = arith.constant 0.000000e+00 : bf16
    %217 = vector.broadcast %cst_88 : bf16 to vector<1x16xbf16>
    %218 = vector.extract_strided_slice %196 {offsets = [0, 0], sizes = [127, 16], strides = [1, 1]} : vector<128x16xbf16> to vector<127x16xbf16>
    %219 = tpu.concatenate %217, %218 in 0 : vector<1x16xbf16>, vector<127x16xbf16> -> vector<128x16xbf16>
    %cst_89 = arith.constant 0.000000e+00 : bf16
    %220 = vector.broadcast %cst_89 : bf16 to vector<1x16xbf16>
    %221 = vector.extract_strided_slice %216 {offsets = [0, 0], sizes = [127, 16], strides = [1, 1]} : vector<128x16xbf16> to vector<127x16xbf16>
    %222 = tpu.concatenate %220, %221 in 0 : vector<1x16xbf16>, vector<127x16xbf16> -> vector<128x16xbf16>
    %c0_90 = arith.constant 0 : index
    %c0_91 = arith.constant 0 : index
    %223 = vector.load %arg17[%c0_90, %c0_91] : memref<48x4xbf16, #tpu.memory_space<vmem>>, vector<48x4xbf16>
    %c0_92 = arith.constant 0 : index
    %c0_93 = arith.constant 0 : index
    %224 = vector.load %arg18[%c0_92, %c0_93] : memref<32x4xbf16, #tpu.memory_space<vmem>>, vector<32x4xbf16>
    %c0_94 = arith.constant 0 : index
    %c0_95 = arith.constant 0 : index
    %225 = vector.load %arg19[%c0_94, %c0_95] : memref<1x4xf32, #tpu.memory_space<vmem>>, vector<1x4xf32>
    %226 = tpu.concatenate %196, %222, %219 in 1 : vector<128x16xbf16>, vector<128x16xbf16>, vector<128x16xbf16> -> vector<128x48xbf16>
    %cst_96 = arith.constant dense<0.000000e+00> : vector<128x4xf32>
    %227 = tpu.matmul %226, %223, %cst_96 {dimension_numbers = #tpu.dot_dimension_numbers<[1], [0], [0], [1], [0, 0, 1, 1], [], []>} : vector<128x48xbf16>, vector<48x4xbf16>, vector<128x4xf32> -> vector<128x4xf32>
    %228 = vector.broadcast %225 : vector<1x4xf32> to vector<128x4xf32>
    %229 = arith.addf %227, %228 : vector<128x4xf32>
    %230 = tpu.concatenate %196, %222 in 1 : vector<128x16xbf16>, vector<128x16xbf16> -> vector<128x32xbf16>
    %cst_97 = arith.constant dense<0.000000e+00> : vector<128x4xf32>
    %231 = tpu.matmul %230, %224, %cst_97 {dimension_numbers = #tpu.dot_dimension_numbers<[1], [0], [0], [1], [0, 0, 1, 1], [], []>} : vector<128x32xbf16>, vector<32x4xbf16>, vector<128x4xf32> -> vector<128x4xf32>
    %232 = vector.broadcast %225 : vector<1x4xf32> to vector<128x4xf32>
    %233 = arith.addf %231, %232 : vector<128x4xf32>
    %234 = tpu.concatenate %216, %196, %222 in 1 : vector<128x16xbf16>, vector<128x16xbf16>, vector<128x16xbf16> -> vector<128x48xbf16>
    %cst_98 = arith.constant dense<0.000000e+00> : vector<128x4xf32>
    %235 = tpu.matmul %234, %223, %cst_98 {dimension_numbers = #tpu.dot_dimension_numbers<[1], [0], [0], [1], [0, 0, 1, 1], [], []>} : vector<128x48xbf16>, vector<48x4xbf16>, vector<128x4xf32> -> vector<128x4xf32>
    %236 = vector.broadcast %225 : vector<1x4xf32> to vector<128x4xf32>
    %237 = arith.addf %235, %236 : vector<128x4xf32>
    %238 = tpu.concatenate %216, %196 in 1 : vector<128x16xbf16>, vector<128x16xbf16> -> vector<128x32xbf16>
    %cst_99 = arith.constant dense<0.000000e+00> : vector<128x4xf32>
    %239 = tpu.matmul %238, %224, %cst_99 {dimension_numbers = #tpu.dot_dimension_numbers<[1], [0], [0], [1], [0, 0, 1, 1], [], []>} : vector<128x32xbf16>, vector<32x4xbf16>, vector<128x4xf32> -> vector<128x4xf32>
    %240 = vector.broadcast %225 : vector<1x4xf32> to vector<128x4xf32>
    %241 = arith.addf %239, %240 : vector<128x4xf32>
    %242 = tpu.concatenate %229, %233, %237, %241 in 1 : vector<128x4xf32>, vector<128x4xf32>, vector<128x4xf32>, vector<128x4xf32> -> vector<128x16xf32>
    %cst_100 = arith.constant 5.000000e-01 : f32
    %243 = vector.broadcast %cst_100 : f32 to vector<128x16xf32>
    %244 = arith.mulf %243, %242 : vector<128x16xf32>
    %245 = math.tanh %244 : vector<128x16xf32>
    %cst_101 = arith.constant 5.000000e-01 : f32
    %246 = vector.broadcast %cst_101 : f32 to vector<128x16xf32>
    %247 = arith.mulf %246, %245 : vector<128x16xf32>
    %cst_102 = arith.constant 5.000000e-01 : f32
    %248 = vector.broadcast %cst_102 : f32 to vector<128x16xf32>
    %249 = arith.addf %247, %248 : vector<128x16xf32>
    %250 = vector.shape_cast %249 : vector<128x16xf32> to vector<8x16x16xf32>
    %c0_103 = arith.constant 0 : index
    %c0_104 = arith.constant 0 : index
    %c0_105 = arith.constant 0 : index
    %251 = vector.load %arg20[%c0_103, %c0_104, %c0_105] : memref<8x16x16xf32, #tpu.memory_space<vmem>>, vector<8x16x16xf32>
    tpu.vector_store %arg20[%c0_103, %c0_104, %c0_105], %250 {strides = array<i32>} : memref<8x16x16xf32, #tpu.memory_space<vmem>>, vector<8x16x16xf32>,
    return
  }
  func.func @transform_0(%arg0: i32) -> (i32, i32, i32) {
    %c0_i32 = arith.constant 0 : i32
    %c0_i32_0 = arith.constant 0 : i32
    %c0_i32_1 = arith.constant 0 : i32
    return %arg0, %c0_i32, %c0_i32_0 : i32, i32, i32
  }
  func.func @transform_1(%arg0: i32) -> (i32, i32) {
    %c0_i32 = arith.constant 0 : i32
    %c0_i32_0 = arith.constant 0 : i32
    %c0_i32_1 = arith.constant 0 : i32
    return %c0_i32, %c0_i32_0 : i32, i32
  }
  func.func @transform_2(%arg0: i32) -> (i32, i32) {
    %c0_i32 = arith.constant 0 : i32
    %c0_i32_0 = arith.constant 0 : i32
    %c0_i32_1 = arith.constant 0 : i32
    return %c0_i32, %c0_i32_0 : i32, i32
  }
  func.func @transform_3(%arg0: i32) -> (i32, i32) {
    %c0_i32 = arith.constant 0 : i32
    %c0_i32_0 = arith.constant 0 : i32
    %c0_i32_1 = arith.constant 0 : i32
    return %c0_i32, %c0_i32_0 : i32, i32
  }
  func.func @transform_4(%arg0: i32) -> (i32, i32) {
    %c0_i32 = arith.constant 0 : i32
    %c0_i32_0 = arith.constant 0 : i32
    %c0_i32_1 = arith.constant 0 : i32
    return %c0_i32, %c0_i32_0 : i32, i32
  }
  func.func @transform_5(%arg0: i32) -> (i32, i32) {
    %c0_i32 = arith.constant 0 : i32
    %c0_i32_0 = arith.constant 0 : i32
    %c0_i32_1 = arith.constant 0 : i32
    return %c0_i32, %c0_i32_0 : i32, i32
  }
  func.func @transform_6(%arg0: i32) -> (i32, i32) {
    %c0_i32 = arith.constant 0 : i32
    %c0_i32_0 = arith.constant 0 : i32
    %c0_i32_1 = arith.constant 0 : i32
    return %c0_i32, %c0_i32_0 : i32, i32
  }
  func.func @transform_7(%arg0: i32) -> (i32, i32) {
    %c0_i32 = arith.constant 0 : i32
    %c0_i32_0 = arith.constant 0 : i32
    %c0_i32_1 = arith.constant 0 : i32
    return %c0_i32, %c0_i32_0 : i32, i32
  }
  func.func @transform_8(%arg0: i32) -> (i32, i32) {
    %c0_i32 = arith.constant 0 : i32
    %c0_i32_0 = arith.constant 0 : i32
    %c0_i32_1 = arith.constant 0 : i32
    return %c0_i32, %c0_i32_0 : i32, i32
  }
  func.func @transform_9(%arg0: i32) -> (i32, i32) {
    %c0_i32 = arith.constant 0 : i32
    %c0_i32_0 = arith.constant 0 : i32
    %c0_i32_1 = arith.constant 0 : i32
    return %c0_i32, %c0_i32_0 : i32, i32
  }
  func.func @transform_10(%arg0: i32) -> (i32, i32) {
    %c0_i32 = arith.constant 0 : i32
    %c0_i32_0 = arith.constant 0 : i32
    %c0_i32_1 = arith.constant 0 : i32
    return %c0_i32, %c0_i32_0 : i32, i32
  }
  func.func @transform_11(%arg0: i32) -> (i32, i32) {
    %c0_i32 = arith.constant 0 : i32
    %c0_i32_0 = arith.constant 0 : i32
    %c0_i32_1 = arith.constant 0 : i32
    return %c0_i32, %c0_i32_0 : i32, i32
  }
  func.func @transform_12(%arg0: i32) -> (i32, i32) {
    %c0_i32 = arith.constant 0 : i32
    %c0_i32_0 = arith.constant 0 : i32
    %c0_i32_1 = arith.constant 0 : i32
    return %c0_i32, %c0_i32_0 : i32, i32
  }
  func.func @transform_13(%arg0: i32) -> (i32, i32) {
    %c0_i32 = arith.constant 0 : i32
    %c0_i32_0 = arith.constant 0 : i32
    %c0_i32_1 = arith.constant 0 : i32
    return %c0_i32, %c0_i32_0 : i32, i32
  }
  func.func @transform_14(%arg0: i32) -> (i32, i32) {
    %c0_i32 = arith.constant 0 : i32
    %c0_i32_0 = arith.constant 0 : i32
    %c0_i32_1 = arith.constant 0 : i32
    return %c0_i32, %c0_i32_0 : i32, i32
  }
  func.func @transform_15(%arg0: i32) -> (i32, i32) {
    %c0_i32 = arith.constant 0 : i32
    %c0_i32_0 = arith.constant 0 : i32
    %c0_i32_1 = arith.constant 0 : i32
    return %c0_i32, %c0_i32_0 : i32, i32
  }
  func.func @transform_16(%arg0: i32) -> (i32, i32) {
    %c0_i32 = arith.constant 0 : i32
    %c0_i32_0 = arith.constant 0 : i32
    %c0_i32_1 = arith.constant 0 : i32
    return %c0_i32, %c0_i32_0 : i32, i32
  }
  func.func @transform_17(%arg0: i32) -> (i32, i32) {
    %c0_i32 = arith.constant 0 : i32
    %c0_i32_0 = arith.constant 0 : i32
    %c0_i32_1 = arith.constant 0 : i32
    return %c0_i32, %c0_i32_0 : i32, i32
  }
  func.func @transform_18(%arg0: i32) -> (i32, i32) {
    %c0_i32 = arith.constant 0 : i32
    %c0_i32_0 = arith.constant 0 : i32
    %c0_i32_1 = arith.constant 0 : i32
    return %c0_i32, %c0_i32_0 : i32, i32
  }
  func.func @transform_19(%arg0: i32) -> (i32, i32, i32) {
    %c0_i32 = arith.constant 0 : i32
    %c0_i32_0 = arith.constant 0 : i32
    %c0_i32_1 = arith.constant 0 : i32
    return %arg0, %c0_i32, %c0_i32_0 : i32, i32, i32
  }
  func.func @transform_20(%arg0: i32) -> (i32, i32, i32) {
    %c0_i32 = arith.constant 0 : i32
    %c0_i32_0 = arith.constant 0 : i32
    %c0_i32_1 = arith.constant 0 : i32
    return %arg0, %c0_i32, %c0_i32_0 : i32, i32, i32
  }
}

</mosaic_0001>

<llo_original>
// kernel: cae4_forward.1
$region0: #{cae4_forward.1}
  #allocation0 [shape = 'u32[]', space=smem, size = 0x4, offset = 0x4, fixed_abs, tag = 'smem constant byte address 0x4 - core index']
  #allocation1 [shape = 'u32[144,128]{1,0:T(1,128)}', space=vmem, size = 0x12000, scoped, tag = 'internal scratch']
  %s0 = inlined_call_operand.vmem [shape: f32[16,16,16], index: 0, kind: input, shape index: {}]
  %s1 = inlined_call_operand.vmem [shape: bf16[20,16], index: 1, kind: input, shape index: {}]
  %s2 = inlined_call_operand.vmem [shape: f32[1,16], index: 2, kind: input, shape index: {}]
  %s3 = inlined_call_operand.vmem [shape: bf16[80,32], index: 3, kind: input, shape index: {}]
  %s4 = inlined_call_operand.vmem [shape: f32[1,32], index: 4, kind: input, shape index: {}]
  %s5 = inlined_call_operand.vmem [shape: bf16[128,64], index: 5, kind: input, shape index: {}]
  %s6 = inlined_call_operand.vmem [shape: f32[1,64], index: 6, kind: input, shape index: {}]
  %s7 = inlined_call_operand.vmem [shape: bf16[256,128], index: 7, kind: input, shape index: {}]
  %s8 = inlined_call_operand.vmem [shape: f32[1,128], index: 8, kind: input, shape index: {}]
  %s9 = inlined_call_operand.vmem [shape: bf16[512,64], index: 9, kind: input, shape index: {}]
  %s10 = inlined_call_operand.vmem [shape: f32[1,64], index: 10, kind: input, shape index: {}]
  %s11 = inlined_call_operand.vmem [shape: bf16[256,32], index: 11, kind: input, shape index: {}]
  %s12 = inlined_call_operand.vmem [shape: f32[1,32], index: 12, kind: input, shape index: {}]
  %s13 = inlined_call_operand.vmem [shape: bf16[96,16], index: 13, kind: input, shape index: {}]
  %s14 = inlined_call_operand.vmem [shape: bf16[64,16], index: 14, kind: input, shape index: {}]
  %s15 = inlined_call_operand.vmem [shape: f32[1,16], index: 15, kind: input, shape index: {}]
  %s16 = inlined_call_operand.vmem [shape: bf16[48,4], index: 16, kind: input, shape index: {}]
  %s17 = inlined_call_operand.vmem [shape: bf16[32,4], index: 17, kind: input, shape index: {}]
  %s18 = inlined_call_operand.vmem [shape: f32[1,4], index: 18, kind: input, shape index: {}]
  %s19 = inlined_call_operand.vmem [shape: f32[16,16,16], index: 19, kind: output, shape index: {0}]
  %s20 = inlined_call_operand.vmem [shape: f32[16,16,128], index: 20, kind: output, shape index: {1}]
  %21 = xla_tuple %s19, %s20
  %s22 = sld [smem:[#allocation0]]
  $region117: #{cae4_forward.1} parent=0
    _
  %s24 = ssub.s32 1, %s22
  %s25 = scalar_select 0, %s24, %s22
  loop: start=0, step=1, limit=4
  $region2: #{cae4_forward.1} parent=0 // loop_pre_header
    _
  $region3: #{cae4_forward.1} parent=0 // loop_header
    %s27 = sphi 0, %s31
    %p28 = scmp.ge.s32.totalorder %s27, 4
    %s37 = sphi 0, %s39
    %s40 = sphi 0, %s37
    %s41 = sphi 0, %s40
    %s57 = sphi 0, %s41
    %s61 = sphi 0, %s61
    %s63 = sphi 0, %s61
    %s64 = sphi 0, %s63
    %s78 = sphi 0, %s64
    %s82 = sphi 0, %s82
    %s84 = sphi 0, %s82
    %s85 = sphi 0, %s84
    %s99 = sphi 0, %s85
    %s103 = sphi 0, %s103
    %s105 = sphi 0, %s103
    %s106 = sphi 0, %s105
    %s120 = sphi 0, %s106
    %s124 = sphi 0, %s124
    %s126 = sphi 0, %s124
    %s127 = sphi 0, %s126
    %s141 = sphi 0, %s127
    %s145 = sphi 0, %s145
    %s147 = sphi 0, %s145
    %s148 = sphi 0, %s147
    %s162 = sphi 0, %s148
    %s166 = sphi 0, %s166
    %s168 = sphi 0, %s166
    %s169 = sphi 0, %s168
    %s183 = sphi 0, %s169
    %s187 = sphi 0, %s187
    %s189 = sphi 0, %s187
    %s190 = sphi 0, %s189
    %s204 = sphi 0, %s190
    %s208 = sphi 0, %s208
    %s210 = sphi 0, %s208
    %s211 = sphi 0, %s210
    %s225 = sphi 0, %s211
    %s229 = sphi 0, %s229
    %s231 = sphi 0, %s229
    %s232 = sphi 0, %s231
    %s246 = sphi 0, %s232
    %s250 = sphi 0, %s250
    %s252 = sphi 0, %s250
    %s253 = sphi 0, %s252
    %s267 = sphi 0, %s253
    %s271 = sphi 0, %s271
    %s273 = sphi 0, %s271
    %s274 = sphi 0, %s273
    %s288 = sphi 0, %s274
    %s292 = sphi 0, %s292
    %s294 = sphi 0, %s292
    %s295 = sphi 0, %s294
    %s309 = sphi 0, %s295
    %s313 = sphi 0, %s313
    %s315 = sphi 0, %s313
    %s316 = sphi 0, %s315
    %s330 = sphi 0, %s316
    %s334 = sphi 0, %s334
    %s336 = sphi 0, %s334
    %s337 = sphi 0, %s336
    %s351 = sphi 0, %s337
    %s355 = sphi 0, %s355
    %s357 = sphi 0, %s355
    %s358 = sphi 0, %s357
    %s372 = sphi 0, %s358
    %s376 = sphi 0, %s376
    %s378 = sphi 0, %s376
    %s379 = sphi 0, %s378
    %s393 = sphi 0, %s379
    %s397 = sphi 0, %s397
    %s399 = sphi 0, %s397
    %s400 = sphi 0, %s399
    %s414 = sphi 0, %s400
    %s418 = sphi 0, %s418
    %s420 = sphi 0, %s418
    %s421 = sphi 0, %s420
    %s435 = sphi 0, %s421
    %s441 = sphi 0, %s443
    %s444 = sphi 0, %s441
    %s445 = sphi 0, %s444
    %s461 = sphi 0, %s445
    %s467 = sphi 0, %s469
    %s470 = sphi 0, %s467
    %s471 = sphi 0, %s470
    %s487 = sphi 0, %s471
  $region4: #{cae4_forward.1} parent=0 // loop_header_branch
    %30 = sbr.rel (%p28) target = $region8
  $region5: #{cae4_forward.1} parent=0 // loop_body
    %s32 = ssub.s32 %s27, 1
    %s33 = ssub.s32 %s27, 2
    %s34 = sadd.s32 %s27, 1
    %s35 = ssub.s32 %s27, %s34
    %p36 = scmp.eq.s32.totalorder %s35, 0
    %s38 = sadd.s32 %s37, 1
    %s39 = scalar_select %p36, %s37, %s38
    %p42 = pneg %p36
    %p43 = scmp.eq.s32.totalorder %s27, 1
    %p44 = por %p42, %p43
    %p45 = scmp.ne.s32.totalorder %s37, %s40
    %p46 = scmp.eq.s32.totalorder %s27, 0
    %p47 = por %p45, %p46
    %p48 = scmp.ne.s32.totalorder %s37, %s40
    %p49 = scmp.eq.s32.totalorder %s32, 1
    %p50 = por %p48, %p49
    %p51 = scmp.ne.s32.totalorder %s40, %s41
    %p52 = scmp.eq.s32.totalorder %s32, 0
    %p53 = por %p51, %p52
    %p54 = scmp.ne.s32.totalorder %s40, %s41
    %p55 = scmp.eq.s32.totalorder %s33, 1
    %p56 = por %p54, %p55
    %p58 = scmp.ne.s32.totalorder %s41, %s57
    %p59 = scmp.eq.s32.totalorder %s33, 0
    %p60 = por %p58, %p59
    %s62 = sadd.s32 %s61, 1
    %p65 = scmp.eq.s32.totalorder %s27, 1
    %p66 = scmp.ne.s32.totalorder %s61, %s63
    %p67 = scmp.eq.s32.totalorder %s27, 0
    %p68 = por %p66, %p67
    %p69 = scmp.ne.s32.totalorder %s61, %s63
    %p70 = scmp.eq.s32.totalorder %s32, 1
    %p71 = por %p69, %p70
    %p72 = scmp.ne.s32.totalorder %s63, %s64
    %p73 = scmp.eq.s32.totalorder %s32, 0
    %p74 = por %p72, %p73
    %p75 = scmp.ne.s32.totalorder %s63, %s64
    %p76 = scmp.eq.s32.totalorder %s33, 1
    %p77 = por %p75, %p76
    %p79 = scmp.ne.s32.totalorder %s64, %s78
    %p80 = scmp.eq.s32.totalorder %s33, 0
    %p81 = por %p79, %p80
    %s83 = sadd.s32 %s82, 1
    %p86 = scmp.eq.s32.totalorder %s27, 1
    %p87 = scmp.ne.s32.totalorder %s82, %s84
    %p88 = scmp.eq.s32.totalorder %s27, 0
    %p89 = por %p87, %p88
    %p90 = scmp.ne.s32.totalorder %s82, %s84
    %p91 = scmp.eq.s32.totalorder %s32, 1
    %p92 = por %p90, %p91
    %p93 = scmp.ne.s32.totalorder %s84, %s85
    %p94 = scmp.eq.s32.totalorder %s32, 0
    %p95 = por %p93, %p94
    %p96 = scmp.ne.s32.totalorder %s84, %s85
    %p97 = scmp.eq.s32.totalorder %s33, 1
    %p98 = por %p96, %p97
    %p100 = scmp.ne.s32.totalorder %s85, %s99
    %p101 = scmp.eq.s32.totalorder %s33, 0
    %p102 = por %p100, %p101
    %s104 = sadd.s32 %s103, 1
    %p107 = scmp.eq.s32.totalorder %s27, 1
    %p108 = scmp.ne.s32.totalorder %s103, %s105
    %p109 = scmp.eq.s32.totalorder %s27, 0
    %p110 = por %p108, %p109
    %p111 = scmp.ne.s32.totalorder %s103, %s105
    %p112 = scmp.eq.s32.totalorder %s32, 1
    %p113 = por %p111, %p112
    %p114 = scmp.ne.s32.totalorder %s105, %s106
    %p115 = scmp.eq.s32.totalorder %s32, 0
    %p116 = por %p114, %p115
    %p117 = scmp.ne.s32.totalorder %s105, %s106
    %p118 = scmp.eq.s32.totalorder %s33, 1
    %p119 = por %p117, %p118
    %p121 = scmp.ne.s32.totalorder %s106, %s120
    %p122 = scmp.eq.s32.totalorder %s33, 0
    %p123 = por %p121, %p122
    %s125 = sadd.s32 %s124, 1
    %p128 = scmp.eq.s32.totalorder %s27, 1
    %p129 = scmp.ne.s32.totalorder %s124, %s126
    %p130 = scmp.eq.s32.totalorder %s27, 0
    %p131 = por %p129, %p130
    %p132 = scmp.ne.s32.totalorder %s124, %s126
    %p133 = scmp.eq.s32.totalorder %s32, 1
    %p134 = por %p132, %p133
    %p135 = scmp.ne.s32.totalorder %s126, %s127
    %p136 = scmp.eq.s32.totalorder %s32, 0
    %p137 = por %p135, %p136
    %p138 = scmp.ne.s32.totalorder %s126, %s127
    %p139 = scmp.eq.s32.totalorder %s33, 1
    %p140 = por %p138, %p139
    %p142 = scmp.ne.s32.totalorder %s127, %s141
    %p143 = scmp.eq.s32.totalorder %s33, 0
    %p144 = por %p142, %p143
    %s146 = sadd.s32 %s145, 1
    %p149 = scmp.eq.s32.totalorder %s27, 1
    %p150 = scmp.ne.s32.totalorder %s145, %s147
    %p151 = scmp.eq.s32.totalorder %s27, 0
    %p152 = por %p150, %p151
    %p153 = scmp.ne.s32.totalorder %s145, %s147
    %p154 = scmp.eq.s32.totalorder %s32, 1
    %p155 = por %p153, %p154
    %p156 = scmp.ne.s32.totalorder %s147, %s148
    %p157 = scmp.eq.s32.totalorder %s32, 0
    %p158 = por %p156, %p157
    %p159 = scmp.ne.s32.totalorder %s147, %s148
    %p160 = scmp.eq.s32.totalorder %s33, 1
    %p161 = por %p159, %p160
    %p163 = scmp.ne.s32.totalorder %s148, %s162
    %p164 = scmp.eq.s32.totalorder %s33, 0
    %p165 = por %p163, %p164
    %s167 = sadd.s32 %s166, 1
    %p170 = scmp.eq.s32.totalorder %s27, 1
    %p171 = scmp.ne.s32.totalorder %s166, %s168
    %p172 = scmp.eq.s32.totalorder %s27, 0
    %p173 = por %p171, %p172
    %p174 = scmp.ne.s32.totalorder %s166, %s168
    %p175 = scmp.eq.s32.totalorder %s32, 1
    %p176 = por %p174, %p175
    %p177 = scmp.ne.s32.totalorder %s168, %s169
    %p178 = scmp.eq.s32.totalorder %s32, 0
    %p179 = por %p177, %p178
    %p180 = scmp.ne.s32.totalorder %s168, %s169
    %p181 = scmp.eq.s32.totalorder %s33, 1
    %p182 = por %p180, %p181
    %p184 = scmp.ne.s32.totalorder %s169, %s183
    %p185 = scmp.eq.s32.totalorder %s33, 0
    %p186 = por %p184, %p185
    %s188 = sadd.s32 %s187, 1
    %p191 = scmp.eq.s32.totalorder %s27, 1
    %p192 = scmp.ne.s32.totalorder %s187, %s189
    %p193 = scmp.eq.s32.totalorder %s27, 0
    %p194 = por %p192, %p193
    %p195 = scmp.ne.s32.totalorder %s187, %s189
    %p196 = scmp.eq.s32.totalorder %s32, 1
    %p197 = por %p195, %p196
    %p198 = scmp.ne.s32.totalorder %s189, %s190
    %p199 = scmp.eq.s32.totalorder %s32, 0
    %p200 = por %p198, %p199
    %p201 = scmp.ne.s32.totalorder %s189, %s190
    %p202 = scmp.eq.s32.totalorder %s33, 1
    %p203 = por %p201, %p202
    %p205 = scmp.ne.s32.totalorder %s190, %s204
    %p206 = scmp.eq.s32.totalorder %s33, 0
    %p207 = por %p205, %p206
    %s209 = sadd.s32 %s208, 1
    %p212 = scmp.eq.s32.totalorder %s27, 1
    %p213 = scmp.ne.s32.totalorder %s208, %s210
    %p214 = scmp.eq.s32.totalorder %s27, 0
    %p215 = por %p213, %p214
    %p216 = scmp.ne.s32.totalorder %s208, %s210
    %p217 = scmp.eq.s32.totalorder %s32, 1
    %p218 = por %p216, %p217
    %p219 = scmp.ne.s32.totalorder %s210, %s211
    %p220 = scmp.eq.s32.totalorder %s32, 0
    %p221 = por %p219, %p220
    %p222 = scmp.ne.s32.totalorder %s210, %s211
    %p223 = scmp.eq.s32.totalorder %s33, 1
    %p224 = por %p222, %p223
    %p226 = scmp.ne.s32.totalorder %s211, %s225
    %p227 = scmp.eq.s32.totalorder %s33, 0
    %p228 = por %p226, %p227
    %s230 = sadd.s32 %s229, 1
    %p233 = scmp.eq.s32.totalorder %s27, 1
    %p234 = scmp.ne.s32.totalorder %s229, %s231
    %p235 = scmp.eq.s32.totalorder %s27, 0
    %p236 = por %p234, %p235
    %p237 = scmp.ne.s32.totalorder %s229, %s231
    %p238 = scmp.eq.s32.totalorder %s32, 1
    %p239 = por %p237, %p238
    %p240 = scmp.ne.s32.totalorder %s231, %s232
    %p241 = scmp.eq.s32.totalorder %s32, 0
    %p242 = por %p240, %p241
    %p243 = scmp.ne.s32.totalorder %s231, %s232
    %p244 = scmp.eq.s32.totalorder %s33, 1
    %p245 = por %p243, %p244
    %p247 = scmp.ne.s32.totalorder %s232, %s246
    %p248 = scmp.eq.s32.totalorder %s33, 0
    %p249 = por %p247, %p248
    %s251 = sadd.s32 %s250, 1
    %p254 = scmp.eq.s32.totalorder %s27, 1
    %p255 = scmp.ne.s32.totalorder %s250, %s252
    %p256 = scmp.eq.s32.totalorder %s27, 0
    %p257 = por %p255, %p256
    %p258 = scmp.ne.s32.totalorder %s250, %s252
    %p259 = scmp.eq.s32.totalorder %s32, 1
    %p260 = por %p258, %p259
    %p261 = scmp.ne.s32.totalorder %s252, %s253
    %p262 = scmp.eq.s32.totalorder %s32, 0
    %p263 = por %p261, %p262
    %p264 = scmp.ne.s32.totalorder %s252, %s253
    %p265 = scmp.eq.s32.totalorder %s33, 1
    %p266 = por %p264, %p265
    %p268 = scmp.ne.s32.totalorder %s253, %s267
    %p269 = scmp.eq.s32.totalorder %s33, 0
    %p270 = por %p268, %p269
    %s272 = sadd.s32 %s271, 1
    %p275 = scmp.eq.s32.totalorder %s27, 1
    %p276 = scmp.ne.s32.totalorder %s271, %s273
    %p277 = scmp.eq.s32.totalorder %s27, 0
    %p278 = por %p276, %p277
    %p279 = scmp.ne.s32.totalorder %s271, %s273
    %p280 = scmp.eq.s32.totalorder %s32, 1
    %p281 = por %p279, %p280
    %p282 = scmp.ne.s32.totalorder %s273, %s274
    %p283 = scmp.eq.s32.totalorder %s32, 0
    %p284 = por %p282, %p283
    %p285 = scmp.ne.s32.totalorder %s273, %s274
    %p286 = scmp.eq.s32.totalorder %s33, 1
    %p287 = por %p285, %p286
    %p289 = scmp.ne.s32.totalorder %s274, %s288
    %p290 = scmp.eq.s32.totalorder %s33, 0
    %p291 = por %p289, %p290
    %s293 = sadd.s32 %s292, 1
    %p296 = scmp.eq.s32.totalorder %s27, 1
    %p297 = scmp.ne.s32.totalorder %s292, %s294
    %p298 = scmp.eq.s32.totalorder %s27, 0
    %p299 = por %p297, %p298
    %p300 = scmp.ne.s32.totalorder %s292, %s294
    %p301 = scmp.eq.s32.totalorder %s32, 1
    %p302 = por %p300, %p301
    %p303 = scmp.ne.s32.totalorder %s294, %s295
    %p304 = scmp.eq.s32.totalorder %s32, 0
    %p305 = por %p303, %p304
    %p306 = scmp.ne.s32.totalorder %s294, %s295
    %p307 = scmp.eq.s32.totalorder %s33, 1
    %p308 = por %p306, %p307
    %p310 = scmp.ne.s32.totalorder %s295, %s309
    %p311 = scmp.eq.s32.totalorder %s33, 0
    %p312 = por %p310, %p311
    %s314 = sadd.s32 %s313, 1
    %p317 = scmp.eq.s32.totalorder %s27, 1
    %p318 = scmp.ne.s32.totalorder %s313, %s315
    %p319 = scmp.eq.s32.totalorder %s27, 0
    %p320 = por %p318, %p319
    %p321 = scmp.ne.s32.totalorder %s313, %s315
    %p322 = scmp.eq.s32.totalorder %s32, 1
    %p323 = por %p321, %p322
    %p324 = scmp.ne.s32.totalorder %s315, %s316
    %p325 = scmp.eq.s32.totalorder %s32, 0
    %p326 = por %p324, %p325
    %p327 = scmp.ne.s32.totalorder %s315, %s316
    %p328 = scmp.eq.s32.totalorder %s33, 1
    %p329 = por %p327, %p328
    %p331 = scmp.ne.s32.totalorder %s316, %s330
    %p332 = scmp.eq.s32.totalorder %s33, 0
    %p333 = por %p331, %p332
    %s335 = sadd.s32 %s334, 1
    %p338 = scmp.eq.s32.totalorder %s27, 1
    %p339 = scmp.ne.s32.totalorder %s334, %s336
    %p340 = scmp.eq.s32.totalorder %s27, 0
    %p341 = por %p339, %p340
    %p342 = scmp.ne.s32.totalorder %s334, %s336
    %p343 = scmp.eq.s32.totalorder %s32, 1
    %p344 = por %p342, %p343
    %p345 = scmp.ne.s32.totalorder %s336, %s337
    %p346 = scmp.eq.s32.totalorder %s32, 0
    %p347 = por %p345, %p346
    %p348 = scmp.ne.s32.totalorder %s336, %s337
    %p349 = scmp.eq.s32.totalorder %s33, 1
    %p350 = por %p348, %p349
    %p352 = scmp.ne.s32.totalorder %s337, %s351
    %p353 = scmp.eq.s32.totalorder %s33, 0
    %p354 = por %p352, %p353
    %s356 = sadd.s32 %s355, 1
    %p359 = scmp.eq.s32.totalorder %s27, 1
    %p360 = scmp.ne.s32.totalorder %s355, %s357
    %p361 = scmp.eq.s32.totalorder %s27, 0
    %p362 = por %p360, %p361
    %p363 = scmp.ne.s32.totalorder %s355, %s357
    %p364 = scmp.eq.s32.totalorder %s32, 1
    %p365 = por %p363, %p364
    %p366 = scmp.ne.s32.totalorder %s357, %s358
    %p367 = scmp.eq.s32.totalorder %s32, 0
    %p368 = por %p366, %p367
    %p369 = scmp.ne.s32.totalorder %s357, %s358
    %p370 = scmp.eq.s32.totalorder %s33, 1
    %p371 = por %p369, %p370
    %p373 = scmp.ne.s32.totalorder %s358, %s372
    %p374 = scmp.eq.s32.totalorder %s33, 0
    %p375 = por %p373, %p374
    %s377 = sadd.s32 %s376, 1
    %p380 = scmp.eq.s32.totalorder %s27, 1
    %p381 = scmp.ne.s32.totalorder %s376, %s378
    %p382 = scmp.eq.s32.totalorder %s27, 0
    %p383 = por %p381, %p382
    %p384 = scmp.ne.s32.totalorder %s376, %s378
    %p385 = scmp.eq.s32.totalorder %s32, 1
    %p386 = por %p384, %p385
    %p387 = scmp.ne.s32.totalorder %s378, %s379
    %p388 = scmp.eq.s32.totalorder %s32, 0
    %p389 = por %p387, %p388
    %p390 = scmp.ne.s32.totalorder %s378, %s379
    %p391 = scmp.eq.s32.totalorder %s33, 1
    %p392 = por %p390, %p391
    %p394 = scmp.ne.s32.totalorder %s379, %s393
    %p395 = scmp.eq.s32.totalorder %s33, 0
    %p396 = por %p394, %p395
    %s398 = sadd.s32 %s397, 1
    %p401 = scmp.eq.s32.totalorder %s27, 1
    %p402 = scmp.ne.s32.totalorder %s397, %s399
    %p403 = scmp.eq.s32.totalorder %s27, 0
    %p404 = por %p402, %p403
    %p405 = scmp.ne.s32.totalorder %s397, %s399
    %p406 = scmp.eq.s32.totalorder %s32, 1
    %p407 = por %p405, %p406
    %p408 = scmp.ne.s32.totalorder %s399, %s400
    %p409 = scmp.eq.s32.totalorder %s32, 0
    %p410 = por %p408, %p409
    %p411 = scmp.ne.s32.totalorder %s399, %s400
    %p412 = scmp.eq.s32.totalorder %s33, 1
    %p413 = por %p411, %p412
    %p415 = scmp.ne.s32.totalorder %s400, %s414
    %p416 = scmp.eq.s32.totalorder %s33, 0
    %p417 = por %p415, %p416
    %s419 = sadd.s32 %s418, 1
    %p422 = scmp.eq.s32.totalorder %s27, 1
    %p423 = scmp.ne.s32.totalorder %s418, %s420
    %p424 = scmp.eq.s32.totalorder %s27, 0
    %p425 = por %p423, %p424
    %p426 = scmp.ne.s32.totalorder %s418, %s420
    %p427 = scmp.eq.s32.totalorder %s32, 1
    %p428 = por %p426, %p427
    %p429 = scmp.ne.s32.totalorder %s420, %s421
    %p430 = scmp.eq.s32.totalorder %s32, 0
    %p431 = por %p429, %p430
    %p432 = scmp.ne.s32.totalorder %s420, %s421
    %p433 = scmp.eq.s32.totalorder %s33, 1
    %p434 = por %p432, %p433
    %p436 = scmp.ne.s32.totalorder %s421, %s435
    %p437 = scmp.eq.s32.totalorder %s33, 0
    %p438 = por %p436, %p437
    %s439 = ssub.s32 %s27, %s34
    %p440 = scmp.eq.s32.totalorder %s439, 0
    %s442 = sadd.s32 %s441, 1
    %s443 = scalar_select %p440, %s441, %s442
    %p446 = pneg %p440
    %p447 = scmp.eq.s32.totalorder %s27, 1
    %p448 = por %p446, %p447
    %p449 = scmp.ne.s32.totalorder %s441, %s444
    %p450 = scmp.eq.s32.totalorder %s27, 0
    %p451 = por %p449, %p450
    %p452 = scmp.ne.s32.totalorder %s441, %s444
    %p453 = scmp.eq.s32.totalorder %s32, 1
    %p454 = por %p452, %p453
    %p455 = scmp.ne.s32.totalorder %s444, %s445
    %p456 = scmp.eq.s32.totalorder %s32, 0
    %p457 = por %p455, %p456
    %p458 = scmp.ne.s32.totalorder %s444, %s445
    %p459 = scmp.eq.s32.totalorder %s33, 1
    %p460 = por %p458, %p459
    %p462 = scmp.ne.s32.totalorder %s445, %s461
    %p463 = scmp.eq.s32.totalorder %s33, 0
    %p464 = por %p462, %p463
    %s465 = ssub.s32 %s27, %s34
    %p466 = scmp.eq.s32.totalorder %s465, 0
    %s468 = sadd.s32 %s467, 1
    %s469 = scalar_select %p466, %s467, %s468
    %p472 = pneg %p466
    %p473 = scmp.eq.s32.totalorder %s27, 1
    %p474 = por %p472, %p473
    %p475 = scmp.ne.s32.totalorder %s467, %s470
    %p476 = scmp.eq.s32.totalorder %s27, 0
    %p477 = por %p475, %p476
    %p478 = scmp.ne.s32.totalorder %s467, %s470
    %p479 = scmp.eq.s32.totalorder %s32, 1
    %p480 = por %p478, %p479
    %p481 = scmp.ne.s32.totalorder %s470, %s471
    %p482 = scmp.eq.s32.totalorder %s32, 0
    %p483 = por %p481, %p482
    %p484 = scmp.ne.s32.totalorder %s470, %s471
    %p485 = scmp.eq.s32.totalorder %s33, 1
    %p486 = por %p484, %p485
    %p488 = scmp.ne.s32.totalorder %s471, %s487
    %p489 = scmp.eq.s32.totalorder %s33, 0
    %p490 = por %p488, %p489
    %p491 = scmp.le.s32.totalorder 1, %s27
    %p492 = scmp.lt.s32.totalorder %s27, 3
    %p493 = pnand %p491, %p492
    %p494 = pneg %p493
    // Predicated region
    $region9: #{cae4_forward.1} parent=5 // pred_check
      _
    $region10: #{cae4_forward.1} parent=5 // pred_check_branch
      %496 = sbr.rel (%p493) target = $region12
    $region11: #{cae4_forward.1} parent=5 // pred_region
      %s497 = ssub.s32 %s27, 1
      // Predicated region
      $region13: #{cae4_forward.1} parent=11 // pred_check
        %p498 = pneg %p74
      $region14: #{cae4_forward.1} parent=11 // pred_check_branch
        %500 = sbr.rel (%p498) target = $region16
      $region15: #{cae4_forward.1} parent=11 // pred_region
        _
      $region16: #{cae4_forward.1} parent=11 // pred_fallthru
        _
      // Predicated region
      $region17: #{cae4_forward.1} parent=11 // pred_check
        %p501 = pneg %p95
      $region18: #{cae4_forward.1} parent=11 // pred_check_branch
        %503 = sbr.rel (%p501) target = $region20
      $region19: #{cae4_forward.1} parent=11 // pred_region
        _
      $region20: #{cae4_forward.1} parent=11 // pred_fallthru
        _
      // Predicated region
      $region21: #{cae4_forward.1} parent=11 // pred_check
        %p504 = pneg %p116
      $region22: #{cae4_forward.1} parent=11 // pred_check_branch
        %506 = sbr.rel (%p504) target = $region24
      $region23: #{cae4_forward.1} parent=11 // pred_region
        _
      $region24: #{cae4_forward.1} parent=11 // pred_fallthru
        _
      // Predicated region
      $region25: #{cae4_forward.1} parent=11 // pred_check
        %p507 = pneg %p137
      $region26: #{cae4_forward.1} parent=11 // pred_check_branch
        %509 = sbr.rel (%p507) target = $region28
      $region27: #{cae4_forward.1} parent=11 // pred_region
        _
      $region28: #{cae4_forward.1} parent=11 // pred_fallthru
        _
      // Predicated region
      $region29: #{cae4_forward.1} parent=11 // pred_check
        %p510 = pneg %p158
      $region30: #{cae4_forward.1} parent=11 // pred_check_branch
        %512 = sbr.rel (%p510) target = $region32
      $region31: #{cae4_forward.1} parent=11 // pred_region
        _
      $region32: #{cae4_forward.1} parent=11 // pred_fallthru
        _
      // Predicated region
      $region33: #{cae4_forward.1} parent=11 // pred_check
        %p513 = pneg %p179
      $region34: #{cae4_forward.1} parent=11 // pred_check_branch
        %515 = sbr.rel (%p513) target = $region36
      $region35: #{cae4_forward.1} parent=11 // pred_region
        _
      $region36: #{cae4_forward.1} parent=11 // pred_fallthru
        _
      // Predicated region
      $region37: #{cae4_forward.1} parent=11 // pred_check
        %p516 = pneg %p200
      $region38: #{cae4_forward.1} parent=11 // pred_check_branch
        %518 = sbr.rel (%p516) target = $region40
      $region39: #{cae4_forward.1} parent=11 // pred_region
        _
      $region40: #{cae4_forward.1} parent=11 // pred_fallthru
        _
      // Predicated region
      $region41: #{cae4_forward.1} parent=11 // pred_check
        %p519 = pneg %p221
      $region42: #{cae4_forward.1} parent=11 // pred_check_branch
        %521 = sbr.rel (%p519) target = $region44
      $region43: #{cae4_forward.1} parent=11 // pred_region
        _
      $region44: #{cae4_forward.1} parent=11 // pred_fallthru
        _
      // Predicated region
      $region45: #{cae4_forward.1} parent=11 // pred_check
        %p522 = pneg %p242
      $region46: #{cae4_forward.1} parent=11 // pred_check_branch
        %524 = sbr.rel (%p522) target = $region48
      $region47: #{cae4_forward.1} parent=11 // pred_region
        _
      $region48: #{cae4_forward.1} parent=11 // pred_fallthru
        _
      // Predicated region
      $region49: #{cae4_forward.1} parent=11 // pred_check
        %p525 = pneg %p263
      $region50: #{cae4_forward.1} parent=11 // pred_check_branch
        %527 = sbr.rel (%p525) target = $region52
      $region51: #{cae4_forward.1} parent=11 // pred_region
        _
      $region52: #{cae4_forward.1} parent=11 // pred_fallthru
        _
      // Predicated region
      $region53: #{cae4_forward.1} parent=11 // pred_check
        %p528 = pneg %p284
      $region54: #{cae4_forward.1} parent=11 // pred_check_branch
        %530 = sbr.rel (%p528) target = $region56
      $region55: #{cae4_forward.1} parent=11 // pred_region
        _
      $region56: #{cae4_forward.1} parent=11 // pred_fallthru
        _
      // Predicated region
      $region57: #{cae4_forward.1} parent=11 // pred_check
        %p531 = pneg %p305
      $region58: #{cae4_forward.1} parent=11 // pred_check_branch
        %533 = sbr.rel (%p531) target = $region60
      $region59: #{cae4_forward.1} parent=11 // pred_region
        _
      $region60: #{cae4_forward.1} parent=11 // pred_fallthru
        _
      // Predicated region
      $region61: #{cae4_forward.1} parent=11 // pred_check
        %p534 = pneg %p326
      $region62: #{cae4_forward.1} parent=11 // pred_check_branch
        %536 = sbr.rel (%p534) target = $region64
      $region63: #{cae4_forward.1} parent=11 // pred_region
        _
      $region64: #{cae4_forward.1} parent=11 // pred_fallthru
        _
      // Predicated region
      $region65: #{cae4_forward.1} parent=11 // pred_check
        %p537 = pneg %p347
      $region66: #{cae4_forward.1} parent=11 // pred_check_branch
        %539 = sbr.rel (%p537) target = $region68
      $region67: #{cae4_forward.1} parent=11 // pred_region
        _
      $region68: #{cae4_forward.1} parent=11 // pred_fallthru
        _
      // Predicated region
      $region69: #{cae4_forward.1} parent=11 // pred_check
        %p540 = pneg %p368
      $region70: #{cae4_forward.1} parent=11 // pred_check_branch
        %542 = sbr.rel (%p540) target = $region72
      $region71: #{cae4_forward.1} parent=11 // pred_region
        _
      $region72: #{cae4_forward.1} parent=11 // pred_fallthru
        _
      // Predicated region
      $region73: #{cae4_forward.1} parent=11 // pred_check
        %p543 = pneg %p389
      $region74: #{cae4_forward.1} parent=11 // pred_check_branch
        %545 = sbr.rel (%p543) target = $region76
      $region75: #{cae4_forward.1} parent=11 // pred_region
        _
      $region76: #{cae4_forward.1} parent=11 // pred_fallthru
        _
      // Predicated region
      $region77: #{cae4_forward.1} parent=11 // pred_check
        %p546 = pneg %p410
      $region78: #{cae4_forward.1} parent=11 // pred_check_branch
        %548 = sbr.rel (%p546) target = $region80
      $region79: #{cae4_forward.1} parent=11 // pred_region
        _
      $region80: #{cae4_forward.1} parent=11 // pred_fallthru
        _
      // Predicated region
      $region81: #{cae4_forward.1} parent=11 // pred_check
        %p549 = pneg %p431
      $region82: #{cae4_forward.1} parent=11 // pred_check_branch
        %551 = sbr.rel (%p549) target = $region84
      $region83: #{cae4_forward.1} parent=11 // pred_region
        _
      $region84: #{cae4_forward.1} parent=11 // pred_fallthru
        _
    $region12: #{cae4_forward.1} parent=5 // pred_fallthru
      _
    %p552 = scmp.lt.s32.totalorder %s27, 2
    // Predicated region
    $region85: #{cae4_forward.1} parent=5 // pred_check
      %p553 = pneg %p552
    $region86: #{cae4_forward.1} parent=5 // pred_check_branch
      %555 = sbr.rel (%p553) target = $region88
    $region87: #{cae4_forward.1} parent=5 // pred_region
      // Predicated region
      $region89: #{cae4_forward.1} parent=87 // pred_check
        %p556 = pneg %p47
      $region90: #{cae4_forward.1} parent=87 // pred_check_branch
        %558 = sbr.rel (%p556) target = $region92
      $region91: #{cae4_forward.1} parent=87 // pred_region
        %s559 = smul.u32 8, %s27
        %p560 = scmp.lt.s32.totalorder %s559, 15
        %s561 = scalar_select %p560, %s559, 15
        %s562 = smul.addr %s561, 2
        %s563 = smul.addr %s562, 8
        %s564 = scalar_lea.vmem %s0, %s563
        %s565 = smul.u32 8, %s27
      $region92: #{cae4_forward.1} parent=87 // pred_fallthru
        _
    $region88: #{cae4_forward.1} parent=5 // pred_fallthru
      _
    %p566 = scmp.le.s32.totalorder 1, %s27
    %p567 = scmp.lt.s32.totalorder %s27, 3
    %p568 = pnand %p566, %p567
    %p569 = pneg %p568
    // Predicated region
    $region93: #{cae4_forward.1} parent=5 // pred_check
      _
    $region94: #{cae4_forward.1} parent=5 // pred_check_branch
      %571 = sbr.rel (%p568) target = $region96
    $region95: #{cae4_forward.1} parent=5 // pred_region
      %s572 = ssub.s32 %s27, 1
      %s573 = smul.u32 8, %s32
      %p574 = scmp.lt.s32.totalorder %s573, 15
      %s575 = scalar_select %p574, %s573, 15
      %s576 = smul.addr %s575, 2
      %s577 = smul.addr %s576, 8
      %s578 = scalar_lea.vmem %s0, %s577
      %p579 = pneg %p53
      %p580 = pneg %p50
      %p581 = pneg %p74
      %p582 = pneg %p71
      %p583 = pneg %p95
      %p584 = pneg %p92
      %p585 = pneg %p116
      %p586 = pneg %p113
      %p587 = pneg %p137
      %p588 = pneg %p134
      %p589 = pneg %p158
      %p590 = pneg %p155
      %p591 = pneg %p179
      %p592 = pneg %p176
      %p593 = pneg %p200
      %p594 = pneg %p197
      %p595 = pneg %p221
      %p596 = pneg %p218
      %p597 = pneg %p242
      %p598 = pneg %p239
      %p599 = pneg %p263
      %p600 = pneg %p260
      %p601 = pneg %p284
      %p602 = pneg %p281
      %p603 = pneg %p305
      %p604 = pneg %p302
      %p605 = pneg %p326
      %p606 = pneg %p323
      %p607 = pneg %p347
      %p608 = pneg %p344
      %p609 = pneg %p368
      %p610 = pneg %p365
      %p611 = pneg %p389
      %p612 = pneg %p386
      %p613 = pneg %p410
      %p614 = pneg %p407
      %p615 = pneg %p431
      %p616 = pneg %p428
      %p617 = pneg %p457
      %p618 = pneg %p454
      %s619 = smul.u32 8, %s32
      %p620 = scmp.lt.s32.totalorder %s619, 15
      %s621 = scalar_select %p620, %s619, 15
      %s622 = smul.addr %s621, 2
      %s623 = smul.addr %s622, 8
      %s624 = scalar_lea.vmem %s19, %s623
      %p625 = pneg %p483
      %p626 = pneg %p480
      %s627 = smul.u32 8, %s32
      %p628 = scmp.lt.s32.totalorder %s627, 15
      %s629 = scalar_select %p628, %s627, 15
      %s630 = smul.addr %s629, 2
      %s631 = smul.addr %s630, 8
      %s632 = scalar_lea.vmem %s20, %s631
      %s633 = smul.u32 8, %s32
      %p634 = scmp.lt.s32.totalorder %s633, 15
      %s635 = scalar_select %p634, %s633, 15
      %s636 = smul.addr %s635, 2
      %s637 = smul.addr %s636, 8
      %s638 = scalar_lea.vmem %s0, %s637
      %s639 = smul.u32 8, %s32
      %s640 = smul.u32 8, %s32
      %p641 = scmp.lt.s32.totalorder %s640, 15
      %s642 = scalar_select %p641, %s640, 15
      %s643 = smul.addr %s642, 2
      %s644 = smul.addr %s643, 8
      %s645 = scalar_lea.vmem %s19, %s644
      %s646 = smul.u32 8, %s32
      %s647 = smul.u32 8, %s32
      %p648 = scmp.lt.s32.totalorder %s647, 15
      %s649 = scalar_select %p648, %s647, 15
      %s650 = smul.addr %s649, 2
      %s651 = smul.addr %s650, 8
      %s652 = scalar_lea.vmem %s20, %s651
      %s653 = smul.u32 8, %s32
      %v655 = vlaneseq
      %v656 = vshrl.u32 %v655, 7
      %v657 = vadd.s32 %v656, 8
      %v658 = vadd.s32 %v656, 16
      %v659 = vadd.s32 %v656, 24
      %v660 = vadd.s32 %v656, 32
      %v661 = vadd.s32 %v656, 40
      %v662 = vadd.s32 %v656, 48
      %v663 = vadd.s32 %v656, 56
      %v664 = vadd.s32 %v656, 64
      %v665 = vadd.s32 %v656, 72
      %v666 = vadd.s32 %v656, 80
      %v667 = vadd.s32 %v656, 88
      %v668 = vadd.s32 %v656, 96
      %v669 = vadd.s32 %v656, 104
      %v670 = vadd.s32 %v656, 112
      %v671 = vadd.s32 %v656, 120
      %vm672 = vcmp.lt.s32.totalorder %v656, 0
      %v673 = vsub.s32 0, %v656
      %v674 = vsel %vm672, %v673, %v656
      %v675 = vshrl.u32 %v674, 4
      %v676 = vand.u32 %v674, 15
      %v677 = vsub.s32 0, %v676
      %v678 = vsel %vm672, %v677, %v676
      %vm679 = vcmp.lt.s32.totalorder %v657, 0
      %v680 = vsub.s32 0, %v657
      %v681 = vsel %vm679, %v680, %v657
      %v682 = vshrl.u32 %v681, 4
      %v683 = vand.u32 %v681, 15
      %v684 = vsub.s32 0, %v683
      %v685 = vsel %vm679, %v684, %v683
      %vm686 = vcmp.lt.s32.totalorder %v658, 0
      %v687 = vsub.s32 0, %v658
      %v688 = vsel %vm686, %v687, %v658
      %v689 = vshrl.u32 %v688, 4
      %v690 = vand.u32 %v688, 15
      %v691 = vsub.s32 0, %v690
      %v692 = vsel %vm686, %v691, %v690
      %vm693 = vcmp.lt.s32.totalorder %v659, 0
      %v694 = vsub.s32 0, %v659
      %v695 = vsel %vm693, %v694, %v659
      %v696 = vshrl.u32 %v695, 4
      %v697 = vand.u32 %v695, 15
      %v698 = vsub.s32 0, %v697
      %v699 = vsel %vm693, %v698, %v697
      %vm700 = vcmp.lt.s32.totalorder %v660, 0
      %v701 = vsub.s32 0, %v660
      %v702 = vsel %vm700, %v701, %v660
      %v703 = vshrl.u32 %v702, 4
      %v704 = vand.u32 %v702, 15
      %v705 = vsub.s32 0, %v704
      %v706 = vsel %vm700, %v705, %v704
      %vm707 = vcmp.lt.s32.totalorder %v661, 0
      %v708 = vsub.s32 0, %v661
      %v709 = vsel %vm707, %v708, %v661
      %v710 = vshrl.u32 %v709, 4
      %v711 = vand.u32 %v709, 15
      %v712 = vsub.s32 0, %v711
      %v713 = vsel %vm707, %v712, %v711
      %vm714 = vcmp.lt.s32.totalorder %v662, 0
      %v715 = vsub.s32 0, %v662
      %v716 = vsel %vm714, %v715, %v662
      %v717 = vshrl.u32 %v716, 4
      %v718 = vand.u32 %v716, 15
      %v719 = vsub.s32 0, %v718
      %v720 = vsel %vm714, %v719, %v718
      %vm721 = vcmp.lt.s32.totalorder %v663, 0
      %v722 = vsub.s32 0, %v663
      %v723 = vsel %vm721, %v722, %v663
      %v724 = vshrl.u32 %v723, 4
      %v725 = vand.u32 %v723, 15
      %v726 = vsub.s32 0, %v725
      %v727 = vsel %vm721, %v726, %v725
      %vm728 = vcmp.lt.s32.totalorder %v664, 0
      %v729 = vsub.s32 0, %v664
      %v730 = vsel %vm728, %v729, %v664
      %v731 = vshrl.u32 %v730, 4
      %v732 = vand.u32 %v730, 15
      %v733 = vsub.s32 0, %v732
      %v734 = vsel %vm728, %v733, %v732
      %vm735 = vcmp.lt.s32.totalorder %v665, 0
      %v736 = vsub.s32 0, %v665
      %v737 = vsel %vm735, %v736, %v665
      %v738 = vshrl.u32 %v737, 4
      %v739 = vand.u32 %v737, 15
      %v740 = vsub.s32 0, %v739
      %v741 = vsel %vm735, %v740, %v739
      %vm742 = vcmp.lt.s32.totalorder %v666, 0
      %v743 = vsub.s32 0, %v666
      %v744 = vsel %vm742, %v743, %v666
      %v745 = vshrl.u32 %v744, 4
      %v746 = vand.u32 %v744, 15
      %v747 = vsub.s32 0, %v746
      %v748 = vsel %vm742, %v747, %v746
      %vm749 = vcmp.lt.s32.totalorder %v667, 0
      %v750 = vsub.s32 0, %v667
      %v751 = vsel %vm749, %v750, %v667
      %v752 = vshrl.u32 %v751, 4
      %v753 = vand.u32 %v751, 15
      %v754 = vsub.s32 0, %v753
      %v755 = vsel %vm749, %v754, %v753
      %vm756 = vcmp.lt.s32.totalorder %v668, 0
      %v757 = vsub.s32 0, %v668
      %v758 = vsel %vm756, %v757, %v668
      %v759 = vshrl.u32 %v758, 4
      %v760 = vand.u32 %v758, 15
      %v761 = vsub.s32 0, %v760
      %v762 = vsel %vm756, %v761, %v760
      %vm763 = vcmp.lt.s32.totalorder %v669, 0
      %v764 = vsub.s32 0, %v669
      %v765 = vsel %vm763, %v764, %v669
      %v766 = vshrl.u32 %v765, 4
      %v767 = vand.u32 %v765, 15
      %v768 = vsub.s32 0, %v767
      %v769 = vsel %vm763, %v768, %v767
      %vm770 = vcmp.lt.s32.totalorder %v670, 0
      %v771 = vsub.s32 0, %v670
      %v772 = vsel %vm770, %v771, %v670
      %v773 = vshrl.u32 %v772, 4
      %v774 = vand.u32 %v772, 15
      %v775 = vsub.s32 0, %v774
      %v776 = vsel %vm770, %v775, %v774
      %vm777 = vcmp.lt.s32.totalorder %v671, 0
      %v778 = vsub.s32 0, %v671
      %v779 = vsel %vm777, %v778, %v671
      %v780 = vshrl.u32 %v779, 4
      %v781 = vand.u32 %v779, 15
      %v782 = vsub.s32 0, %v781
      %v783 = vsel %vm777, %v782, %v781
      %vm784 = vcmp.ne.s32.totalorder %v678, 0
      %vm785 = vcmp.ne.s32.totalorder %v685, 0
      %vm786 = vcmp.ne.s32.totalorder %v692, 0
      %vm787 = vcmp.ne.s32.totalorder %v699, 0
      %vm788 = vcmp.ne.s32.totalorder %v706, 0
      %vm789 = vcmp.ne.s32.totalorder %v713, 0
      %vm790 = vcmp.ne.s32.totalorder %v720, 0
      %vm791 = vcmp.ne.s32.totalorder %v727, 0
      %vm792 = vcmp.ne.s32.totalorder %v734, 0
      %vm793 = vcmp.ne.s32.totalorder %v741, 0
      %vm794 = vcmp.ne.s32.totalorder %v748, 0
      %vm795 = vcmp.ne.s32.totalorder %v755, 0
      %vm796 = vcmp.ne.s32.totalorder %v762, 0
      %vm797 = vcmp.ne.s32.totalorder %v769, 0
      %vm798 = vcmp.ne.s32.totalorder %v776, 0
      %vm799 = vcmp.ne.s32.totalorder %v783, 0
      %vm800 = vcmp.lt.s32.totalorder %v678, 0
      %vm801 = vcmp.lt.s32.totalorder %v685, 0
      %vm802 = vcmp.lt.s32.totalorder %v692, 0
      %vm803 = vcmp.lt.s32.totalorder %v699, 0
      %vm804 = vcmp.lt.s32.totalorder %v706, 0
      %vm805 = vcmp.lt.s32.totalorder %v713, 0
      %vm806 = vcmp.lt.s32.totalorder %v720, 0
      %vm807 = vcmp.lt.s32.totalorder %v727, 0
      %vm808 = vcmp.lt.s32.totalorder %v734, 0
      %vm809 = vcmp.lt.s32.totalorder %v741, 0
      %vm810 = vcmp.lt.s32.totalorder %v748, 0
      %vm811 = vcmp.lt.s32.totalorder %v755, 0
      %vm812 = vcmp.lt.s32.totalorder %v762, 0
      %vm813 = vcmp.lt.s32.totalorder %v769, 0
      %vm814 = vcmp.lt.s32.totalorder %v776, 0
      %vm815 = vcmp.lt.s32.totalorder %v783, 0
      %vm816 = vmand %vm800, %vm784
      %vm817 = vmand %vm801, %vm785
      %vm818 = vmand %vm802, %vm786
      %vm819 = vmand %vm803, %vm787
      %vm820 = vmand %vm804, %vm788
      %vm821 = vmand %vm805, %vm789
      %vm822 = vmand %vm806, %vm790
      %vm823 = vmand %vm807, %vm791
      %vm824 = vmand %vm808, %vm792
      %vm825 = vmand %vm809, %vm793
      %vm826 = vmand %vm810, %vm794
      %vm827 = vmand %vm811, %vm795
      %vm828 = vmand %vm812, %vm796
      %vm829 = vmand %vm813, %vm797
      %vm830 = vmand %vm814, %vm798
      %vm831 = vmand %vm815, %vm799
      %v832 = vadd.s32 %v678, 16
      %v833 = vadd.s32 %v685, 16
      %v834 = vadd.s32 %v692, 16
      %v835 = vadd.s32 %v699, 16
      %v836 = vadd.s32 %v706, 16
      %v837 = vadd.s32 %v713, 16
      %v838 = vadd.s32 %v720, 16
      %v839 = vadd.s32 %v727, 16
      %v840 = vadd.s32 %v734, 16
      %v841 = vadd.s32 %v741, 16
      %v842 = vadd.s32 %v748, 16
      %v843 = vadd.s32 %v755, 16
      %v844 = vadd.s32 %v762, 16
      %v845 = vadd.s32 %v769, 16
      %v846 = vadd.s32 %v776, 16
      %v847 = vadd.s32 %v783, 16
      %v848 = vsel %vm816, %v832, %v678
      %v849 = vsel %vm817, %v833, %v685
      %v850 = vsel %vm818, %v834, %v692
      %v851 = vsel %vm819, %v835, %v699
      %v852 = vsel %vm820, %v836, %v706
      %v853 = vsel %vm821, %v837, %v713
      %v854 = vsel %vm822, %v838, %v720
      %v855 = vsel %vm823, %v839, %v727
      %v856 = vsel %vm824, %v840, %v734
      %v857 = vsel %vm825, %v841, %v741
      %v858 = vsel %vm826, %v842, %v748
      %v859 = vsel %vm827, %v843, %v755
      %v860 = vsel %vm828, %v844, %v762
      %v861 = vsel %vm829, %v845, %v769
      %v862 = vsel %vm830, %v846, %v776
      %v863 = vsel %vm831, %v847, %v783
      %v864 = vld [vmem:[%s638] sm:$0xff]
      %v865 = vld [vmem:[%s638 + $0x8] sm:$0xff]
      %v866 = vld [vmem:[%s638 + $0x10] sm:$0xff]
      %v867 = vld [vmem:[%s638 + $0x18] sm:$0xff]
      %v868 = vld [vmem:[%s638 + $0x20] sm:$0xff]
      %v869 = vld [vmem:[%s638 + $0x28] sm:$0xff]
      %v870 = vld [vmem:[%s638 + $0x30] sm:$0xff]
      %v871 = vld [vmem:[%s638 + $0x38] sm:$0xff]
      %v872 = vld [vmem:[%s638 + $0x40] sm:$0xff]
      %v873 = vld [vmem:[%s638 + $0x48] sm:$0xff]
      %v874 = vld [vmem:[%s638 + $0x50] sm:$0xff]
      %v875 = vld [vmem:[%s638 + $0x58] sm:$0xff]
      %v876 = vld [vmem:[%s638 + $0x60] sm:$0xff]
      %v877 = vld [vmem:[%s638 + $0x68] sm:$0xff]
      %v878 = vld [vmem:[%s638 + $0x70] sm:$0xff]
      %v879 = vld [vmem:[%s638 + $0x78] sm:$0xff]
      %v880 = vpack.c.bf16 %v865, %v864
      %v881 = vpack.c.bf16 %v867, %v866
      %v882 = vpack.c.bf16 %v869, %v868
      %v883 = vpack.c.bf16 %v871, %v870
      %v884 = vpack.c.bf16 %v873, %v872
      %v885 = vpack.c.bf16 %v875, %v874
      %v886 = vpack.c.bf16 %v877, %v876
      %v887 = vpack.c.bf16 %v879, %v878
      %vm888 = vsmask.f32 7424
      %v890 = vshrl.u32 %v880, 16
      %v892 = vshll.u32 %v880, 16
      %v894 = vrot.slane %v892, 1
      %v895 = vor.u32 %v890, %v894
      %v897 = vshll.u32 %v881, 16
      %v899 = vrot.slane %v897, 1
      %v900 = vsel %vm888, %v895, %v899
      %v901 = vshrl.u32 %v881, 16
      %v903 = vor.u32 %v901, %v899
      %v905 = vshll.u32 %v882, 16
      %v907 = vrot.slane %v905, 1
      %v908 = vsel %vm888, %v903, %v907
      %v909 = vshrl.u32 %v882, 16
      %v911 = vor.u32 %v909, %v907
      %v913 = vshll.u32 %v883, 16
      %v915 = vrot.slane %v913, 1
      %v916 = vsel %vm888, %v911, %v915
      %v917 = vshrl.u32 %v883, 16
      %v919 = vor.u32 %v917, %v915
      %v921 = vshll.u32 %v884, 16
      %v923 = vrot.slane %v921, 1
      %v924 = vsel %vm888, %v919, %v923
      %v925 = vshrl.u32 %v884, 16
      %v927 = vor.u32 %v925, %v923
      %v929 = vshll.u32 %v885, 16
      %v931 = vrot.slane %v929, 1
      %v932 = vsel %vm888, %v927, %v931
      %v933 = vshrl.u32 %v885, 16
      %v935 = vor.u32 %v933, %v931
      %v937 = vshll.u32 %v886, 16
      %v939 = vrot.slane %v937, 1
      %v940 = vsel %vm888, %v935, %v939
      %v941 = vshrl.u32 %v886, 16
      %v943 = vor.u32 %v941, %v939
      %v945 = vshll.u32 %v887, 16
      %v947 = vrot.slane %v945, 1
      %v948 = vsel %vm888, %v943, %v947
      %v949 = vshrl.u32 %v887, 16
      %v951 = vor.u32 %v949, %v947
      %vm953 = vcmask 1047552
      %vm954 = vmand %vm953, %vm888
      %v955 = vsel %vm954, %v951, 0
      %v956 = vld [vmem:[%s1] sm:$0xf]
      %v957 = vld [vmem:[%s1 + $0x4] sm:$0xf]
      %v958 = vld [vmem:[%s1 + $0x8] sm:$0x3]
      %v959 = vld [vmem:[%s2] sm:$0x1]
      %961 = vrot.lane.b32.xlu0 %v900, 16
      %v962 = vpop.permute.xlu0 %961
      %963 = vrot.lane.b32.xlu0 %v908, 16
      %v964 = vpop.permute.xlu0 %963
      %965 = vrot.lane.b32.xlu0 %v916, 16
      %v966 = vpop.permute.xlu0 %965
      %967 = vrot.lane.b32.xlu0 %v924, 16
      %v968 = vpop.permute.xlu0 %967
      %969 = vrot.lane.b32.xlu0 %v932, 16
      %v970 = vpop.permute.xlu0 %969
      %971 = vrot.lane.b32.xlu0 %v940, 16
      %v972 = vpop.permute.xlu0 %971
      %973 = vrot.lane.b32.xlu0 %v948, 16
      %v974 = vpop.permute.xlu0 %973
      %975 = vrot.lane.b32.xlu0 %v955, 16
      %v976 = vpop.permute.xlu0 %975
      %vm977 = vcmask 130048
      %v979 = vsel %vm977, %v880, %v962
      %v981 = vsel %vm977, %v881, %v964
      %v983 = vsel %vm977, %v882, %v966
      %v985 = vsel %vm977, %v883, %v968
      %v987 = vsel %vm977, %v884, %v970
      %v989 = vsel %vm977, %v885, %v972
      %v991 = vsel %vm977, %v886, %v974
      %v993 = vsel %vm977, %v887, %v976
      %1002 = vrot.lane.b32.xlu0 %v880, 120
      %v1003 = vpop.permute.xlu0 %1002
      %1004 = vrot.lane.b32.xlu0 %v881, 120
      %v1005 = vpop.permute.xlu0 %1004
      %1006 = vrot.lane.b32.xlu0 %v882, 120
      %v1007 = vpop.permute.xlu0 %1006
      %1008 = vrot.lane.b32.xlu0 %v883, 120
      %v1009 = vpop.permute.xlu0 %1008
      %1010 = vrot.lane.b32.xlu0 %v884, 120
      %v1011 = vpop.permute.xlu0 %1010
      %1012 = vrot.lane.b32.xlu0 %v885, 120
      %v1013 = vpop.permute.xlu0 %1012
      %1014 = vrot.lane.b32.xlu0 %v886, 120
      %v1015 = vpop.permute.xlu0 %1014
      %1016 = vrot.lane.b32.xlu0 %v887, 120
      %v1017 = vpop.permute.xlu0 %1016
      %1018 = vrot.lane.b32.xlu0 %v900, 8
      %v1019 = vpop.permute.xlu0 %1018
      %1020 = vrot.lane.b32.xlu0 %v908, 8
      %v1021 = vpop.permute.xlu0 %1020
      %1022 = vrot.lane.b32.xlu0 %v916, 8
      %v1023 = vpop.permute.xlu0 %1022
      %1024 = vrot.lane.b32.xlu0 %v924, 8
      %v1025 = vpop.permute.xlu0 %1024
      %1026 = vrot.lane.b32.xlu0 %v932, 8
      %v1027 = vpop.permute.xlu0 %1026
      %1028 = vrot.lane.b32.xlu0 %v940, 8
      %v1029 = vpop.permute.xlu0 %1028
      %1030 = vrot.lane.b32.xlu0 %v948, 8
      %v1031 = vpop.permute.xlu0 %1030
      %1032 = vrot.lane.b32.xlu0 %v955, 8
      %v1033 = vpop.permute.xlu0 %1032
      %vm1034 = vcmask 64512
      %v1037 = vsel %vm1034, %v1003, %v1019
      %v1040 = vsel %vm1034, %v1005, %v1021
      %v1043 = vsel %vm1034, %v1007, %v1023
      %v1046 = vsel %vm1034, %v1009, %v1025
      %v1049 = vsel %vm1034, %v1011, %v1027
      %v1052 = vsel %vm1034, %v1013, %v1029
      %v1055 = vsel %vm1034, %v1015, %v1031
      %v1058 = vsel %vm1034, %v1017, %v1033
      %v1060 = vlaneseq
      %v1061 = vshrl.u32 %v1060, 7
      %v1062 = vsub.s32 0, %v1061
      %v1063 = vrot.slane %v959, %v1062
      %v1068 = vunpack.c.l.b16 %v956
      %v1069 = vunpack.c.l.b16 %v957
      %v1070 = vunpack.c.l.b16 %v958
      %v1071 = vpack.c.b16 %v1069, %v1068
      %v1072 = vpack.c.b16 %v1070, %v1070
      %vm1074 = vcmask 162816
      %v1075 = vsel %vm1074, %v979, 0
      %v1077 = vsel %vm1074, %v981, 0
      %v1079 = vsel %vm1074, %v983, 0
      %v1081 = vsel %vm1074, %v985, 0
      %v1083 = vsel %vm1074, %v987, 0
      %v1085 = vsel %vm1074, %v989, 0
      %v1087 = vsel %vm1074, %v991, 0
      %v1089 = vsel %vm1074, %v993, 0
      %vm1091 = vcmask 1041408
      %v1093 = vsel %vm1091, %v1072, 0
      %1095 = vmatprep.subr.bf16.mxu0 0
      %1096 = vmatpush1.bf16.msra.mxu0 0
      %1097 = vmatprep.subr.bf16.mxu0 0
      %1098 = vmatpush1.bf16.msra.mxu0 0
      %1099 = vmatprep.subr.bf16.mxu0 0
      %1100 = vmatpush1.bf16.msra.mxu0 0
      %1101 = vmatprep.subr.bf16.mxu0 0
      %1102 = vmatpush1.bf16.msra.mxu0 0
      %1103 = vmatprep.subr.bf16.mxu0 0
      %1104 = vmatpush1.bf16.msra.mxu0 0
      %1105 = vmatprep.subr.bf16.mxu0 0
      %1106 = vmatpush1.bf16.msra.mxu0 0
      %1107 = vmatprep.subr.bf16.mxu0 0
      %1108 = vmatpush1.bf16.msra.mxu0 %v1093
      %1109 = vmatprep.subr.bf16.mxu0 0
      %1110 = vmatpush1.bf16.msra.mxu0 %v1071
      %1111 = vmatprep.subr.bf16.mxu0 0
      %1112 = vmatpush2.bf16.msra.mxu0 0
      %1113 = vmatprep.subr.bf16.mxu0 0
      %1114 = vmatpush2.bf16.msra.mxu0 0
      %1115 = vmatprep.subr.bf16.mxu0 0
      %1116 = vmatpush2.bf16.msra.mxu0 0
      %1117 = vmatprep.subr.bf16.mxu0 0
      %1118 = vmatpush2.bf16.msra.mxu0 0
      %1119 = vmatprep.subr.bf16.mxu0 0
      %1120 = vmatpush2.bf16.msra.mxu0 0
      %1121 = vmatprep.subr.bf16.mxu0 0
      %1122 = vmatpush2.bf16.msra.mxu0 0
      %1123 = vmatprep.subr.bf16.mxu0 0
      %1124 = vmatpush2.bf16.msra.mxu0 0
      %1125 = vmatprep.subr.bf16.mxu0 0
      %1126 = vmatpush2.bf16.msra.mxu0 0
      %1127 = vmatprep.mubr.bf16.mxu0 0
      %1128 = vmatmul.mubr.bf16.gmra.mxu0 %v1075
      %v1129 = vpop.f32.mrf.mxu0
      %v1130 = vadd.f32 %v1063, %v1129
      %v1131 = vpop.f32.mrf.mxu0
      %v1132 = vpop.f32.mrf.mxu0
      %v1133 = vadd.f32 %v1063, %v1132
      %v1134 = vpop.f32.mrf.mxu0
      %1135 = vmatprep.mubr.bf16.mxu0 0
      %1136 = vmatmul.mubr.bf16.gmra.mxu0 %v1077
      %v1137 = vpop.f32.mrf.mxu0
      %v1138 = vadd.f32 %v1063, %v1137
      %v1139 = vpop.f32.mrf.mxu0
      %v1140 = vpop.f32.mrf.mxu0
      %v1141 = vadd.f32 %v1063, %v1140
      %v1142 = vpop.f32.mrf.mxu0
      %1143 = vmatprep.mubr.bf16.mxu0 0
      %1144 = vmatmul.mubr.bf16.gmra.mxu0 %v1079
      %v1145 = vpop.f32.mrf.mxu0
      %v1146 = vadd.f32 %v1063, %v1145
      %v1147 = vpop.f32.mrf.mxu0
      %v1148 = vpop.f32.mrf.mxu0
      %v1149 = vadd.f32 %v1063, %v1148
      %v1150 = vpop.f32.mrf.mxu0
      %1151 = vmatprep.mubr.bf16.mxu0 0
      %1152 = vmatmul.mubr.bf16.gmra.mxu0 %v1081
      %v1153 = vpop.f32.mrf.mxu0
      %v1154 = vadd.f32 %v1063, %v1153
      %v1155 = vpop.f32.mrf.mxu0
      %v1156 = vpop.f32.mrf.mxu0
      %v1157 = vadd.f32 %v1063, %v1156
      %v1158 = vpop.f32.mrf.mxu0
      %1159 = vmatprep.mubr.bf16.mxu0 0
      %1160 = vmatmul.mubr.bf16.gmra.mxu0 %v1083
      %v1161 = vpop.f32.mrf.mxu0
      %v1162 = vadd.f32 %v1063, %v1161
      %v1163 = vpop.f32.mrf.mxu0
      %v1164 = vpop.f32.mrf.mxu0
      %v1165 = vadd.f32 %v1063, %v1164
      %v1166 = vpop.f32.mrf.mxu0
      %1167 = vmatprep.mubr.bf16.mxu0 0
      %1168 = vmatmul.mubr.bf16.gmra.mxu0 %v1085
      %v1169 = vpop.f32.mrf.mxu0
      %v1170 = vadd.f32 %v1063, %v1169
      %v1171 = vpop.f32.mrf.mxu0
      %v1172 = vpop.f32.mrf.mxu0
      %v1173 = vadd.f32 %v1063, %v1172
      %v1174 = vpop.f32.mrf.mxu0
      %1175 = vmatprep.mubr.bf16.mxu0 0
      %1176 = vmatmul.mubr.bf16.gmra.mxu0 %v1087
      %v1177 = vpop.f32.mrf.mxu0
      %v1178 = vadd.f32 %v1063, %v1177
      %v1179 = vpop.f32.mrf.mxu0
      %v1180 = vpop.f32.mrf.mxu0
      %v1181 = vadd.f32 %v1063, %v1180
      %v1182 = vpop.f32.mrf.mxu0
      %1183 = vmatprep.mubr.bf16.mxu0 0
      %1184 = vmatmul.mubr.bf16.gmra.mxu0 %v1089
      %v1185 = vpop.f32.mrf.mxu0
      %v1186 = vadd.f32 %v1063, %v1185
      %v1187 = vpop.f32.mrf.mxu0
      %v1188 = vpop.f32.mrf.mxu0
      %v1189 = vadd.f32 %v1063, %v1188
      %v1190 = vpop.f32.mrf.mxu0
      %1191 = vdwg.mxu0
      %vm1192 = vcmp.ge.f32.partialorder %v1130, 0.0
      %vm1193 = vcmp.ge.f32.partialorder %v1133, 0.0
      %vm1194 = vcmp.ge.f32.partialorder %v1138, 0.0
      %vm1195 = vcmp.ge.f32.partialorder %v1141, 0.0
      %vm1196 = vcmp.ge.f32.partialorder %v1146, 0.0
      %vm1197 = vcmp.ge.f32.partialorder %v1149, 0.0
      %vm1198 = vcmp.ge.f32.partialorder %v1154, 0.0
      %vm1199 = vcmp.ge.f32.partialorder %v1157, 0.0
      %vm1200 = vcmp.ge.f32.partialorder %v1162, 0.0
      %vm1201 = vcmp.ge.f32.partialorder %v1165, 0.0
      %vm1202 = vcmp.ge.f32.partialorder %v1170, 0.0
      %vm1203 = vcmp.ge.f32.partialorder %v1173, 0.0
      %vm1204 = vcmp.ge.f32.partialorder %v1178, 0.0
      %vm1205 = vcmp.ge.f32.partialorder %v1181, 0.0
      %vm1206 = vcmp.ge.f32.partialorder %v1186, 0.0
      %vm1207 = vcmp.ge.f32.partialorder %v1189, 0.0
      %v1208 = vmul.f32 %v1130, 0.01
      %v1209 = vmul.f32 %v1133, 0.01
      %v1210 = vmul.f32 %v1138, 0.01
      %v1211 = vmul.f32 %v1141, 0.01
      %v1212 = vmul.f32 %v1146, 0.01
      %v1213 = vmul.f32 %v1149, 0.01
      %v1214 = vmul.f32 %v1154, 0.01
      %v1215 = vmul.f32 %v1157, 0.01
      %v1216 = vmul.f32 %v1162, 0.01
      %v1217 = vmul.f32 %v1165, 0.01
      %v1218 = vmul.f32 %v1170, 0.01
      %v1219 = vmul.f32 %v1173, 0.01
      %v1220 = vmul.f32 %v1178, 0.01
      %v1221 = vmul.f32 %v1181, 0.01
      %v1222 = vmul.f32 %v1186, 0.01
      %v1223 = vmul.f32 %v1189, 0.01
      %v1224 = vsel %vm1192, %v1130, %v1208
      %v1225 = vsel %vm1193, %v1133, %v1209
      %v1226 = vsel %vm1194, %v1138, %v1210
      %v1227 = vsel %vm1195, %v1141, %v1211
      %v1228 = vsel %vm1196, %v1146, %v1212
      %v1229 = vsel %vm1197, %v1149, %v1213
      %v1230 = vsel %vm1198, %v1154, %v1214
      %v1231 = vsel %vm1199, %v1157, %v1215
      %v1232 = vsel %vm1200, %v1162, %v1216
      %v1233 = vsel %vm1201, %v1165, %v1217
      %v1234 = vsel %vm1202, %v1170, %v1218
      %v1235 = vsel %vm1203, %v1173, %v1219
      %v1236 = vsel %vm1204, %v1178, %v1220
      %v1237 = vsel %vm1205, %v1181, %v1221
      %v1238 = vsel %vm1206, %v1186, %v1222
      %v1239 = vsel %vm1207, %v1189, %v1223
      %v1240 = vpack.c.bf16 %v1225, %v1224
      %v1241 = vpack.c.bf16 %v1227, %v1226
      %v1242 = vpack.c.bf16 %v1229, %v1228
      %v1243 = vpack.c.bf16 %v1231, %v1230
      %v1244 = vpack.c.bf16 %v1233, %v1232
      %v1245 = vpack.c.bf16 %v1235, %v1234
      %v1246 = vpack.c.bf16 %v1237, %v1236
      %v1247 = vpack.c.bf16 %v1239, %v1238
      %v1248 = vsel %vm1074, %v1037, 0
      %v1250 = vsel %vm1074, %v1040, 0
      %v1252 = vsel %vm1074, %v1043, 0
      %v1254 = vsel %vm1074, %v1046, 0
      %v1256 = vsel %vm1074, %v1049, 0
      %v1258 = vsel %vm1074, %v1052, 0
      %v1260 = vsel %vm1074, %v1055, 0
      %v1262 = vsel %vm1074, %v1058, 0
      %1264 = vmatprep.subr.bf16.mxu0 0
      %1265 = vmatpush1.bf16.msra.mxu0 0
      %1266 = vmatprep.subr.bf16.mxu0 0
      %1267 = vmatpush1.bf16.msra.mxu0 0
      %1268 = vmatprep.subr.bf16.mxu0 0
      %1269 = vmatpush1.bf16.msra.mxu0 0
      %1270 = vmatprep.subr.bf16.mxu0 0
      %1271 = vmatpush1.bf16.msra.mxu0 0
      %1272 = vmatprep.subr.bf16.mxu0 0
      %1273 = vmatpush1.bf16.msra.mxu0 0
      %1274 = vmatprep.subr.bf16.mxu0 0
      %1275 = vmatpush1.bf16.msra.mxu0 0
      %1276 = vmatprep.subr.bf16.mxu0 0
      %1277 = vmatpush1.bf16.msra.mxu0 %v1093
      %1278 = vmatprep.subr.bf16.mxu0 0
      %1279 = vmatpush1.bf16.msra.mxu0 %v1071
      %1280 = vmatprep.subr.bf16.mxu0 0
      %1281 = vmatpush2.bf16.msra.mxu0 0
      %1282 = vmatprep.subr.bf16.mxu0 0
      %1283 = vmatpush2.bf16.msra.mxu0 0
      %1284 = vmatprep.subr.bf16.mxu0 0
      %1285 = vmatpush2.bf16.msra.mxu0 0
      %1286 = vmatprep.subr.bf16.mxu0 0
      %1287 = vmatpush2.bf16.msra.mxu0 0
      %1288 = vmatprep.subr.bf16.mxu0 0
      %1289 = vmatpush2.bf16.msra.mxu0 0
      %1290 = vmatprep.subr.bf16.mxu0 0
      %1291 = vmatpush2.bf16.msra.mxu0 0
      %1292 = vmatprep.subr.bf16.mxu0 0
      %1293 = vmatpush2.bf16.msra.mxu0 0
      %1294 = vmatprep.subr.bf16.mxu0 0
      %1295 = vmatpush2.bf16.msra.mxu0 0
      %1296 = vmatprep.mubr.bf16.mxu0 0
      %1297 = vmatmul.mubr.bf16.gmra.mxu0 %v1248
      %v1298 = vpop.f32.mrf.mxu0
      %v1299 = vadd.f32 %v1063, %v1298
      %v1300 = vpop.f32.mrf.mxu0
      %v1301 = vpop.f32.mrf.mxu0
      %v1302 = vadd.f32 %v1063, %v1301
      %v1303 = vpop.f32.mrf.mxu0
      %1304 = vmatprep.mubr.bf16.mxu0 0
      %1305 = vmatmul.mubr.bf16.gmra.mxu0 %v1250
      %v1306 = vpop.f32.mrf.mxu0
      %v1307 = vadd.f32 %v1063, %v1306
      %v1308 = vpop.f32.mrf.mxu0
      %v1309 = vpop.f32.mrf.mxu0
      %v1310 = vadd.f32 %v1063, %v1309
      %v1311 = vpop.f32.mrf.mxu0
      %1312 = vmatprep.mubr.bf16.mxu0 0
      %1313 = vmatmul.mubr.bf16.gmra.mxu0 %v1252
      %v1314 = vpop.f32.mrf.mxu0
      %v1315 = vadd.f32 %v1063, %v1314
      %v1316 = vpop.f32.mrf.mxu0
      %v1317 = vpop.f32.mrf.mxu0
      %v1318 = vadd.f32 %v1063, %v1317
      %v1319 = vpop.f32.mrf.mxu0
      %1320 = vmatprep.mubr.bf16.mxu0 0
      %1321 = vmatmul.mubr.bf16.gmra.mxu0 %v1254
      %v1322 = vpop.f32.mrf.mxu0
      %v1323 = vadd.f32 %v1063, %v1322
      %v1324 = vpop.f32.mrf.mxu0
      %v1325 = vpop.f32.mrf.mxu0
      %v1326 = vadd.f32 %v1063, %v1325
      %v1327 = vpop.f32.mrf.mxu0
      %1328 = vmatprep.mubr.bf16.mxu0 0
      %1329 = vmatmul.mubr.bf16.gmra.mxu0 %v1256
      %v1330 = vpop.f32.mrf.mxu0
      %v1331 = vadd.f32 %v1063, %v1330
      %v1332 = vpop.f32.mrf.mxu0
      %v1333 = vpop.f32.mrf.mxu0
      %v1334 = vadd.f32 %v1063, %v1333
      %v1335 = vpop.f32.mrf.mxu0
      %1336 = vmatprep.mubr.bf16.mxu0 0
      %1337 = vmatmul.mubr.bf16.gmra.mxu0 %v1258
      %v1338 = vpop.f32.mrf.mxu0
      %v1339 = vadd.f32 %v1063, %v1338
      %v1340 = vpop.f32.mrf.mxu0
      %v1341 = vpop.f32.mrf.mxu0
      %v1342 = vadd.f32 %v1063, %v1341
      %v1343 = vpop.f32.mrf.mxu0
      %1344 = vmatprep.mubr.bf16.mxu0 0
      %1345 = vmatmul.mubr.bf16.gmra.mxu0 %v1260
      %v1346 = vpop.f32.mrf.mxu0
      %v1347 = vadd.f32 %v1063, %v1346
      %v1348 = vpop.f32.mrf.mxu0
      %v1349 = vpop.f32.mrf.mxu0
      %v1350 = vadd.f32 %v1063, %v1349
      %v1351 = vpop.f32.mrf.mxu0
      %1352 = vmatprep.mubr.bf16.mxu0 0
      %1353 = vmatmul.mubr.bf16.gmra.mxu0 %v1262
      %v1354 = vpop.f32.mrf.mxu0
      %v1355 = vadd.f32 %v1063, %v1354
      %v1356 = vpop.f32.mrf.mxu0
      %v1357 = vpop.f32.mrf.mxu0
      %v1358 = vadd.f32 %v1063, %v1357
      %v1359 = vpop.f32.mrf.mxu0
      %1360 = vdwg.mxu0
      %vm1361 = vcmp.ge.f32.partialorder %v1299, 0.0
      %vm1362 = vcmp.ge.f32.partialorder %v1302, 0.0
      %vm1363 = vcmp.ge.f32.partialorder %v1307, 0.0
      %vm1364 = vcmp.ge.f32.partialorder %v1310, 0.0
      %vm1365 = vcmp.ge.f32.partialorder %v1315, 0.0
      %vm1366 = vcmp.ge.f32.partialorder %v1318, 0.0
      %vm1367 = vcmp.ge.f32.partialorder %v1323, 0.0
      %vm1368 = vcmp.ge.f32.partialorder %v1326, 0.0
      %vm1369 = vcmp.ge.f32.partialorder %v1331, 0.0
      %vm1370 = vcmp.ge.f32.partialorder %v1334, 0.0
      %vm1371 = vcmp.ge.f32.partialorder %v1339, 0.0
      %vm1372 = vcmp.ge.f32.partialorder %v1342, 0.0
      %vm1373 = vcmp.ge.f32.partialorder %v1347, 0.0
      %vm1374 = vcmp.ge.f32.partialorder %v1350, 0.0
      %vm1375 = vcmp.ge.f32.partialorder %v1355, 0.0
      %vm1376 = vcmp.ge.f32.partialorder %v1358, 0.0
      %v1377 = vmul.f32 %v1299, 0.01
      %v1378 = vmul.f32 %v1302, 0.01
      %v1379 = vmul.f32 %v1307, 0.01
      %v1380 = vmul.f32 %v1310, 0.01
      %v1381 = vmul.f32 %v1315, 0.01
      %v1382 = vmul.f32 %v1318, 0.01
      %v1383 = vmul.f32 %v1323, 0.01
      %v1384 = vmul.f32 %v1326, 0.01
      %v1385 = vmul.f32 %v1331, 0.01
      %v1386 = vmul.f32 %v1334, 0.01
      %v1387 = vmul.f32 %v1339, 0.01
      %v1388 = vmul.f32 %v1342, 0.01
      %v1389 = vmul.f32 %v1347, 0.01
      %v1390 = vmul.f32 %v1350, 0.01
      %v1391 = vmul.f32 %v1355, 0.01
      %v1392 = vmul.f32 %v1358, 0.01
      %v1393 = vsel %vm1361, %v1299, %v1377
      %v1394 = vsel %vm1362, %v1302, %v1378
      %v1395 = vsel %vm1363, %v1307, %v1379
      %v1396 = vsel %vm1364, %v1310, %v1380
      %v1397 = vsel %vm1365, %v1315, %v1381
      %v1398 = vsel %vm1366, %v1318, %v1382
      %v1399 = vsel %vm1367, %v1323, %v1383
      %v1400 = vsel %vm1368, %v1326, %v1384
      %v1401 = vsel %vm1369, %v1331, %v1385
      %v1402 = vsel %vm1370, %v1334, %v1386
      %v1403 = vsel %vm1371, %v1339, %v1387
      %v1404 = vsel %vm1372, %v1342, %v1388
      %v1405 = vsel %vm1373, %v1347, %v1389
      %v1406 = vsel %vm1374, %v1350, %v1390
      %v1407 = vsel %vm1375, %v1355, %v1391
      %v1408 = vsel %vm1376, %v1358, %v1392
      %v1409 = vpack.c.bf16 %v1394, %v1393
      %v1410 = vpack.c.bf16 %v1396, %v1395
      %v1411 = vpack.c.bf16 %v1398, %v1397
      %v1412 = vpack.c.bf16 %v1400, %v1399
      %v1413 = vpack.c.bf16 %v1402, %v1401
      %v1414 = vpack.c.bf16 %v1404, %v1403
      %v1415 = vpack.c.bf16 %v1406, %v1405
      %v1416 = vpack.c.bf16 %v1408, %v1407
      %v1418 = vshrl.u32 %v1240, 16
      %v1420 = vshll.u32 %v1240, 16
      %v1422 = vrot.slane %v1420, 1
      %v1423 = vor.u32 %v1418, %v1422
      %v1425 = vshll.u32 %v1241, 16
      %v1427 = vrot.slane %v1425, 1
      %v1428 = vsel %vm888, %v1423, %v1427
      %v1429 = vshrl.u32 %v1241, 16
      %v1431 = vor.u32 %v1429, %v1427
      %v1433 = vshll.u32 %v1242, 16
      %v1435 = vrot.slane %v1433, 1
      %v1436 = vsel %vm888, %v1431, %v1435
      %v1437 = vshrl.u32 %v1242, 16
      %v1439 = vor.u32 %v1437, %v1435
      %v1441 = vshll.u32 %v1243, 16
      %v1443 = vrot.slane %v1441, 1
      %v1444 = vsel %vm888, %v1439, %v1443
      %v1445 = vshrl.u32 %v1243, 16
      %v1447 = vor.u32 %v1445, %v1443
      %v1449 = vshll.u32 %v1244, 16
      %v1451 = vrot.slane %v1449, 1
      %v1452 = vsel %vm888, %v1447, %v1451
      %v1453 = vshrl.u32 %v1244, 16
      %v1455 = vor.u32 %v1453, %v1451
      %v1457 = vshll.u32 %v1245, 16
      %v1459 = vrot.slane %v1457, 1
      %v1460 = vsel %vm888, %v1455, %v1459
      %v1461 = vshrl.u32 %v1245, 16
      %v1463 = vor.u32 %v1461, %v1459
      %v1465 = vshll.u32 %v1246, 16
      %v1467 = vrot.slane %v1465, 1
      %v1468 = vsel %vm888, %v1463, %v1467
      %v1469 = vshrl.u32 %v1246, 16
      %v1471 = vor.u32 %v1469, %v1467
      %v1473 = vshll.u32 %v1247, 16
      %v1475 = vrot.slane %v1473, 1
      %v1476 = vsel %vm888, %v1471, %v1475
      %v1477 = vshrl.u32 %v1247, 16
      %v1479 = vor.u32 %v1477, %v1475
      %v1481 = vsel %vm954, %v1479, 0
      %v1483 = vshrl.u32 %v1409, 16
      %v1485 = vshll.u32 %v1409, 16
      %v1487 = vrot.slane %v1485, 1
      %v1488 = vor.u32 %v1483, %v1487
      %v1490 = vshll.u32 %v1410, 16
      %v1492 = vrot.slane %v1490, 1
      %v1493 = vsel %vm888, %v1488, %v1492
      %v1494 = vshrl.u32 %v1410, 16
      %v1496 = vor.u32 %v1494, %v1492
      %v1498 = vshll.u32 %v1411, 16
      %v1500 = vrot.slane %v1498, 1
      %v1501 = vsel %vm888, %v1496, %v1500
      %v1502 = vshrl.u32 %v1411, 16
      %v1504 = vor.u32 %v1502, %v1500
      %v1506 = vshll.u32 %v1412, 16
      %v1508 = vrot.slane %v1506, 1
      %v1509 = vsel %vm888, %v1504, %v1508
      %v1510 = vshrl.u32 %v1412, 16
      %v1512 = vor.u32 %v1510, %v1508
      %v1514 = vshll.u32 %v1413, 16
      %v1516 = vrot.slane %v1514, 1
      %v1517 = vsel %vm888, %v1512, %v1516
      %v1518 = vshrl.u32 %v1413, 16
      %v1520 = vor.u32 %v1518, %v1516
      %v1522 = vshll.u32 %v1414, 16
      %v1524 = vrot.slane %v1522, 1
      %v1525 = vsel %vm888, %v1520, %v1524
      %v1526 = vshrl.u32 %v1414, 16
      %v1528 = vor.u32 %v1526, %v1524
      %v1530 = vshll.u32 %v1415, 16
      %v1532 = vrot.slane %v1530, 1
      %v1533 = vsel %vm888, %v1528, %v1532
      %v1534 = vshrl.u32 %v1415, 16
      %v1536 = vor.u32 %v1534, %v1532
      %v1538 = vshll.u32 %v1416, 16
      %v1540 = vrot.slane %v1538, 1
      %v1541 = vsel %vm888, %v1536, %v1540
      %v1542 = vshrl.u32 %v1416, 16
      %v1544 = vor.u32 %v1542, %v1540
      %v1546 = vsel %vm954, %v1544, 0
      %vm1555 = vcmask 1046528
      %v1556 = vrot.slane %v1240, 1
      %v1557 = vrot.slane %v1241, 1
      %v1558 = vsel %vm1555, %v1556, %v1557
      %v1559 = vrot.slane %v1242, 1
      %v1560 = vsel %vm1555, %v1557, %v1559
      %v1561 = vrot.slane %v1243, 1
      %v1562 = vsel %vm1555, %v1559, %v1561
      %v1563 = vrot.slane %v1244, 1
      %v1564 = vsel %vm1555, %v1561, %v1563
      %v1565 = vrot.slane %v1245, 1
      %v1566 = vsel %vm1555, %v1563, %v1565
      %v1567 = vrot.slane %v1246, 1
      %v1568 = vsel %vm1555, %v1565, %v1567
      %v1569 = vrot.slane %v1247, 1
      %v1570 = vsel %vm1555, %v1567, %v1569
      %vm1571 = vcmask 1046528
      %v1574 = vsel %vm1571, %v1569, 0
      %1583 = vrot.lane.b32.xlu0 %v1409, 16
      %v1584 = vpop.permute.xlu0 %1583
      %1585 = vrot.lane.b32.xlu0 %v1410, 16
      %v1586 = vpop.permute.xlu0 %1585
      %1587 = vrot.lane.b32.xlu0 %v1411, 16
      %v1588 = vpop.permute.xlu0 %1587
      %1589 = vrot.lane.b32.xlu0 %v1412, 16
      %v1590 = vpop.permute.xlu0 %1589
      %1591 = vrot.lane.b32.xlu0 %v1413, 16
      %v1592 = vpop.permute.xlu0 %1591
      %1593 = vrot.lane.b32.xlu0 %v1414, 16
      %v1594 = vpop.permute.xlu0 %1593
      %1595 = vrot.lane.b32.xlu0 %v1415, 16
      %v1596 = vpop.permute.xlu0 %1595
      %1597 = vrot.lane.b32.xlu0 %v1416, 16
      %v1598 = vpop.permute.xlu0 %1597
      %1600 = vrot.lane.b32.xlu0 %v1428, 32
      %v1601 = vpop.permute.xlu0 %1600
      %1602 = vrot.lane.b32.xlu0 %v1436, 32
      %v1603 = vpop.permute.xlu0 %1602
      %1604 = vrot.lane.b32.xlu0 %v1444, 32
      %v1605 = vpop.permute.xlu0 %1604
      %1606 = vrot.lane.b32.xlu0 %v1452, 32
      %v1607 = vpop.permute.xlu0 %1606
      %1608 = vrot.lane.b32.xlu0 %v1460, 32
      %v1609 = vpop.permute.xlu0 %1608
      %1610 = vrot.lane.b32.xlu0 %v1468, 32
      %v1611 = vpop.permute.xlu0 %1610
      %1612 = vrot.lane.b32.xlu0 %v1476, 32
      %v1613 = vpop.permute.xlu0 %1612
      %1614 = vrot.lane.b32.xlu0 %v1481, 32
      %v1615 = vpop.permute.xlu0 %1614
      %1617 = vrot.lane.b32.xlu0 %v1493, 48
      %v1618 = vpop.permute.xlu0 %1617
      %1619 = vrot.lane.b32.xlu0 %v1501, 48
      %v1620 = vpop.permute.xlu0 %1619
      %1621 = vrot.lane.b32.xlu0 %v1509, 48
      %v1622 = vpop.permute.xlu0 %1621
      %1623 = vrot.lane.b32.xlu0 %v1517, 48
      %v1624 = vpop.permute.xlu0 %1623
      %1625 = vrot.lane.b32.xlu0 %v1525, 48
      %v1626 = vpop.permute.xlu0 %1625
      %1627 = vrot.lane.b32.xlu0 %v1533, 48
      %v1628 = vpop.permute.xlu0 %1627
      %1629 = vrot.lane.b32.xlu0 %v1541, 48
      %v1630 = vpop.permute.xlu0 %1629
      %1631 = vrot.lane.b32.xlu0 %v1546, 48
      %v1632 = vpop.permute.xlu0 %1631
      %1634 = vrot.lane.b32.xlu0 %v1558, 64
      %v1635 = vpop.permute.xlu0 %1634
      %1636 = vrot.lane.b32.xlu0 %v1560, 64
      %v1637 = vpop.permute.xlu0 %1636
      %1638 = vrot.lane.b32.xlu0 %v1562, 64
      %v1639 = vpop.permute.xlu0 %1638
      %1640 = vrot.lane.b32.xlu0 %v1564, 64
      %v1641 = vpop.permute.xlu0 %1640
      %1642 = vrot.lane.b32.xlu0 %v1566, 64
      %v1643 = vpop.permute.xlu0 %1642
      %1644 = vrot.lane.b32.xlu0 %v1568, 64
      %v1645 = vpop.permute.xlu0 %1644
      %1646 = vrot.lane.b32.xlu0 %v1570, 64
      %v1647 = vpop.permute.xlu0 %1646
      %1648 = vrot.lane.b32.xlu0 %v1574, 64
      %v1649 = vpop.permute.xlu0 %1648
      %v1651 = vsel %vm977, %v1240, %v1584
      %v1653 = vsel %vm977, %v1241, %v1586
      %v1655 = vsel %vm977, %v1242, %v1588
      %v1657 = vsel %vm977, %v1243, %v1590
      %v1659 = vsel %vm977, %v1244, %v1592
      %v1661 = vsel %vm977, %v1245, %v1594
      %v1663 = vsel %vm977, %v1246, %v1596
      %v1665 = vsel %vm977, %v1247, %v1598
      %vm1666 = vcmask 261120
      %v1668 = vsel %vm1666, %v1651, %v1601
      %v1670 = vsel %vm1666, %v1653, %v1603
      %v1672 = vsel %vm1666, %v1655, %v1605
      %v1674 = vsel %vm1666, %v1657, %v1607
      %v1676 = vsel %vm1666, %v1659, %v1609
      %v1678 = vsel %vm1666, %v1661, %v1611
      %v1680 = vsel %vm1666, %v1663, %v1613
      %v1682 = vsel %vm1666, %v1665, %v1615
      %vm1683 = vcmask 392192
      %v1685 = vsel %vm1683, %v1668, %v1618
      %v1687 = vsel %vm1683, %v1670, %v1620
      %v1689 = vsel %vm1683, %v1672, %v1622
      %v1691 = vsel %vm1683, %v1674, %v1624
      %v1693 = vsel %vm1683, %v1676, %v1626
      %v1695 = vsel %vm1683, %v1678, %v1628
      %v1697 = vsel %vm1683, %v1680, %v1630
      %v1699 = vsel %vm1683, %v1682, %v1632
      %vm1700 = vcmask 523264
      %v1702 = vsel %vm1700, %v1685, %v1635
      %v1704 = vsel %vm1700, %v1687, %v1637
      %v1706 = vsel %vm1700, %v1689, %v1639
      %v1708 = vsel %vm1700, %v1691, %v1641
      %v1710 = vsel %vm1700, %v1693, %v1643
      %v1712 = vsel %vm1700, %v1695, %v1645
      %v1714 = vsel %vm1700, %v1697, %v1647
      %v1716 = vsel %vm1700, %v1699, %v1649
      %v1717 = vld [vmem:[%s3] sm:$0xf]
      %v1718 = vld [vmem:[%s3 + $0x4] sm:$0xf]
      %v1719 = vld [vmem:[%s3 + $0x8] sm:$0xf]
      %v1720 = vld [vmem:[%s3 + $0xc] sm:$0xf]
      %v1721 = vld [vmem:[%s3 + $0x10] sm:$0xf]
      %v1722 = vld [vmem:[%s3 + $0x14] sm:$0xf]
      %v1723 = vld [vmem:[%s3 + $0x18] sm:$0xf]
      %v1724 = vld [vmem:[%s3 + $0x1c] sm:$0xf]
      %v1725 = vld [vmem:[%s3 + $0x20] sm:$0xf]
      %v1726 = vld [vmem:[%s3 + $0x24] sm:$0xf]
      %v1727 = vld [vmem:[%s4] sm:$0x1]
      %v1729 = vlaneseq
      %v1730 = vshrl.u32 %v1729, 7
      %v1731 = vsub.s32 0, %v1730
      %v1732 = vrot.slane %v1727, %v1731
      %v1744 = vunpack.c.l.b16 %v1717
      %v1745 = vunpack.c.l.b16 %v1718
      %v1746 = vunpack.c.l.b16 %v1719
      %v1747 = vunpack.c.l.b16 %v1720
      %v1748 = vunpack.c.l.b16 %v1721
      %v1749 = vunpack.c.l.b16 %v1722
      %v1750 = vunpack.c.l.b16 %v1723
      %v1751 = vunpack.c.l.b16 %v1724
      %v1752 = vunpack.c.l.b16 %v1725
      %v1753 = vunpack.c.l.b16 %v1726
      %v1754 = vpack.c.b16 %v1745, %v1744
      %v1755 = vpack.c.b16 %v1747, %v1746
      %v1756 = vpack.c.b16 %v1749, %v1748
      %v1757 = vpack.c.b16 %v1751, %v1750
      %v1758 = vpack.c.b16 %v1753, %v1752
      %vm1764 = vcmask 654336
      %v1765 = vsel %vm1764, %v1702, 0
      %v1767 = vsel %vm1764, %v1704, 0
      %v1769 = vsel %vm1764, %v1706, 0
      %v1771 = vsel %vm1764, %v1708, 0
      %v1773 = vsel %vm1764, %v1710, 0
      %v1775 = vsel %vm1764, %v1712, 0
      %v1777 = vsel %vm1764, %v1714, 0
      %v1779 = vsel %vm1764, %v1716, 0
      %1781 = vmatprep.subr.bf16.mxu0 0
      %1782 = vmatpush1.bf16.msra.mxu0 0
      %1783 = vmatprep.subr.bf16.mxu0 0
      %1784 = vmatpush1.bf16.msra.mxu0 0
      %1785 = vmatprep.subr.bf16.mxu0 0
      %1786 = vmatpush1.bf16.msra.mxu0 0
      %1787 = vmatprep.subr.bf16.mxu0 0
      %1788 = vmatpush1.bf16.msra.mxu0 %v1758
      %1789 = vmatprep.subr.bf16.mxu0 0
      %1790 = vmatpush1.bf16.msra.mxu0 %v1757
      %1791 = vmatprep.subr.bf16.mxu0 0
      %1792 = vmatpush1.bf16.msra.mxu0 %v1756
      %1793 = vmatprep.subr.bf16.mxu0 0
      %1794 = vmatpush1.bf16.msra.mxu0 %v1755
      %1795 = vmatprep.subr.bf16.mxu0 0
      %1796 = vmatpush1.bf16.msra.mxu0 %v1754
      %1797 = vmatprep.subr.bf16.mxu0 0
      %1798 = vmatpush2.bf16.msra.mxu0 0
      %1799 = vmatprep.subr.bf16.mxu0 0
      %1800 = vmatpush2.bf16.msra.mxu0 0
      %1801 = vmatprep.subr.bf16.mxu0 0
      %1802 = vmatpush2.bf16.msra.mxu0 0
      %1803 = vmatprep.subr.bf16.mxu0 0
      %1804 = vmatpush2.bf16.msra.mxu0 0
      %1805 = vmatprep.subr.bf16.mxu0 0
      %1806 = vmatpush2.bf16.msra.mxu0 0
      %1807 = vmatprep.subr.bf16.mxu0 0
      %1808 = vmatpush2.bf16.msra.mxu0 0
      %1809 = vmatprep.subr.bf16.mxu0 0
      %1810 = vmatpush2.bf16.msra.mxu0 0
      %1811 = vmatprep.subr.bf16.mxu0 0
      %1812 = vmatpush2.bf16.msra.mxu0 0
      %1813 = vmatprep.mubr.bf16.mxu0 0
      %1814 = vmatmul.mubr.bf16.gmra.mxu0 %v1765
      %v1815 = vpop.f32.mrf.mxu0
      %v1816 = vadd.f32 %v1732, %v1815
      %v1817 = vpop.f32.mrf.mxu0
      %v1818 = vpop.f32.mrf.mxu0
      %v1819 = vadd.f32 %v1732, %v1818
      %v1820 = vpop.f32.mrf.mxu0
      %1821 = vmatprep.mubr.bf16.mxu0 0
      %1822 = vmatmul.mubr.bf16.gmra.mxu0 %v1767
      %v1823 = vpop.f32.mrf.mxu0
      %v1824 = vadd.f32 %v1732, %v1823
      %v1825 = vpop.f32.mrf.mxu0
      %v1826 = vpop.f32.mrf.mxu0
      %v1827 = vadd.f32 %v1732, %v1826
      %v1828 = vpop.f32.mrf.mxu0
      %1829 = vmatprep.mubr.bf16.mxu0 0
      %1830 = vmatmul.mubr.bf16.gmra.mxu0 %v1769
      %v1831 = vpop.f32.mrf.mxu0
      %v1832 = vadd.f32 %v1732, %v1831
      %v1833 = vpop.f32.mrf.mxu0
      %v1834 = vpop.f32.mrf.mxu0
      %v1835 = vadd.f32 %v1732, %v1834
      %v1836 = vpop.f32.mrf.mxu0
      %1837 = vmatprep.mubr.bf16.mxu0 0
      %1838 = vmatmul.mubr.bf16.gmra.mxu0 %v1771
      %v1839 = vpop.f32.mrf.mxu0
      %v1840 = vadd.f32 %v1732, %v1839
      %v1841 = vpop.f32.mrf.mxu0
      %v1842 = vpop.f32.mrf.mxu0
      %v1843 = vadd.f32 %v1732, %v1842
      %v1844 = vpop.f32.mrf.mxu0
      %1845 = vmatprep.mubr.bf16.mxu0 0
      %1846 = vmatmul.mubr.bf16.gmra.mxu0 %v1773
      %v1847 = vpop.f32.mrf.mxu0
      %v1848 = vadd.f32 %v1732, %v1847
      %v1849 = vpop.f32.mrf.mxu0
      %v1850 = vpop.f32.mrf.mxu0
      %v1851 = vadd.f32 %v1732, %v1850
      %v1852 = vpop.f32.mrf.mxu0
      %1853 = vmatprep.mubr.bf16.mxu0 0
      %1854 = vmatmul.mubr.bf16.gmra.mxu0 %v1775
      %v1855 = vpop.f32.mrf.mxu0
      %v1856 = vadd.f32 %v1732, %v1855
      %v1857 = vpop.f32.mrf.mxu0
      %v1858 = vpop.f32.mrf.mxu0
      %v1859 = vadd.f32 %v1732, %v1858
      %v1860 = vpop.f32.mrf.mxu0
      %1861 = vmatprep.mubr.bf16.mxu0 0
      %1862 = vmatmul.mubr.bf16.gmra.mxu0 %v1777
      %v1863 = vpop.f32.mrf.mxu0
      %v1864 = vadd.f32 %v1732, %v1863
      %v1865 = vpop.f32.mrf.mxu0
      %v1866 = vpop.f32.mrf.mxu0
      %v1867 = vadd.f32 %v1732, %v1866
      %v1868 = vpop.f32.mrf.mxu0
      %1869 = vmatprep.mubr.bf16.mxu0 0
      %1870 = vmatmul.mubr.bf16.gmra.mxu0 %v1779
      %v1871 = vpop.f32.mrf.mxu0
      %v1872 = vadd.f32 %v1732, %v1871
      %v1873 = vpop.f32.mrf.mxu0
      %v1874 = vpop.f32.mrf.mxu0
      %v1875 = vadd.f32 %v1732, %v1874
      %v1876 = vpop.f32.mrf.mxu0
      %1877 = vdwg.mxu0
      %vm1878 = vcmp.ge.f32.partialorder %v1816, 0.0
      %vm1879 = vcmp.ge.f32.partialorder %v1819, 0.0
      %vm1880 = vcmp.ge.f32.partialorder %v1824, 0.0
      %vm1881 = vcmp.ge.f32.partialorder %v1827, 0.0
      %vm1882 = vcmp.ge.f32.partialorder %v1832, 0.0
      %vm1883 = vcmp.ge.f32.partialorder %v1835, 0.0
      %vm1884 = vcmp.ge.f32.partialorder %v1840, 0.0
      %vm1885 = vcmp.ge.f32.partialorder %v1843, 0.0
      %vm1886 = vcmp.ge.f32.partialorder %v1848, 0.0
      %vm1887 = vcmp.ge.f32.partialorder %v1851, 0.0
      %vm1888 = vcmp.ge.f32.partialorder %v1856, 0.0
      %vm1889 = vcmp.ge.f32.partialorder %v1859, 0.0
      %vm1890 = vcmp.ge.f32.partialorder %v1864, 0.0
      %vm1891 = vcmp.ge.f32.partialorder %v1867, 0.0
      %vm1892 = vcmp.ge.f32.partialorder %v1872, 0.0
      %vm1893 = vcmp.ge.f32.partialorder %v1875, 0.0
      %v1894 = vmul.f32 %v1816, 0.01
      %v1895 = vmul.f32 %v1819, 0.01
      %v1896 = vmul.f32 %v1824, 0.01
      %v1897 = vmul.f32 %v1827, 0.01
      %v1898 = vmul.f32 %v1832, 0.01
      %v1899 = vmul.f32 %v1835, 0.01
      %v1900 = vmul.f32 %v1840, 0.01
      %v1901 = vmul.f32 %v1843, 0.01
      %v1902 = vmul.f32 %v1848, 0.01
      %v1903 = vmul.f32 %v1851, 0.01
      %v1904 = vmul.f32 %v1856, 0.01
      %v1905 = vmul.f32 %v1859, 0.01
      %v1906 = vmul.f32 %v1864, 0.01
      %v1907 = vmul.f32 %v1867, 0.01
      %v1908 = vmul.f32 %v1872, 0.01
      %v1909 = vmul.f32 %v1875, 0.01
      %v1910 = vsel %vm1878, %v1816, %v1894
      %v1911 = vsel %vm1879, %v1819, %v1895
      %v1912 = vsel %vm1880, %v1824, %v1896
      %v1913 = vsel %vm1881, %v1827, %v1897
      %v1914 = vsel %vm1882, %v1832, %v1898
      %v1915 = vsel %vm1883, %v1835, %v1899
      %v1916 = vsel %vm1884, %v1840, %v1900
      %v1917 = vsel %vm1885, %v1843, %v1901
      %v1918 = vsel %vm1886, %v1848, %v1902
      %v1919 = vsel %vm1887, %v1851, %v1903
      %v1920 = vsel %vm1888, %v1856, %v1904
      %v1921 = vsel %vm1889, %v1859, %v1905
      %v1922 = vsel %vm1890, %v1864, %v1906
      %v1923 = vsel %vm1891, %v1867, %v1907
      %v1924 = vsel %vm1892, %v1872, %v1908
      %v1925 = vsel %vm1893, %v1875, %v1909
      %v1926 = vpack.c.bf16 %v1911, %v1910
      %v1927 = vpack.c.bf16 %v1913, %v1912
      %v1928 = vpack.c.bf16 %v1915, %v1914
      %v1929 = vpack.c.bf16 %v1917, %v1916
      %v1930 = vpack.c.bf16 %v1919, %v1918
      %v1931 = vpack.c.bf16 %v1921, %v1920
      %v1932 = vpack.c.bf16 %v1923, %v1922
      %v1933 = vpack.c.bf16 %v1925, %v1924
      %v1935 = vshrl.u32 %v1926, 16
      %v1937 = vshll.u32 %v1926, 16
      %v1939 = vrot.slane %v1937, 1
      %v1940 = vor.u32 %v1935, %v1939
      %v1942 = vshll.u32 %v1927, 16
      %v1944 = vrot.slane %v1942, 1
      %v1945 = vsel %vm888, %v1940, %v1944
      %v1946 = vshrl.u32 %v1927, 16
      %v1948 = vor.u32 %v1946, %v1944
      %v1950 = vshll.u32 %v1928, 16
      %v1952 = vrot.slane %v1950, 1
      %v1953 = vsel %vm888, %v1948, %v1952
      %v1954 = vshrl.u32 %v1928, 16
      %v1956 = vor.u32 %v1954, %v1952
      %v1958 = vshll.u32 %v1929, 16
      %v1960 = vrot.slane %v1958, 1
      %v1961 = vsel %vm888, %v1956, %v1960
      %v1962 = vshrl.u32 %v1929, 16
      %v1964 = vor.u32 %v1962, %v1960
      %v1966 = vshll.u32 %v1930, 16
      %v1968 = vrot.slane %v1966, 1
      %v1969 = vsel %vm888, %v1964, %v1968
      %v1970 = vshrl.u32 %v1930, 16
      %v1972 = vor.u32 %v1970, %v1968
      %v1974 = vshll.u32 %v1931, 16
      %v1976 = vrot.slane %v1974, 1
      %v1977 = vsel %vm888, %v1972, %v1976
      %v1978 = vshrl.u32 %v1931, 16
      %v1980 = vor.u32 %v1978, %v1976
      %v1982 = vshll.u32 %v1932, 16
      %v1984 = vrot.slane %v1982, 1
      %v1985 = vsel %vm888, %v1980, %v1984
      %v1986 = vshrl.u32 %v1932, 16
      %v1988 = vor.u32 %v1986, %v1984
      %v1990 = vshll.u32 %v1933, 16
      %v1992 = vrot.slane %v1990, 1
      %v1993 = vsel %vm888, %v1988, %v1992
      %v1994 = vshrl.u32 %v1933, 16
      %v1996 = vor.u32 %v1994, %v1992
      %v1998 = vsel %vm954, %v1996, 0
      %v2007 = vrot.slane %v1926, 1
      %v2008 = vrot.slane %v1927, 1
      %v2009 = vsel %vm1555, %v2007, %v2008
      %v2010 = vrot.slane %v1928, 1
      %v2011 = vsel %vm1555, %v2008, %v2010
      %v2012 = vrot.slane %v1929, 1
      %v2013 = vsel %vm1555, %v2010, %v2012
      %v2014 = vrot.slane %v1930, 1
      %v2015 = vsel %vm1555, %v2012, %v2014
      %v2016 = vrot.slane %v1931, 1
      %v2017 = vsel %vm1555, %v2014, %v2016
      %v2018 = vrot.slane %v1932, 1
      %v2019 = vsel %vm1555, %v2016, %v2018
      %v2020 = vrot.slane %v1933, 1
      %v2021 = vsel %vm1555, %v2018, %v2020
      %v2023 = vsel %vm1571, %v2020, 0
      %vm2024 = vsmask.f32 6400
      %v2025 = vrot.slane %v1935, 1
      %v2026 = vrot.slane %v1937, 2
      %v2027 = vor.u32 %v2025, %v2026
      %v2028 = vrot.slane %v1946, 1
      %v2029 = vrot.slane %v1942, 2
      %v2030 = vor.u32 %v2028, %v2029
      %v2031 = vsel %vm2024, %v2027, %v2030
      %v2032 = vrot.slane %v1954, 1
      %v2033 = vrot.slane %v1950, 2
      %v2034 = vor.u32 %v2032, %v2033
      %v2035 = vsel %vm2024, %v2030, %v2034
      %v2036 = vrot.slane %v1962, 1
      %v2037 = vrot.slane %v1958, 2
      %v2038 = vor.u32 %v2036, %v2037
      %v2039 = vsel %vm2024, %v2034, %v2038
      %v2040 = vrot.slane %v1970, 1
      %v2041 = vrot.slane %v1966, 2
      %v2042 = vor.u32 %v2040, %v2041
      %v2043 = vsel %vm2024, %v2038, %v2042
      %v2044 = vrot.slane %v1978, 1
      %v2045 = vrot.slane %v1974, 2
      %v2046 = vor.u32 %v2044, %v2045
      %v2047 = vsel %vm2024, %v2042, %v2046
      %v2048 = vrot.slane %v1986, 1
      %v2049 = vrot.slane %v1982, 2
      %v2050 = vor.u32 %v2048, %v2049
      %v2051 = vsel %vm2024, %v2046, %v2050
      %v2052 = vrot.slane %v1994, 1
      %v2053 = vrot.slane %v1990, 2
      %v2054 = vor.u32 %v2052, %v2053
      %v2055 = vsel %vm2024, %v2050, %v2054
      %vm2057 = vmand %vm1555, %vm2024
      %v2058 = vsel %vm2057, %v2054, 0
      %2060 = vrot.lane.b32.xlu0 %v1945, 32
      %v2061 = vpop.permute.xlu0 %2060
      %2062 = vrot.lane.b32.xlu0 %v1953, 32
      %v2063 = vpop.permute.xlu0 %2062
      %2064 = vrot.lane.b32.xlu0 %v1961, 32
      %v2065 = vpop.permute.xlu0 %2064
      %2066 = vrot.lane.b32.xlu0 %v1969, 32
      %v2067 = vpop.permute.xlu0 %2066
      %2068 = vrot.lane.b32.xlu0 %v1977, 32
      %v2069 = vpop.permute.xlu0 %2068
      %2070 = vrot.lane.b32.xlu0 %v1985, 32
      %v2071 = vpop.permute.xlu0 %2070
      %2072 = vrot.lane.b32.xlu0 %v1993, 32
      %v2073 = vpop.permute.xlu0 %2072
      %2074 = vrot.lane.b32.xlu0 %v1998, 32
      %v2075 = vpop.permute.xlu0 %2074
      %2077 = vrot.lane.b32.xlu0 %v2009, 64
      %v2078 = vpop.permute.xlu0 %2077
      %2079 = vrot.lane.b32.xlu0 %v2011, 64
      %v2080 = vpop.permute.xlu0 %2079
      %2081 = vrot.lane.b32.xlu0 %v2013, 64
      %v2082 = vpop.permute.xlu0 %2081
      %2083 = vrot.lane.b32.xlu0 %v2015, 64
      %v2084 = vpop.permute.xlu0 %2083
      %2085 = vrot.lane.b32.xlu0 %v2017, 64
      %v2086 = vpop.permute.xlu0 %2085
      %2087 = vrot.lane.b32.xlu0 %v2019, 64
      %v2088 = vpop.permute.xlu0 %2087
      %2089 = vrot.lane.b32.xlu0 %v2021, 64
      %v2090 = vpop.permute.xlu0 %2089
      %2091 = vrot.lane.b32.xlu0 %v2023, 64
      %v2092 = vpop.permute.xlu0 %2091
      %2094 = vrot.lane.b32.xlu0 %v2031, 96
      %v2095 = vpop.permute.xlu0 %2094
      %2096 = vrot.lane.b32.xlu0 %v2035, 96
      %v2097 = vpop.permute.xlu0 %2096
      %2098 = vrot.lane.b32.xlu0 %v2039, 96
      %v2099 = vpop.permute.xlu0 %2098
      %2100 = vrot.lane.b32.xlu0 %v2043, 96
      %v2101 = vpop.permute.xlu0 %2100
      %2102 = vrot.lane.b32.xlu0 %v2047, 96
      %v2103 = vpop.permute.xlu0 %2102
      %2104 = vrot.lane.b32.xlu0 %v2051, 96
      %v2105 = vpop.permute.xlu0 %2104
      %2106 = vrot.lane.b32.xlu0 %v2055, 96
      %v2107 = vpop.permute.xlu0 %2106
      %2108 = vrot.lane.b32.xlu0 %v2058, 96
      %v2109 = vpop.permute.xlu0 %2108
      %v2111 = vsel %vm1666, %v1926, %v2061
      %v2113 = vsel %vm1666, %v1927, %v2063
      %v2115 = vsel %vm1666, %v1928, %v2065
      %v2117 = vsel %vm1666, %v1929, %v2067
      %v2119 = vsel %vm1666, %v1930, %v2069
      %v2121 = vsel %vm1666, %v1931, %v2071
      %v2123 = vsel %vm1666, %v1932, %v2073
      %v2125 = vsel %vm1666, %v1933, %v2075
      %v2127 = vsel %vm1700, %v2111, %v2078
      %v2129 = vsel %vm1700, %v2113, %v2080
      %v2131 = vsel %vm1700, %v2115, %v2082
      %v2133 = vsel %vm1700, %v2117, %v2084
      %v2135 = vsel %vm1700, %v2119, %v2086
      %v2137 = vsel %vm1700, %v2121, %v2088
      %v2139 = vsel %vm1700, %v2123, %v2090
      %v2141 = vsel %vm1700, %v2125, %v2092
      %vm2142 = vcmask 785408
      %v2144 = vsel %vm2142, %v2127, %v2095
      %v2147 = vsel %vm2142, %v2129, %v2097
      %v2150 = vsel %vm2142, %v2131, %v2099
      %v2153 = vsel %vm2142, %v2133, %v2101
      %v2156 = vsel %vm2142, %v2135, %v2103
      %v2159 = vsel %vm2142, %v2137, %v2105
      %v2162 = vsel %vm2142, %v2139, %v2107
      %v2165 = vsel %vm2142, %v2141, %v2109
      %v2167 = vld [vmem:[%s5] sm:$0xf]
      %v2168 = vld [vmem:[%s5 + $0x4] sm:$0xf]
      %v2169 = vld [vmem:[%s5 + $0x8] sm:$0xf]
      %v2170 = vld [vmem:[%s5 + $0xc] sm:$0xf]
      %v2171 = vld [vmem:[%s5 + $0x10] sm:$0xf]
      %v2172 = vld [vmem:[%s5 + $0x14] sm:$0xf]
      %v2173 = vld [vmem:[%s5 + $0x18] sm:$0xf]
      %v2174 = vld [vmem:[%s5 + $0x1c] sm:$0xf]
      %v2175 = vld [vmem:[%s5 + $0x20] sm:$0xf]
      %v2176 = vld [vmem:[%s5 + $0x24] sm:$0xf]
      %v2177 = vld [vmem:[%s5 + $0x28] sm:$0xf]
      %v2178 = vld [vmem:[%s5 + $0x2c] sm:$0xf]
      %v2179 = vld [vmem:[%s5 + $0x30] sm:$0xf]
      %v2180 = vld [vmem:[%s5 + $0x34] sm:$0xf]
      %v2181 = vld [vmem:[%s5 + $0x38] sm:$0xf]
      %v2182 = vld [vmem:[%s5 + $0x3c] sm:$0xf]
      %v2183 = vld [vmem:[%s6] sm:$0x1]
      %v2185 = vlaneseq
      %v2186 = vshrl.u32 %v2185, 7
      %v2187 = vsub.s32 0, %v2186
      %v2188 = vrot.slane %v2183, %v2187
      %v2206 = vunpack.c.l.b16 %v2167
      %v2207 = vunpack.c.l.b16 %v2168
      %v2208 = vunpack.c.l.b16 %v2169
      %v2209 = vunpack.c.l.b16 %v2170
      %v2210 = vunpack.c.l.b16 %v2171
      %v2211 = vunpack.c.l.b16 %v2172
      %v2212 = vunpack.c.l.b16 %v2173
      %v2213 = vunpack.c.l.b16 %v2174
      %v2214 = vunpack.c.l.b16 %v2175
      %v2215 = vunpack.c.l.b16 %v2176
      %v2216 = vunpack.c.l.b16 %v2177
      %v2217 = vunpack.c.l.b16 %v2178
      %v2218 = vunpack.c.l.b16 %v2179
      %v2219 = vunpack.c.l.b16 %v2180
      %v2220 = vunpack.c.l.b16 %v2181
      %v2221 = vunpack.c.l.b16 %v2182
      %v2222 = vpack.c.b16 %v2207, %v2206
      %v2223 = vpack.c.b16 %v2209, %v2208
      %v2224 = vpack.c.b16 %v2211, %v2210
      %v2225 = vpack.c.b16 %v2213, %v2212
      %v2226 = vpack.c.b16 %v2215, %v2214
      %v2227 = vpack.c.b16 %v2217, %v2216
      %v2228 = vpack.c.b16 %v2219, %v2218
      %v2229 = vpack.c.b16 %v2221, %v2220
      %2238 = vmatprep.subr.bf16.mxu0 0
      %2239 = vmatpush1.bf16.msra.mxu0 %v2229
      %2240 = vmatprep.subr.bf16.mxu0 0
      %2241 = vmatpush1.bf16.msra.mxu0 %v2228
      %2242 = vmatprep.subr.bf16.mxu0 0
      %2243 = vmatpush1.bf16.msra.mxu0 %v2227
      %2244 = vmatprep.subr.bf16.mxu0 0
      %2245 = vmatpush1.bf16.msra.mxu0 %v2226
      %2246 = vmatprep.subr.bf16.mxu0 0
      %2247 = vmatpush1.bf16.msra.mxu0 %v2225
      %2248 = vmatprep.subr.bf16.mxu0 0
      %2249 = vmatpush1.bf16.msra.mxu0 %v2224
      %2250 = vmatprep.subr.bf16.mxu0 0
      %2251 = vmatpush1.bf16.msra.mxu0 %v2223
      %2252 = vmatprep.subr.bf16.mxu0 0
      %2253 = vmatpush1.bf16.msra.mxu0 %v2222
      %2254 = vmatprep.subr.bf16.mxu0 0
      %2255 = vmatpush2.bf16.msra.mxu0 0
      %2256 = vmatprep.subr.bf16.mxu0 0
      %2257 = vmatpush2.bf16.msra.mxu0 0
      %2258 = vmatprep.subr.bf16.mxu0 0
      %2259 = vmatpush2.bf16.msra.mxu0 0
      %2260 = vmatprep.subr.bf16.mxu0 0
      %2261 = vmatpush2.bf16.msra.mxu0 0
      %2262 = vmatprep.subr.bf16.mxu0 0
      %2263 = vmatpush2.bf16.msra.mxu0 0
      %2264 = vmatprep.subr.bf16.mxu0 0
      %2265 = vmatpush2.bf16.msra.mxu0 0
      %2266 = vmatprep.subr.bf16.mxu0 0
      %2267 = vmatpush2.bf16.msra.mxu0 0
      %2268 = vmatprep.subr.bf16.mxu0 0
      %2269 = vmatpush2.bf16.msra.mxu0 0
      %2270 = vmatprep.mubr.bf16.mxu0 0
      %2271 = vmatmul.mubr.bf16.gmra.mxu0 %v2144
      %v2272 = vpop.f32.mrf.mxu0
      %v2273 = vadd.f32 %v2188, %v2272
      %v2274 = vpop.f32.mrf.mxu0
      %v2275 = vpop.f32.mrf.mxu0
      %v2276 = vadd.f32 %v2188, %v2275
      %v2277 = vpop.f32.mrf.mxu0
      %2278 = vmatprep.mubr.bf16.mxu0 0
      %2279 = vmatmul.mubr.bf16.gmra.mxu0 %v2147
      %v2280 = vpop.f32.mrf.mxu0
      %v2281 = vadd.f32 %v2188, %v2280
      %v2282 = vpop.f32.mrf.mxu0
      %v2283 = vpop.f32.mrf.mxu0
      %v2284 = vadd.f32 %v2188, %v2283
      %v2285 = vpop.f32.mrf.mxu0
      %2286 = vmatprep.mubr.bf16.mxu0 0
      %2287 = vmatmul.mubr.bf16.gmra.mxu0 %v2150
      %v2288 = vpop.f32.mrf.mxu0
      %v2289 = vadd.f32 %v2188, %v2288
      %v2290 = vpop.f32.mrf.mxu0
      %v2291 = vpop.f32.mrf.mxu0
      %v2292 = vadd.f32 %v2188, %v2291
      %v2293 = vpop.f32.mrf.mxu0
      %2294 = vmatprep.mubr.bf16.mxu0 0
      %2295 = vmatmul.mubr.bf16.gmra.mxu0 %v2153
      %v2296 = vpop.f32.mrf.mxu0
      %v2297 = vadd.f32 %v2188, %v2296
      %v2298 = vpop.f32.mrf.mxu0
      %v2299 = vpop.f32.mrf.mxu0
      %v2300 = vadd.f32 %v2188, %v2299
      %v2301 = vpop.f32.mrf.mxu0
      %2302 = vmatprep.mubr.bf16.mxu0 0
      %2303 = vmatmul.mubr.bf16.gmra.mxu0 %v2156
      %v2304 = vpop.f32.mrf.mxu0
      %v2305 = vadd.f32 %v2188, %v2304
      %v2306 = vpop.f32.mrf.mxu0
      %v2307 = vpop.f32.mrf.mxu0
      %v2308 = vadd.f32 %v2188, %v2307
      %v2309 = vpop.f32.mrf.mxu0
      %2310 = vmatprep.mubr.bf16.mxu0 0
      %2311 = vmatmul.mubr.bf16.gmra.mxu0 %v2159
      %v2312 = vpop.f32.mrf.mxu0
      %v2313 = vadd.f32 %v2188, %v2312
      %v2314 = vpop.f32.mrf.mxu0
      %v2315 = vpop.f32.mrf.mxu0
      %v2316 = vadd.f32 %v2188, %v2315
      %v2317 = vpop.f32.mrf.mxu0
      %2318 = vmatprep.mubr.bf16.mxu0 0
      %2319 = vmatmul.mubr.bf16.gmra.mxu0 %v2162
      %v2320 = vpop.f32.mrf.mxu0
      %v2321 = vadd.f32 %v2188, %v2320
      %v2322 = vpop.f32.mrf.mxu0
      %v2323 = vpop.f32.mrf.mxu0
      %v2324 = vadd.f32 %v2188, %v2323
      %v2325 = vpop.f32.mrf.mxu0
      %2326 = vmatprep.mubr.bf16.mxu0 0
      %2327 = vmatmul.mubr.bf16.gmra.mxu0 %v2165
      %v2328 = vpop.f32.mrf.mxu0
      %v2329 = vadd.f32 %v2188, %v2328
      %v2330 = vpop.f32.mrf.mxu0
      %v2331 = vpop.f32.mrf.mxu0
      %v2332 = vadd.f32 %v2188, %v2331
      %v2333 = vpop.f32.mrf.mxu0
      %2334 = vdwg.mxu0
      %vm2335 = vcmp.ge.f32.partialorder %v2273, 0.0
      %vm2336 = vcmp.ge.f32.partialorder %v2276, 0.0
      %vm2337 = vcmp.ge.f32.partialorder %v2281, 0.0
      %vm2338 = vcmp.ge.f32.partialorder %v2284, 0.0
      %vm2339 = vcmp.ge.f32.partialorder %v2289, 0.0
      %vm2340 = vcmp.ge.f32.partialorder %v2292, 0.0
      %vm2341 = vcmp.ge.f32.partialorder %v2297, 0.0
      %vm2342 = vcmp.ge.f32.partialorder %v2300, 0.0
      %vm2343 = vcmp.ge.f32.partialorder %v2305, 0.0
      %vm2344 = vcmp.ge.f32.partialorder %v2308, 0.0
      %vm2345 = vcmp.ge.f32.partialorder %v2313, 0.0
      %vm2346 = vcmp.ge.f32.partialorder %v2316, 0.0
      %vm2347 = vcmp.ge.f32.partialorder %v2321, 0.0
      %vm2348 = vcmp.ge.f32.partialorder %v2324, 0.0
      %vm2349 = vcmp.ge.f32.partialorder %v2329, 0.0
      %vm2350 = vcmp.ge.f32.partialorder %v2332, 0.0
      %v2351 = vmul.f32 %v2273, 0.01
      %v2352 = vmul.f32 %v2276, 0.01
      %v2353 = vmul.f32 %v2281, 0.01
      %v2354 = vmul.f32 %v2284, 0.01
      %v2355 = vmul.f32 %v2289, 0.01
      %v2356 = vmul.f32 %v2292, 0.01
      %v2357 = vmul.f32 %v2297, 0.01
      %v2358 = vmul.f32 %v2300, 0.01
      %v2359 = vmul.f32 %v2305, 0.01
      %v2360 = vmul.f32 %v2308, 0.01
      %v2361 = vmul.f32 %v2313, 0.01
      %v2362 = vmul.f32 %v2316, 0.01
      %v2363 = vmul.f32 %v2321, 0.01
      %v2364 = vmul.f32 %v2324, 0.01
      %v2365 = vmul.f32 %v2329, 0.01
      %v2366 = vmul.f32 %v2332, 0.01
      %v2367 = vsel %vm2335, %v2273, %v2351
      %v2368 = vsel %vm2336, %v2276, %v2352
      %v2369 = vsel %vm2337, %v2281, %v2353
      %v2370 = vsel %vm2338, %v2284, %v2354
      %v2371 = vsel %vm2339, %v2289, %v2355
      %v2372 = vsel %vm2340, %v2292, %v2356
      %v2373 = vsel %vm2341, %v2297, %v2357
      %v2374 = vsel %vm2342, %v2300, %v2358
      %v2375 = vsel %vm2343, %v2305, %v2359
      %v2376 = vsel %vm2344, %v2308, %v2360
      %v2377 = vsel %vm2345, %v2313, %v2361
      %v2378 = vsel %vm2346, %v2316, %v2362
      %v2379 = vsel %vm2347, %v2321, %v2363
      %v2380 = vsel %vm2348, %v2324, %v2364
      %v2381 = vsel %vm2349, %v2329, %v2365
      %v2382 = vsel %vm2350, %v2332, %v2366
      %v2383 = vpack.c.bf16 %v2368, %v2367
      %v2384 = vpack.c.bf16 %v2370, %v2369
      %v2385 = vpack.c.bf16 %v2372, %v2371
      %v2386 = vpack.c.bf16 %v2374, %v2373
      %v2387 = vpack.c.bf16 %v2376, %v2375
      %v2388 = vpack.c.bf16 %v2378, %v2377
      %v2389 = vpack.c.bf16 %v2380, %v2379
      %v2390 = vpack.c.bf16 %v2382, %v2381
      %v2392 = vshrl.u32 %v2383, 16
      %v2394 = vshll.u32 %v2383, 16
      %v2396 = vrot.slane %v2394, 1
      %v2397 = vor.u32 %v2392, %v2396
      %v2399 = vshll.u32 %v2384, 16
      %v2401 = vrot.slane %v2399, 1
      %v2402 = vsel %vm888, %v2397, %v2401
      %v2403 = vshrl.u32 %v2384, 16
      %v2405 = vor.u32 %v2403, %v2401
      %v2407 = vshll.u32 %v2385, 16
      %v2409 = vrot.slane %v2407, 1
      %v2410 = vsel %vm888, %v2405, %v2409
      %v2411 = vshrl.u32 %v2385, 16
      %v2413 = vor.u32 %v2411, %v2409
      %v2415 = vshll.u32 %v2386, 16
      %v2417 = vrot.slane %v2415, 1
      %v2418 = vsel %vm888, %v2413, %v2417
      %v2419 = vshrl.u32 %v2386, 16
      %v2421 = vor.u32 %v2419, %v2417
      %v2423 = vshll.u32 %v2387, 16
      %v2425 = vrot.slane %v2423, 1
      %v2426 = vsel %vm888, %v2421, %v2425
      %v2427 = vshrl.u32 %v2387, 16
      %v2429 = vor.u32 %v2427, %v2425
      %v2431 = vshll.u32 %v2388, 16
      %v2433 = vrot.slane %v2431, 1
      %v2434 = vsel %vm888, %v2429, %v2433
      %v2435 = vshrl.u32 %v2388, 16
      %v2437 = vor.u32 %v2435, %v2433
      %v2439 = vshll.u32 %v2389, 16
      %v2441 = vrot.slane %v2439, 1
      %v2442 = vsel %vm888, %v2437, %v2441
      %v2443 = vshrl.u32 %v2389, 16
      %v2445 = vor.u32 %v2443, %v2441
      %v2447 = vshll.u32 %v2390, 16
      %v2449 = vrot.slane %v2447, 1
      %v2450 = vsel %vm888, %v2445, %v2449
      %v2451 = vshrl.u32 %v2390, 16
      %v2453 = vor.u32 %v2451, %v2449
      %v2455 = vsel %vm954, %v2453, 0
      %v2464 = vrot.slane %v2383, 1
      %v2465 = vrot.slane %v2384, 1
      %v2466 = vsel %vm1555, %v2464, %v2465
      %v2467 = vrot.slane %v2385, 1
      %v2468 = vsel %vm1555, %v2465, %v2467
      %v2469 = vrot.slane %v2386, 1
      %v2470 = vsel %vm1555, %v2467, %v2469
      %v2471 = vrot.slane %v2387, 1
      %v2472 = vsel %vm1555, %v2469, %v2471
      %v2473 = vrot.slane %v2388, 1
      %v2474 = vsel %vm1555, %v2471, %v2473
      %v2475 = vrot.slane %v2389, 1
      %v2476 = vsel %vm1555, %v2473, %v2475
      %v2477 = vrot.slane %v2390, 1
      %v2478 = vsel %vm1555, %v2475, %v2477
      %v2480 = vsel %vm1571, %v2477, 0
      %v2481 = vrot.slane %v2392, 1
      %v2482 = vrot.slane %v2394, 2
      %v2483 = vor.u32 %v2481, %v2482
      %v2484 = vrot.slane %v2403, 1
      %v2485 = vrot.slane %v2399, 2
      %v2486 = vor.u32 %v2484, %v2485
      %v2487 = vsel %vm2024, %v2483, %v2486
      %v2488 = vrot.slane %v2411, 1
      %v2489 = vrot.slane %v2407, 2
      %v2490 = vor.u32 %v2488, %v2489
      %v2491 = vsel %vm2024, %v2486, %v2490
      %v2492 = vrot.slane %v2419, 1
      %v2493 = vrot.slane %v2415, 2
      %v2494 = vor.u32 %v2492, %v2493
      %v2495 = vsel %vm2024, %v2490, %v2494
      %v2496 = vrot.slane %v2427, 1
      %v2497 = vrot.slane %v2423, 2
      %v2498 = vor.u32 %v2496, %v2497
      %v2499 = vsel %vm2024, %v2494, %v2498
      %v2500 = vrot.slane %v2435, 1
      %v2501 = vrot.slane %v2431, 2
      %v2502 = vor.u32 %v2500, %v2501
      %v2503 = vsel %vm2024, %v2498, %v2502
      %v2504 = vrot.slane %v2443, 1
      %v2505 = vrot.slane %v2439, 2
      %v2506 = vor.u32 %v2504, %v2505
      %v2507 = vsel %vm2024, %v2502, %v2506
      %v2508 = vrot.slane %v2451, 1
      %v2509 = vrot.slane %v2447, 2
      %v2510 = vor.u32 %v2508, %v2509
      %v2511 = vsel %vm2024, %v2506, %v2510
      %v2513 = vsel %vm2057, %v2510, 0
      %2515 = vrot.lane.b32.xlu0 %v2402, 64
      %v2516 = vpop.permute.xlu0 %2515
      %2517 = vrot.lane.b32.xlu0 %v2410, 64
      %v2518 = vpop.permute.xlu0 %2517
      %2519 = vrot.lane.b32.xlu0 %v2418, 64
      %v2520 = vpop.permute.xlu0 %2519
      %2521 = vrot.lane.b32.xlu0 %v2426, 64
      %v2522 = vpop.permute.xlu0 %2521
      %2523 = vrot.lane.b32.xlu0 %v2434, 64
      %v2524 = vpop.permute.xlu0 %2523
      %2525 = vrot.lane.b32.xlu0 %v2442, 64
      %v2526 = vpop.permute.xlu0 %2525
      %2527 = vrot.lane.b32.xlu0 %v2450, 64
      %v2528 = vpop.permute.xlu0 %2527
      %2529 = vrot.lane.b32.xlu0 %v2455, 64
      %v2530 = vpop.permute.xlu0 %2529
      %2532 = vrot.lane.b32.xlu0 %v2487, 64
      %v2533 = vpop.permute.xlu0 %2532
      %2534 = vrot.lane.b32.xlu0 %v2491, 64
      %v2535 = vpop.permute.xlu0 %2534
      %2536 = vrot.lane.b32.xlu0 %v2495, 64
      %v2537 = vpop.permute.xlu0 %2536
      %2538 = vrot.lane.b32.xlu0 %v2499, 64
      %v2539 = vpop.permute.xlu0 %2538
      %2540 = vrot.lane.b32.xlu0 %v2503, 64
      %v2541 = vpop.permute.xlu0 %2540
      %2542 = vrot.lane.b32.xlu0 %v2507, 64
      %v2543 = vpop.permute.xlu0 %2542
      %2544 = vrot.lane.b32.xlu0 %v2511, 64
      %v2545 = vpop.permute.xlu0 %2544
      %2546 = vrot.lane.b32.xlu0 %v2513, 64
      %v2547 = vpop.permute.xlu0 %2546
      %v2549 = vsel %vm1700, %v2383, %v2516
      %v2552 = vsel %vm1700, %v2384, %v2518
      %v2555 = vsel %vm1700, %v2385, %v2520
      %v2558 = vsel %vm1700, %v2386, %v2522
      %v2561 = vsel %vm1700, %v2387, %v2524
      %v2564 = vsel %vm1700, %v2388, %v2526
      %v2567 = vsel %vm1700, %v2389, %v2528
      %v2570 = vsel %vm1700, %v2390, %v2530
      %v2574 = vsel %vm1700, %v2466, %v2533
      %v2578 = vsel %vm1700, %v2468, %v2535
      %v2582 = vsel %vm1700, %v2470, %v2537
      %v2586 = vsel %vm1700, %v2472, %v2539
      %v2590 = vsel %vm1700, %v2474, %v2541
      %v2594 = vsel %vm1700, %v2476, %v2543
      %v2598 = vsel %vm1700, %v2478, %v2545
      %v2601 = vsel %vm1700, %v2480, %v2547
      %v2603 = vld [vmem:[%s7] sm:$0xf]
      %v2604 = vld [vmem:[%s7 + $0x4] sm:$0xf]
      %v2605 = vld [vmem:[%s7 + $0x8] sm:$0xf]
      %v2606 = vld [vmem:[%s7 + $0xc] sm:$0xf]
      %v2607 = vld [vmem:[%s7 + $0x10] sm:$0xf]
      %v2608 = vld [vmem:[%s7 + $0x14] sm:$0xf]
      %v2609 = vld [vmem:[%s7 + $0x18] sm:$0xf]
      %v2610 = vld [vmem:[%s7 + $0x1c] sm:$0xf]
      %v2611 = vld [vmem:[%s7 + $0x20] sm:$0xf]
      %v2612 = vld [vmem:[%s7 + $0x24] sm:$0xf]
      %v2613 = vld [vmem:[%s7 + $0x28] sm:$0xf]
      %v2614 = vld [vmem:[%s7 + $0x2c] sm:$0xf]
      %v2615 = vld [vmem:[%s7 + $0x30] sm:$0xf]
      %v2616 = vld [vmem:[%s7 + $0x34] sm:$0xf]
      %v2617 = vld [vmem:[%s7 + $0x38] sm:$0xf]
      %v2618 = vld [vmem:[%s7 + $0x3c] sm:$0xf]
      %v2619 = vld [vmem:[%s7 + $0x40] sm:$0xf]
      %v2620 = vld [vmem:[%s7 + $0x44] sm:$0xf]
      %v2621 = vld [vmem:[%s7 + $0x48] sm:$0xf]
      %v2622 = vld [vmem:[%s7 + $0x4c] sm:$0xf]
      %v2623 = vld [vmem:[%s7 + $0x50] sm:$0xf]
      %v2624 = vld [vmem:[%s7 + $0x54] sm:$0xf]
      %v2625 = vld [vmem:[%s7 + $0x58] sm:$0xf]
      %v2626 = vld [vmem:[%s7 + $0x5c] sm:$0xf]
      %v2627 = vld [vmem:[%s7 + $0x60] sm:$0xf]
      %v2628 = vld [vmem:[%s7 + $0x64] sm:$0xf]
      %v2629 = vld [vmem:[%s7 + $0x68] sm:$0xf]
      %v2630 = vld [vmem:[%s7 + $0x6c] sm:$0xf]
      %v2631 = vld [vmem:[%s7 + $0x70] sm:$0xf]
      %v2632 = vld [vmem:[%s7 + $0x74] sm:$0xf]
      %v2633 = vld [vmem:[%s7 + $0x78] sm:$0xf]
      %v2634 = vld [vmem:[%s7 + $0x7c] sm:$0xf]
      %v2635 = vld [vmem:[%s8] sm:$0x1]
      %v2637 = vlaneseq
      %v2638 = vshrl.u32 %v2637, 7
      %v2639 = vsub.s32 0, %v2638
      %v2640 = vrot.slane %v2635, %v2639
      %v2674 = vunpack.c.l.b16 %v2603
      %v2675 = vunpack.c.l.b16 %v2604
      %v2676 = vunpack.c.l.b16 %v2605
      %v2677 = vunpack.c.l.b16 %v2606
      %v2678 = vunpack.c.l.b16 %v2607
      %v2679 = vunpack.c.l.b16 %v2608
      %v2680 = vunpack.c.l.b16 %v2609
      %v2681 = vunpack.c.l.b16 %v2610
      %v2682 = vunpack.c.l.b16 %v2611
      %v2683 = vunpack.c.l.b16 %v2612
      %v2684 = vunpack.c.l.b16 %v2613
      %v2685 = vunpack.c.l.b16 %v2614
      %v2686 = vunpack.c.l.b16 %v2615
      %v2687 = vunpack.c.l.b16 %v2616
      %v2688 = vunpack.c.l.b16 %v2617
      %v2689 = vunpack.c.l.b16 %v2618
      %v2690 = vunpack.c.l.b16 %v2619
      %v2691 = vunpack.c.l.b16 %v2620
      %v2692 = vunpack.c.l.b16 %v2621
      %v2693 = vunpack.c.l.b16 %v2622
      %v2694 = vunpack.c.l.b16 %v2623
      %v2695 = vunpack.c.l.b16 %v2624
      %v2696 = vunpack.c.l.b16 %v2625
      %v2697 = vunpack.c.l.b16 %v2626
      %v2698 = vunpack.c.l.b16 %v2627
      %v2699 = vunpack.c.l.b16 %v2628
      %v2700 = vunpack.c.l.b16 %v2629
      %v2701 = vunpack.c.l.b16 %v2630
      %v2702 = vunpack.c.l.b16 %v2631
      %v2703 = vunpack.c.l.b16 %v2632
      %v2704 = vunpack.c.l.b16 %v2633
      %v2705 = vunpack.c.l.b16 %v2634
      %v2706 = vpack.c.b16 %v2675, %v2674
      %v2707 = vpack.c.b16 %v2677, %v2676
      %v2708 = vpack.c.b16 %v2679, %v2678
      %v2709 = vpack.c.b16 %v2681, %v2680
      %v2710 = vpack.c.b16 %v2683, %v2682
      %v2711 = vpack.c.b16 %v2685, %v2684
      %v2712 = vpack.c.b16 %v2687, %v2686
      %v2713 = vpack.c.b16 %v2689, %v2688
      %v2714 = vpack.c.b16 %v2691, %v2690
      %v2715 = vpack.c.b16 %v2693, %v2692
      %v2716 = vpack.c.b16 %v2695, %v2694
      %v2717 = vpack.c.b16 %v2697, %v2696
      %v2718 = vpack.c.b16 %v2699, %v2698
      %v2719 = vpack.c.b16 %v2701, %v2700
      %v2720 = vpack.c.b16 %v2703, %v2702
      %v2721 = vpack.c.b16 %v2705, %v2704
      %2738 = vmatprep.subr.bf16.mxu0 0
      %2739 = vmatpush1.bf16.msra.mxu0 %v2713
      %2740 = vmatprep.subr.bf16.mxu0 0
      %2741 = vmatpush1.bf16.msra.mxu0 %v2712
      %2742 = vmatprep.subr.bf16.mxu0 0
      %2743 = vmatpush1.bf16.msra.mxu0 %v2711
      %2744 = vmatprep.subr.bf16.mxu0 0
      %2745 = vmatpush1.bf16.msra.mxu0 %v2710
      %2746 = vmatprep.subr.bf16.mxu0 0
      %2747 = vmatpush1.bf16.msra.mxu0 %v2709
      %2748 = vmatprep.subr.bf16.mxu0 0
      %2749 = vmatpush1.bf16.msra.mxu0 %v2708
      %2750 = vmatprep.subr.bf16.mxu0 0
      %2751 = vmatpush1.bf16.msra.mxu0 %v2707
      %2752 = vmatprep.subr.bf16.mxu0 0
      %2753 = vmatpush1.bf16.msra.mxu0 %v2706
      %2754 = vmatprep.subr.bf16.mxu0 0
      %2755 = vmatpush2.bf16.msra.mxu0 %v2721
      %2756 = vmatprep.subr.bf16.mxu0 0
      %2757 = vmatpush2.bf16.msra.mxu0 %v2720
      %2758 = vmatprep.subr.bf16.mxu0 0
      %2759 = vmatpush2.bf16.msra.mxu0 %v2719
      %2760 = vmatprep.subr.bf16.mxu0 0
      %2761 = vmatpush2.bf16.msra.mxu0 %v2718
      %2762 = vmatprep.subr.bf16.mxu0 0
      %2763 = vmatpush2.bf16.msra.mxu0 %v2717
      %2764 = vmatprep.subr.bf16.mxu0 0
      %2765 = vmatpush2.bf16.msra.mxu0 %v2716
      %2766 = vmatprep.subr.bf16.mxu0 0
      %2767 = vmatpush2.bf16.msra.mxu0 %v2715
      %2768 = vmatprep.subr.bf16.mxu0 0
      %2769 = vmatpush2.bf16.msra.mxu0 %v2714
      %2770 = vmatprep.mubr.bf16.mxu0 %v2574
      %2771 = vmatmul.mubr.bf16.gmra.mxu0 %v2549
      %v2772 = vpop.f32.mrf.mxu0
      %v2773 = vadd.f32 %v2640, %v2772
      %v2774 = vpop.f32.mrf.mxu0
      %v2775 = vpop.f32.mrf.mxu0
      %v2776 = vadd.f32 %v2640, %v2775
      %v2777 = vpop.f32.mrf.mxu0
      %2778 = vmatprep.mubr.bf16.mxu0 %v2578
      %2779 = vmatmul.mubr.bf16.gmra.mxu0 %v2552
      %v2780 = vpop.f32.mrf.mxu0
      %v2781 = vadd.f32 %v2640, %v2780
      %v2782 = vpop.f32.mrf.mxu0
      %v2783 = vpop.f32.mrf.mxu0
      %v2784 = vadd.f32 %v2640, %v2783
      %v2785 = vpop.f32.mrf.mxu0
      %2786 = vmatprep.mubr.bf16.mxu0 %v2582
      %2787 = vmatmul.mubr.bf16.gmra.mxu0 %v2555
      %v2788 = vpop.f32.mrf.mxu0
      %v2789 = vadd.f32 %v2640, %v2788
      %v2790 = vpop.f32.mrf.mxu0
      %v2791 = vpop.f32.mrf.mxu0
      %v2792 = vadd.f32 %v2640, %v2791
      %v2793 = vpop.f32.mrf.mxu0
      %2794 = vmatprep.mubr.bf16.mxu0 %v2586
      %2795 = vmatmul.mubr.bf16.gmra.mxu0 %v2558
      %v2796 = vpop.f32.mrf.mxu0
      %v2797 = vadd.f32 %v2640, %v2796
      %v2798 = vpop.f32.mrf.mxu0
      %v2799 = vpop.f32.mrf.mxu0
      %v2800 = vadd.f32 %v2640, %v2799
      %v2801 = vpop.f32.mrf.mxu0
      %2802 = vmatprep.mubr.bf16.mxu0 %v2590
      %2803 = vmatmul.mubr.bf16.gmra.mxu0 %v2561
      %v2804 = vpop.f32.mrf.mxu0
      %v2805 = vadd.f32 %v2640, %v2804
      %v2806 = vpop.f32.mrf.mxu0
      %v2807 = vpop.f32.mrf.mxu0
      %v2808 = vadd.f32 %v2640, %v2807
      %v2809 = vpop.f32.mrf.mxu0
      %2810 = vmatprep.mubr.bf16.mxu0 %v2594
      %2811 = vmatmul.mubr.bf16.gmra.mxu0 %v2564
      %v2812 = vpop.f32.mrf.mxu0
      %v2813 = vadd.f32 %v2640, %v2812
      %v2814 = vpop.f32.mrf.mxu0
      %v2815 = vpop.f32.mrf.mxu0
      %v2816 = vadd.f32 %v2640, %v2815
      %v2817 = vpop.f32.mrf.mxu0
      %2818 = vmatprep.mubr.bf16.mxu0 %v2598
      %2819 = vmatmul.mubr.bf16.gmra.mxu0 %v2567
      %v2820 = vpop.f32.mrf.mxu0
      %v2821 = vadd.f32 %v2640, %v2820
      %v2822 = vpop.f32.mrf.mxu0
      %v2823 = vpop.f32.mrf.mxu0
      %v2824 = vadd.f32 %v2640, %v2823
      %v2825 = vpop.f32.mrf.mxu0
      %2826 = vmatprep.mubr.bf16.mxu0 %v2601
      %2827 = vmatmul.mubr.bf16.gmra.mxu0 %v2570
      %v2828 = vpop.f32.mrf.mxu0
      %v2829 = vadd.f32 %v2640, %v2828
      %v2830 = vpop.f32.mrf.mxu0
      %v2831 = vpop.f32.mrf.mxu0
      %v2832 = vadd.f32 %v2640, %v2831
      %v2833 = vpop.f32.mrf.mxu0
      %2834 = vdwg.mxu0
      %vm2835 = vcmp.ge.f32.partialorder %v2773, 0.0
      %vm2836 = vcmp.ge.f32.partialorder %v2776, 0.0
      %vm2837 = vcmp.ge.f32.partialorder %v2781, 0.0
      %vm2838 = vcmp.ge.f32.partialorder %v2784, 0.0
      %vm2839 = vcmp.ge.f32.partialorder %v2789, 0.0
      %vm2840 = vcmp.ge.f32.partialorder %v2792, 0.0
      %vm2841 = vcmp.ge.f32.partialorder %v2797, 0.0
      %vm2842 = vcmp.ge.f32.partialorder %v2800, 0.0
      %vm2843 = vcmp.ge.f32.partialorder %v2805, 0.0
      %vm2844 = vcmp.ge.f32.partialorder %v2808, 0.0
      %vm2845 = vcmp.ge.f32.partialorder %v2813, 0.0
      %vm2846 = vcmp.ge.f32.partialorder %v2816, 0.0
      %vm2847 = vcmp.ge.f32.partialorder %v2821, 0.0
      %vm2848 = vcmp.ge.f32.partialorder %v2824, 0.0
      %vm2849 = vcmp.ge.f32.partialorder %v2829, 0.0
      %vm2850 = vcmp.ge.f32.partialorder %v2832, 0.0
      %v2851 = vmul.f32 %v2773, 0.01
      %v2852 = vmul.f32 %v2776, 0.01
      %v2853 = vmul.f32 %v2781, 0.01
      %v2854 = vmul.f32 %v2784, 0.01
      %v2855 = vmul.f32 %v2789, 0.01
      %v2856 = vmul.f32 %v2792, 0.01
      %v2857 = vmul.f32 %v2797, 0.01
      %v2858 = vmul.f32 %v2800, 0.01
      %v2859 = vmul.f32 %v2805, 0.01
      %v2860 = vmul.f32 %v2808, 0.01
      %v2861 = vmul.f32 %v2813, 0.01
      %v2862 = vmul.f32 %v2816, 0.01
      %v2863 = vmul.f32 %v2821, 0.01
      %v2864 = vmul.f32 %v2824, 0.01
      %v2865 = vmul.f32 %v2829, 0.01
      %v2866 = vmul.f32 %v2832, 0.01
      %v2867 = vsel %vm2835, %v2773, %v2851
      %v2868 = vsel %vm2836, %v2776, %v2852
      %v2869 = vsel %vm2837, %v2781, %v2853
      %v2870 = vsel %vm2838, %v2784, %v2854
      %v2871 = vsel %vm2839, %v2789, %v2855
      %v2872 = vsel %vm2840, %v2792, %v2856
      %v2873 = vsel %vm2841, %v2797, %v2857
      %v2874 = vsel %vm2842, %v2800, %v2858
      %v2875 = vsel %vm2843, %v2805, %v2859
      %v2876 = vsel %vm2844, %v2808, %v2860
      %v2877 = vsel %vm2845, %v2813, %v2861
      %v2878 = vsel %vm2846, %v2816, %v2862
      %v2879 = vsel %vm2847, %v2821, %v2863
      %v2880 = vsel %vm2848, %v2824, %v2864
      %v2881 = vsel %vm2849, %v2829, %v2865
      %v2882 = vsel %vm2850, %v2832, %v2866
      %2883 = vst [vmem:[%s652] sm:$0xff] %v2867
      %2884 = vst [vmem:[%s652 + $0x8] sm:$0xff] %v2868
      %2885 = vst [vmem:[%s652 + $0x10] sm:$0xff] %v2869
      %2886 = vst [vmem:[%s652 + $0x18] sm:$0xff] %v2870
      %2887 = vst [vmem:[%s652 + $0x20] sm:$0xff] %v2871
      %2888 = vst [vmem:[%s652 + $0x28] sm:$0xff] %v2872
      %2889 = vst [vmem:[%s652 + $0x30] sm:$0xff] %v2873
      %2890 = vst [vmem:[%s652 + $0x38] sm:$0xff] %v2874
      %2891 = vst [vmem:[%s652 + $0x40] sm:$0xff] %v2875
      %2892 = vst [vmem:[%s652 + $0x48] sm:$0xff] %v2876
      %2893 = vst [vmem:[%s652 + $0x50] sm:$0xff] %v2877
      %2894 = vst [vmem:[%s652 + $0x58] sm:$0xff] %v2878
      %2895 = vst [vmem:[%s652 + $0x60] sm:$0xff] %v2879
      %2896 = vst [vmem:[%s652 + $0x68] sm:$0xff] %v2880
      %2897 = vst [vmem:[%s652 + $0x70] sm:$0xff] %v2881
      %2898 = vst [vmem:[%s652 + $0x78] sm:$0xff] %v2882
      %vm2899 = vcmp.lt.s32.totalorder %v848, 7
      %vm2900 = vcmp.lt.s32.totalorder %v849, 7
      %vm2901 = vcmp.lt.s32.totalorder %v850, 7
      %vm2902 = vcmp.lt.s32.totalorder %v851, 7
      %vm2903 = vcmp.lt.s32.totalorder %v852, 7
      %vm2904 = vcmp.lt.s32.totalorder %v853, 7
      %vm2905 = vcmp.lt.s32.totalorder %v854, 7
      %vm2906 = vcmp.lt.s32.totalorder %v855, 7
      %vm2907 = vcmp.lt.s32.totalorder %v856, 7
      %vm2908 = vcmp.lt.s32.totalorder %v857, 7
      %vm2909 = vcmp.lt.s32.totalorder %v858, 7
      %vm2910 = vcmp.lt.s32.totalorder %v859, 7
      %vm2911 = vcmp.lt.s32.totalorder %v860, 7
      %vm2912 = vcmp.lt.s32.totalorder %v861, 7
      %vm2913 = vcmp.lt.s32.totalorder %v862, 7
      %vm2914 = vcmp.lt.s32.totalorder %v863, 7
      %v2915 = vsel %vm2899, 1, 0
      %v2916 = vsel %vm2900, 1, 0
      %v2917 = vsel %vm2901, 1, 0
      %v2918 = vsel %vm2902, 1, 0
      %v2919 = vsel %vm2903, 1, 0
      %v2920 = vsel %vm2904, 1, 0
      %v2921 = vsel %vm2905, 1, 0
      %v2922 = vsel %vm2906, 1, 0
      %v2923 = vsel %vm2907, 1, 0
      %v2924 = vsel %vm2908, 1, 0
      %v2925 = vsel %vm2909, 1, 0
      %v2926 = vsel %vm2910, 1, 0
      %v2927 = vsel %vm2911, 1, 0
      %v2928 = vsel %vm2912, 1, 0
      %v2929 = vsel %vm2913, 1, 0
      %v2930 = vsel %vm2914, 1, 0
      %vm2931 = vcmp.eq.s32.totalorder %v2915, 1
      %vm2932 = vcmp.eq.s32.totalorder %v2916, 1
      %vm2933 = vcmp.eq.s32.totalorder %v2917, 1
      %vm2934 = vcmp.eq.s32.totalorder %v2918, 1
      %vm2935 = vcmp.eq.s32.totalorder %v2919, 1
      %vm2936 = vcmp.eq.s32.totalorder %v2920, 1
      %vm2937 = vcmp.eq.s32.totalorder %v2921, 1
      %vm2938 = vcmp.eq.s32.totalorder %v2922, 1
      %vm2939 = vcmp.eq.s32.totalorder %v2923, 1
      %vm2940 = vcmp.eq.s32.totalorder %v2924, 1
      %vm2941 = vcmp.eq.s32.totalorder %v2925, 1
      %vm2942 = vcmp.eq.s32.totalorder %v2926, 1
      %vm2943 = vcmp.eq.s32.totalorder %v2927, 1
      %vm2944 = vcmp.eq.s32.totalorder %v2928, 1
      %vm2945 = vcmp.eq.s32.totalorder %v2929, 1
      %vm2946 = vcmp.eq.s32.totalorder %v2930, 1
      %v2947 = vsel %vm2931, %v2867, 0.0
      %v2948 = vsel %vm2932, %v2868, 0.0
      %v2949 = vsel %vm2933, %v2869, 0.0
      %v2950 = vsel %vm2934, %v2870, 0.0
      %v2951 = vsel %vm2935, %v2871, 0.0
      %v2952 = vsel %vm2936, %v2872, 0.0
      %v2953 = vsel %vm2937, %v2873, 0.0
      %v2954 = vsel %vm2938, %v2874, 0.0
      %v2955 = vsel %vm2939, %v2875, 0.0
      %v2956 = vsel %vm2940, %v2876, 0.0
      %v2957 = vsel %vm2941, %v2877, 0.0
      %v2958 = vsel %vm2942, %v2878, 0.0
      %v2959 = vsel %vm2943, %v2879, 0.0
      %v2960 = vsel %vm2944, %v2880, 0.0
      %v2961 = vsel %vm2945, %v2881, 0.0
      %v2962 = vsel %vm2946, %v2882, 0.0
      %v2963 = vpack.c.bf16 %v2948, %v2947
      %v2964 = vpack.c.bf16 %v2950, %v2949
      %v2965 = vpack.c.bf16 %v2952, %v2951
      %v2966 = vpack.c.bf16 %v2954, %v2953
      %v2967 = vpack.c.bf16 %v2956, %v2955
      %v2968 = vpack.c.bf16 %v2958, %v2957
      %v2969 = vpack.c.bf16 %v2960, %v2959
      %v2970 = vpack.c.bf16 %v2962, %v2961
      %vm2971 = vsmask.f32 256
      %v2973 = vshrl.u32 %v2963, 16
      %v2975 = vrot.slane %v2973, 7
      %v2976 = vshll.u32 %v2963, 16
      %v2978 = vor.u32 %v2975, %v2976
      %v2980 = vshrl.u32 %v2964, 16
      %v2982 = vrot.slane %v2980, 7
      %v2983 = vshll.u32 %v2964, 16
      %v2985 = vor.u32 %v2982, %v2983
      %v2986 = vsel %vm2971, %v2975, %v2985
      %v2988 = vshrl.u32 %v2965, 16
      %v2990 = vrot.slane %v2988, 7
      %v2991 = vshll.u32 %v2965, 16
      %v2993 = vor.u32 %v2990, %v2991
      %v2994 = vsel %vm2971, %v2982, %v2993
      %v2996 = vshrl.u32 %v2966, 16
      %v2998 = vrot.slane %v2996, 7
      %v2999 = vshll.u32 %v2966, 16
      %v3001 = vor.u32 %v2998, %v2999
      %v3002 = vsel %vm2971, %v2990, %v3001
      %v3004 = vshrl.u32 %v2967, 16
      %v3006 = vrot.slane %v3004, 7
      %v3007 = vshll.u32 %v2967, 16
      %v3009 = vor.u32 %v3006, %v3007
      %v3010 = vsel %vm2971, %v2998, %v3009
      %v3012 = vshrl.u32 %v2968, 16
      %v3014 = vrot.slane %v3012, 7
      %v3015 = vshll.u32 %v2968, 16
      %v3017 = vor.u32 %v3014, %v3015
      %v3018 = vsel %vm2971, %v3006, %v3017
      %v3020 = vshrl.u32 %v2969, 16
      %v3022 = vrot.slane %v3020, 7
      %v3023 = vshll.u32 %v2969, 16
      %v3025 = vor.u32 %v3022, %v3023
      %v3026 = vsel %vm2971, %v3014, %v3025
      %v3028 = vshrl.u32 %v2970, 16
      %v3030 = vrot.slane %v3028, 7
      %v3031 = vshll.u32 %v2970, 16
      %v3033 = vor.u32 %v3030, %v3031
      %v3034 = vsel %vm2971, %v3022, %v3033
      %vm3043 = vcmask 1040384
      %vm3044 = vmand %vm3043, %vm2971
      %v3045 = vsel %vm3044, 0, %v2978
      %v3054 = vrot.slane %v2963, 7
      %v3055 = vrot.slane %v2964, 7
      %v3056 = vsel %vm3043, %v3054, %v3055
      %v3057 = vrot.slane %v2965, 7
      %v3058 = vsel %vm3043, %v3055, %v3057
      %v3059 = vrot.slane %v2966, 7
      %v3060 = vsel %vm3043, %v3057, %v3059
      %v3061 = vrot.slane %v2967, 7
      %v3062 = vsel %vm3043, %v3059, %v3061
      %v3063 = vrot.slane %v2968, 7
      %v3064 = vsel %vm3043, %v3061, %v3063
      %v3065 = vrot.slane %v2969, 7
      %v3066 = vsel %vm3043, %v3063, %v3065
      %v3067 = vrot.slane %v2970, 7
      %v3068 = vsel %vm3043, %v3065, %v3067
      %vm3076 = vcmask 1040384
      %v3078 = vsel %vm3076, 0, %v3054
      %vm3080 = vsmask.f32 1280
      %v3081 = vrot.slane %v2973, 6
      %v3082 = vrot.slane %v2976, 7
      %v3083 = vor.u32 %v3081, %v3082
      %v3084 = vrot.slane %v2980, 6
      %v3085 = vrot.slane %v2983, 7
      %v3086 = vor.u32 %v3084, %v3085
      %v3087 = vsel %vm3080, %v3083, %v3086
      %v3088 = vrot.slane %v2988, 6
      %v3089 = vrot.slane %v2991, 7
      %v3090 = vor.u32 %v3088, %v3089
      %v3091 = vsel %vm3080, %v3086, %v3090
      %v3092 = vrot.slane %v2996, 6
      %v3093 = vrot.slane %v2999, 7
      %v3094 = vor.u32 %v3092, %v3093
      %v3095 = vsel %vm3080, %v3090, %v3094
      %v3096 = vrot.slane %v3004, 6
      %v3097 = vrot.slane %v3007, 7
      %v3098 = vor.u32 %v3096, %v3097
      %v3099 = vsel %vm3080, %v3094, %v3098
      %v3100 = vrot.slane %v3012, 6
      %v3101 = vrot.slane %v3015, 7
      %v3102 = vor.u32 %v3100, %v3101
      %v3103 = vsel %vm3080, %v3098, %v3102
      %v3104 = vrot.slane %v3020, 6
      %v3105 = vrot.slane %v3023, 7
      %v3106 = vor.u32 %v3104, %v3105
      %v3107 = vsel %vm3080, %v3102, %v3106
      %v3108 = vrot.slane %v3028, 6
      %v3109 = vrot.slane %v3031, 7
      %v3110 = vor.u32 %v3108, %v3109
      %v3111 = vsel %vm3080, %v3106, %v3110
      %vm3120 = vcmask 1041408
      %vm3121 = vmand %vm3120, %vm3080
      %v3122 = vsel %vm3121, 0, %v3083
      %v3123 = vld [vmem:[%s9] sm:$0xf]
      %v3124 = vld [vmem:[%s9 + $0x4] sm:$0xf]
      %v3125 = vld [vmem:[%s9 + $0x8] sm:$0xf]
      %v3126 = vld [vmem:[%s9 + $0xc] sm:$0xf]
      %v3127 = vld [vmem:[%s9 + $0x10] sm:$0xf]
      %v3128 = vld [vmem:[%s9 + $0x14] sm:$0xf]
      %v3129 = vld [vmem:[%s9 + $0x18] sm:$0xf]
      %v3130 = vld [vmem:[%s9 + $0x1c] sm:$0xf]
      %v3131 = vld [vmem:[%s9 + $0x20] sm:$0xf]
      %v3132 = vld [vmem:[%s9 + $0x24] sm:$0xf]
      %v3133 = vld [vmem:[%s9 + $0x28] sm:$0xf]
      %v3134 = vld [vmem:[%s9 + $0x2c] sm:$0xf]
      %v3135 = vld [vmem:[%s9 + $0x30] sm:$0xf]
      %v3136 = vld [vmem:[%s9 + $0x34] sm:$0xf]
      %v3137 = vld [vmem:[%s9 + $0x38] sm:$0xf]
      %v3138 = vld [vmem:[%s9 + $0x3c] sm:$0xf]
      %v3139 = vld [vmem:[%s9 + $0x40] sm:$0xf]
      %v3140 = vld [vmem:[%s9 + $0x44] sm:$0xf]
      %v3141 = vld [vmem:[%s9 + $0x48] sm:$0xf]
      %v3142 = vld [vmem:[%s9 + $0x4c] sm:$0xf]
      %v3143 = vld [vmem:[%s9 + $0x50] sm:$0xf]
      %v3144 = vld [vmem:[%s9 + $0x54] sm:$0xf]
      %v3145 = vld [vmem:[%s9 + $0x58] sm:$0xf]
      %v3146 = vld [vmem:[%s9 + $0x5c] sm:$0xf]
      %v3147 = vld [vmem:[%s9 + $0x60] sm:$0xf]
      %v3148 = vld [vmem:[%s9 + $0x64] sm:$0xf]
      %v3149 = vld [vmem:[%s9 + $0x68] sm:$0xf]
      %v3150 = vld [vmem:[%s9 + $0x6c] sm:$0xf]
      %v3151 = vld [vmem:[%s9 + $0x70] sm:$0xf]
      %v3152 = vld [vmem:[%s9 + $0x74] sm:$0xf]
      %v3153 = vld [vmem:[%s9 + $0x78] sm:$0xf]
      %v3154 = vld [vmem:[%s9 + $0x7c] sm:$0xf]
      %v3155 = vld [vmem:[%s9 + $0x80] sm:$0xf]
      %v3156 = vld [vmem:[%s9 + $0x84] sm:$0xf]
      %v3157 = vld [vmem:[%s9 + $0x88] sm:$0xf]
      %v3158 = vld [vmem:[%s9 + $0x8c] sm:$0xf]
      %v3159 = vld [vmem:[%s9 + $0x90] sm:$0xf]
      %v3160 = vld [vmem:[%s9 + $0x94] sm:$0xf]
      %v3161 = vld [vmem:[%s9 + $0x98] sm:$0xf]
      %v3162 = vld [vmem:[%s9 + $0x9c] sm:$0xf]
      %v3163 = vld [vmem:[%s9 + $0xa0] sm:$0xf]
      %v3164 = vld [vmem:[%s9 + $0xa4] sm:$0xf]
      %v3165 = vld [vmem:[%s9 + $0xa8] sm:$0xf]
      %v3166 = vld [vmem:[%s9 + $0xac] sm:$0xf]
      %v3167 = vld [vmem:[%s9 + $0xb0] sm:$0xf]
      %v3168 = vld [vmem:[%s9 + $0xb4] sm:$0xf]
      %v3169 = vld [vmem:[%s9 + $0xb8] sm:$0xf]
      %v3170 = vld [vmem:[%s9 + $0xbc] sm:$0xf]
      %v3171 = vld [vmem:[%s9 + $0xc0] sm:$0xf]
      %v3172 = vld [vmem:[%s9 + $0xc4] sm:$0xf]
      %v3173 = vld [vmem:[%s9 + $0xc8] sm:$0xf]
      %v3174 = vld [vmem:[%s9 + $0xcc] sm:$0xf]
      %v3175 = vld [vmem:[%s9 + $0xd0] sm:$0xf]
      %v3176 = vld [vmem:[%s9 + $0xd4] sm:$0xf]
      %v3177 = vld [vmem:[%s9 + $0xd8] sm:$0xf]
      %v3178 = vld [vmem:[%s9 + $0xdc] sm:$0xf]
      %v3179 = vld [vmem:[%s9 + $0xe0] sm:$0xf]
      %v3180 = vld [vmem:[%s9 + $0xe4] sm:$0xf]
      %v3181 = vld [vmem:[%s9 + $0xe8] sm:$0xf]
      %v3182 = vld [vmem:[%s9 + $0xec] sm:$0xf]
      %v3183 = vld [vmem:[%s9 + $0xf0] sm:$0xf]
      %v3184 = vld [vmem:[%s9 + $0xf4] sm:$0xf]
      %v3185 = vld [vmem:[%s9 + $0xf8] sm:$0xf]
      %v3186 = vld [vmem:[%s9 + $0xfc] sm:$0xf]
      %v3187 = vld [vmem:[%s10] sm:$0x1]
      %v3189 = vlaneseq
      %v3190 = vshrl.u32 %v3189, 7
      %v3191 = vsub.s32 0, %v3190
      %v3192 = vrot.slane %v3187, %v3191
      %v3258 = vunpack.c.l.b16 %v3123
      %v3259 = vunpack.c.l.b16 %v3124
      %v3260 = vunpack.c.l.b16 %v3125
      %v3261 = vunpack.c.l.b16 %v3126
      %v3262 = vunpack.c.l.b16 %v3127
      %v3263 = vunpack.c.l.b16 %v3128
      %v3264 = vunpack.c.l.b16 %v3129
      %v3265 = vunpack.c.l.b16 %v3130
      %v3266 = vunpack.c.l.b16 %v3131
      %v3267 = vunpack.c.l.b16 %v3132
      %v3268 = vunpack.c.l.b16 %v3133
      %v3269 = vunpack.c.l.b16 %v3134
      %v3270 = vunpack.c.l.b16 %v3135
      %v3271 = vunpack.c.l.b16 %v3136
      %v3272 = vunpack.c.l.b16 %v3137
      %v3273 = vunpack.c.l.b16 %v3138
      %v3274 = vunpack.c.l.b16 %v3139
      %v3275 = vunpack.c.l.b16 %v3140
      %v3276 = vunpack.c.l.b16 %v3141
      %v3277 = vunpack.c.l.b16 %v3142
      %v3278 = vunpack.c.l.b16 %v3143
      %v3279 = vunpack.c.l.b16 %v3144
      %v3280 = vunpack.c.l.b16 %v3145
      %v3281 = vunpack.c.l.b16 %v3146
      %v3282 = vunpack.c.l.b16 %v3147
      %v3283 = vunpack.c.l.b16 %v3148
      %v3284 = vunpack.c.l.b16 %v3149
      %v3285 = vunpack.c.l.b16 %v3150
      %v3286 = vunpack.c.l.b16 %v3151
      %v3287 = vunpack.c.l.b16 %v3152
      %v3288 = vunpack.c.l.b16 %v3153
      %v3289 = vunpack.c.l.b16 %v3154
      %v3290 = vunpack.c.l.b16 %v3155
      %v3291 = vunpack.c.l.b16 %v3156
      %v3292 = vunpack.c.l.b16 %v3157
      %v3293 = vunpack.c.l.b16 %v3158
      %v3294 = vunpack.c.l.b16 %v3159
      %v3295 = vunpack.c.l.b16 %v3160
      %v3296 = vunpack.c.l.b16 %v3161
      %v3297 = vunpack.c.l.b16 %v3162
      %v3298 = vunpack.c.l.b16 %v3163
      %v3299 = vunpack.c.l.b16 %v3164
      %v3300 = vunpack.c.l.b16 %v3165
      %v3301 = vunpack.c.l.b16 %v3166
      %v3302 = vunpack.c.l.b16 %v3167
      %v3303 = vunpack.c.l.b16 %v3168
      %v3304 = vunpack.c.l.b16 %v3169
      %v3305 = vunpack.c.l.b16 %v3170
      %v3306 = vunpack.c.l.b16 %v3171
      %v3307 = vunpack.c.l.b16 %v3172
      %v3308 = vunpack.c.l.b16 %v3173
      %v3309 = vunpack.c.l.b16 %v3174
      %v3310 = vunpack.c.l.b16 %v3175
      %v3311 = vunpack.c.l.b16 %v3176
      %v3312 = vunpack.c.l.b16 %v3177
      %v3313 = vunpack.c.l.b16 %v3178
      %v3314 = vunpack.c.l.b16 %v3179
      %v3315 = vunpack.c.l.b16 %v3180
      %v3316 = vunpack.c.l.b16 %v3181
      %v3317 = vunpack.c.l.b16 %v3182
      %v3318 = vunpack.c.l.b16 %v3183
      %v3319 = vunpack.c.l.b16 %v3184
      %v3320 = vunpack.c.l.b16 %v3185
      %v3321 = vunpack.c.l.b16 %v3186
      %v3322 = vpack.c.b16 %v3259, %v3258
      %v3323 = vpack.c.b16 %v3261, %v3260
      %v3324 = vpack.c.b16 %v3263, %v3262
      %v3325 = vpack.c.b16 %v3265, %v3264
      %v3326 = vpack.c.b16 %v3267, %v3266
      %v3327 = vpack.c.b16 %v3269, %v3268
      %v3328 = vpack.c.b16 %v3271, %v3270
      %v3329 = vpack.c.b16 %v3273, %v3272
      %v3330 = vpack.c.b16 %v3275, %v3274
      %v3331 = vpack.c.b16 %v3277, %v3276
      %v3332 = vpack.c.b16 %v3279, %v3278
      %v3333 = vpack.c.b16 %v3281, %v3280
      %v3334 = vpack.c.b16 %v3283, %v3282
      %v3335 = vpack.c.b16 %v3285, %v3284
      %v3336 = vpack.c.b16 %v3287, %v3286
      %v3337 = vpack.c.b16 %v3289, %v3288
      %v3338 = vpack.c.b16 %v3291, %v3290
      %v3339 = vpack.c.b16 %v3293, %v3292
      %v3340 = vpack.c.b16 %v3295, %v3294
      %v3341 = vpack.c.b16 %v3297, %v3296
      %v3342 = vpack.c.b16 %v3299, %v3298
      %v3343 = vpack.c.b16 %v3301, %v3300
      %v3344 = vpack.c.b16 %v3303, %v3302
      %v3345 = vpack.c.b16 %v3305, %v3304
      %v3346 = vpack.c.b16 %v3307, %v3306
      %v3347 = vpack.c.b16 %v3309, %v3308
      %v3348 = vpack.c.b16 %v3311, %v3310
      %v3349 = vpack.c.b16 %v3313, %v3312
      %v3350 = vpack.c.b16 %v3315, %v3314
      %v3351 = vpack.c.b16 %v3317, %v3316
      %v3352 = vpack.c.b16 %v3319, %v3318
      %v3353 = vpack.c.b16 %v3321, %v3320
      %3386 = vmatprep.subr.bf16.mxu0 0
      %3387 = vmatpush1.bf16.msra.mxu0 %v3329
      %3388 = vmatprep.subr.bf16.mxu0 0
      %3389 = vmatpush1.bf16.msra.mxu0 %v3328
      %3390 = vmatprep.subr.bf16.mxu0 0
      %3391 = vmatpush1.bf16.msra.mxu0 %v3327
      %3392 = vmatprep.subr.bf16.mxu0 0
      %3393 = vmatpush1.bf16.msra.mxu0 %v3326
      %3394 = vmatprep.subr.bf16.mxu0 0
      %3395 = vmatpush1.bf16.msra.mxu0 %v3325
      %3396 = vmatprep.subr.bf16.mxu0 0
      %3397 = vmatpush1.bf16.msra.mxu0 %v3324
      %3398 = vmatprep.subr.bf16.mxu0 0
      %3399 = vmatpush1.bf16.msra.mxu0 %v3323
      %3400 = vmatprep.subr.bf16.mxu0 0
      %3401 = vmatpush1.bf16.msra.mxu0 %v3322
      %3402 = vmatprep.subr.bf16.mxu0 0
      %3403 = vmatpush2.bf16.msra.mxu0 %v3337
      %3404 = vmatprep.subr.bf16.mxu0 0
      %3405 = vmatpush2.bf16.msra.mxu0 %v3336
      %3406 = vmatprep.subr.bf16.mxu0 0
      %3407 = vmatpush2.bf16.msra.mxu0 %v3335
      %3408 = vmatprep.subr.bf16.mxu0 0
      %3409 = vmatpush2.bf16.msra.mxu0 %v3334
      %3410 = vmatprep.subr.bf16.mxu0 0
      %3411 = vmatpush2.bf16.msra.mxu0 %v3333
      %3412 = vmatprep.subr.bf16.mxu0 0
      %3413 = vmatpush2.bf16.msra.mxu0 %v3332
      %3414 = vmatprep.subr.bf16.mxu0 0
      %3415 = vmatpush2.bf16.msra.mxu0 %v3331
      %3416 = vmatprep.subr.bf16.mxu0 0
      %3417 = vmatpush2.bf16.msra.mxu0 %v3330
      %3418 = vmatprep.mubr.bf16.mxu0 %v3045
      %3419 = vmatmul.mubr.bf16.gmra.mxu0 %v2963
      %v3420 = vpop.f32.mrf.mxu0
      %v3421 = vadd.f32 %v3192, %v3420
      %v3422 = vpop.f32.mrf.mxu0
      %v3423 = vpop.f32.mrf.mxu0
      %v3424 = vadd.f32 %v3192, %v3423
      %v3425 = vpop.f32.mrf.mxu0
      %3426 = vmatprep.mubr.bf16.mxu0 %v2986
      %3427 = vmatmul.mubr.bf16.gmra.mxu0 %v2964
      %v3428 = vpop.f32.mrf.mxu0
      %v3429 = vadd.f32 %v3192, %v3428
      %v3430 = vpop.f32.mrf.mxu0
      %v3431 = vpop.f32.mrf.mxu0
      %v3432 = vadd.f32 %v3192, %v3431
      %v3433 = vpop.f32.mrf.mxu0
      %3434 = vmatprep.mubr.bf16.mxu0 %v2994
      %3435 = vmatmul.mubr.bf16.gmra.mxu0 %v2965
      %v3436 = vpop.f32.mrf.mxu0
      %v3437 = vadd.f32 %v3192, %v3436
      %v3438 = vpop.f32.mrf.mxu0
      %v3439 = vpop.f32.mrf.mxu0
      %v3440 = vadd.f32 %v3192, %v3439
      %v3441 = vpop.f32.mrf.mxu0
      %3442 = vmatprep.mubr.bf16.mxu0 %v3002
      %3443 = vmatmul.mubr.bf16.gmra.mxu0 %v2966
      %v3444 = vpop.f32.mrf.mxu0
      %v3445 = vadd.f32 %v3192, %v3444
      %v3446 = vpop.f32.mrf.mxu0
      %v3447 = vpop.f32.mrf.mxu0
      %v3448 = vadd.f32 %v3192, %v3447
      %v3449 = vpop.f32.mrf.mxu0
      %3450 = vmatprep.mubr.bf16.mxu0 %v3010
      %3451 = vmatmul.mubr.bf16.gmra.mxu0 %v2967
      %v3452 = vpop.f32.mrf.mxu0
      %v3453 = vadd.f32 %v3192, %v3452
      %v3454 = vpop.f32.mrf.mxu0
      %v3455 = vpop.f32.mrf.mxu0
      %v3456 = vadd.f32 %v3192, %v3455
      %v3457 = vpop.f32.mrf.mxu0
      %3458 = vmatprep.mubr.bf16.mxu0 %v3018
      %3459 = vmatmul.mubr.bf16.gmra.mxu0 %v2968
      %v3460 = vpop.f32.mrf.mxu0
      %v3461 = vadd.f32 %v3192, %v3460
      %v3462 = vpop.f32.mrf.mxu0
      %v3463 = vpop.f32.mrf.mxu0
      %v3464 = vadd.f32 %v3192, %v3463
      %v3465 = vpop.f32.mrf.mxu0
      %3466 = vmatprep.mubr.bf16.mxu0 %v3026
      %3467 = vmatmul.mubr.bf16.gmra.mxu0 %v2969
      %v3468 = vpop.f32.mrf.mxu0
      %v3469 = vadd.f32 %v3192, %v3468
      %v3470 = vpop.f32.mrf.mxu0
      %v3471 = vpop.f32.mrf.mxu0
      %v3472 = vadd.f32 %v3192, %v3471
      %v3473 = vpop.f32.mrf.mxu0
      %3474 = vmatprep.mubr.bf16.mxu0 %v3034
      %3475 = vmatmul.mubr.bf16.gmra.mxu0 %v2970
      %v3476 = vpop.f32.mrf.mxu0
      %v3477 = vadd.f32 %v3192, %v3476
      %v3478 = vpop.f32.mrf.mxu0
      %v3479 = vpop.f32.mrf.mxu0
      %v3480 = vadd.f32 %v3192, %v3479
      %v3481 = vpop.f32.mrf.mxu0
      %3482 = vdwg.mxu0
      %3483 = vmatprep.subr.bf16.mxu0 0
      %3484 = vmatpush1.bf16.msra.mxu0 %v3345
      %3485 = vmatprep.subr.bf16.mxu0 0
      %3486 = vmatpush1.bf16.msra.mxu0 %v3344
      %3487 = vmatprep.subr.bf16.mxu0 0
      %3488 = vmatpush1.bf16.msra.mxu0 %v3343
      %3489 = vmatprep.subr.bf16.mxu0 0
      %3490 = vmatpush1.bf16.msra.mxu0 %v3342
      %3491 = vmatprep.subr.bf16.mxu0 0
      %3492 = vmatpush1.bf16.msra.mxu0 %v3341
      %3493 = vmatprep.subr.bf16.mxu0 0
      %3494 = vmatpush1.bf16.msra.mxu0 %v3340
      %3495 = vmatprep.subr.bf16.mxu0 0
      %3496 = vmatpush1.bf16.msra.mxu0 %v3339
      %3497 = vmatprep.subr.bf16.mxu0 0
      %3498 = vmatpush1.bf16.msra.mxu0 %v3338
      %3499 = vmatprep.subr.bf16.mxu0 0
      %3500 = vmatpush2.bf16.msra.mxu0 %v3353
      %3501 = vmatprep.subr.bf16.mxu0 0
      %3502 = vmatpush2.bf16.msra.mxu0 %v3352
      %3503 = vmatprep.subr.bf16.mxu0 0
      %3504 = vmatpush2.bf16.msra.mxu0 %v3351
      %3505 = vmatprep.subr.bf16.mxu0 0
      %3506 = vmatpush2.bf16.msra.mxu0 %v3350
      %3507 = vmatprep.subr.bf16.mxu0 0
      %3508 = vmatpush2.bf16.msra.mxu0 %v3349
      %3509 = vmatprep.subr.bf16.mxu0 0
      %3510 = vmatpush2.bf16.msra.mxu0 %v3348
      %3511 = vmatprep.subr.bf16.mxu0 0
      %3512 = vmatpush2.bf16.msra.mxu0 %v3347
      %3513 = vmatprep.subr.bf16.mxu0 0
      %3514 = vmatpush2.bf16.msra.mxu0 %v3346
      %3515 = vmatprep.mubr.bf16.mxu0 %v3122
      %3516 = vmatmul.mubr.bf16.gmra.mxu0 %v3078
      %v3517 = vpop.f32.mrf.mxu0
      %v3518 = vadd.f32 %v3421, %v3517
      %v3519 = vpop.f32.mrf.mxu0
      %v3520 = vpop.f32.mrf.mxu0
      %v3521 = vadd.f32 %v3424, %v3520
      %v3522 = vpop.f32.mrf.mxu0
      %3523 = vmatprep.mubr.bf16.mxu0 %v3087
      %3524 = vmatmul.mubr.bf16.gmra.mxu0 %v3056
      %v3525 = vpop.f32.mrf.mxu0
      %v3526 = vadd.f32 %v3429, %v3525
      %v3527 = vpop.f32.mrf.mxu0
      %v3528 = vpop.f32.mrf.mxu0
      %v3529 = vadd.f32 %v3432, %v3528
      %v3530 = vpop.f32.mrf.mxu0
      %3531 = vmatprep.mubr.bf16.mxu0 %v3091
      %3532 = vmatmul.mubr.bf16.gmra.mxu0 %v3058
      %v3533 = vpop.f32.mrf.mxu0
      %v3534 = vadd.f32 %v3437, %v3533
      %v3535 = vpop.f32.mrf.mxu0
      %v3536 = vpop.f32.mrf.mxu0
      %v3537 = vadd.f32 %v3440, %v3536
      %v3538 = vpop.f32.mrf.mxu0
      %3539 = vmatprep.mubr.bf16.mxu0 %v3095
      %3540 = vmatmul.mubr.bf16.gmra.mxu0 %v3060
      %v3541 = vpop.f32.mrf.mxu0
      %v3542 = vadd.f32 %v3445, %v3541
      %v3543 = vpop.f32.mrf.mxu0
      %v3544 = vpop.f32.mrf.mxu0
      %v3545 = vadd.f32 %v3448, %v3544
      %v3546 = vpop.f32.mrf.mxu0
      %3547 = vmatprep.mubr.bf16.mxu0 %v3099
      %3548 = vmatmul.mubr.bf16.gmra.mxu0 %v3062
      %v3549 = vpop.f32.mrf.mxu0
      %v3550 = vadd.f32 %v3453, %v3549
      %v3551 = vpop.f32.mrf.mxu0
      %v3552 = vpop.f32.mrf.mxu0
      %v3553 = vadd.f32 %v3456, %v3552
      %v3554 = vpop.f32.mrf.mxu0
      %3555 = vmatprep.mubr.bf16.mxu0 %v3103
      %3556 = vmatmul.mubr.bf16.gmra.mxu0 %v3064
      %v3557 = vpop.f32.mrf.mxu0
      %v3558 = vadd.f32 %v3461, %v3557
      %v3559 = vpop.f32.mrf.mxu0
      %v3560 = vpop.f32.mrf.mxu0
      %v3561 = vadd.f32 %v3464, %v3560
      %v3562 = vpop.f32.mrf.mxu0
      %3563 = vmatprep.mubr.bf16.mxu0 %v3107
      %3564 = vmatmul.mubr.bf16.gmra.mxu0 %v3066
      %v3565 = vpop.f32.mrf.mxu0
      %v3566 = vadd.f32 %v3469, %v3565
      %v3567 = vpop.f32.mrf.mxu0
      %v3568 = vpop.f32.mrf.mxu0
      %v3569 = vadd.f32 %v3472, %v3568
      %v3570 = vpop.f32.mrf.mxu0
      %3571 = vmatprep.mubr.bf16.mxu0 %v3111
      %3572 = vmatmul.mubr.bf16.gmra.mxu0 %v3068
      %v3573 = vpop.f32.mrf.mxu0
      %v3574 = vadd.f32 %v3477, %v3573
      %v3575 = vpop.f32.mrf.mxu0
      %v3576 = vpop.f32.mrf.mxu0
      %v3577 = vadd.f32 %v3480, %v3576
      %v3578 = vpop.f32.mrf.mxu0
      %3579 = vdwg.mxu0
      %vm3580 = vcmp.ge.f32.partialorder %v3518, 0.0
      %vm3581 = vcmp.ge.f32.partialorder %v3521, 0.0
      %vm3582 = vcmp.ge.f32.partialorder %v3526, 0.0
      %vm3583 = vcmp.ge.f32.partialorder %v3529, 0.0
      %vm3584 = vcmp.ge.f32.partialorder %v3534, 0.0
      %vm3585 = vcmp.ge.f32.partialorder %v3537, 0.0
      %vm3586 = vcmp.ge.f32.partialorder %v3542, 0.0
      %vm3587 = vcmp.ge.f32.partialorder %v3545, 0.0
      %vm3588 = vcmp.ge.f32.partialorder %v3550, 0.0
      %vm3589 = vcmp.ge.f32.partialorder %v3553, 0.0
      %vm3590 = vcmp.ge.f32.partialorder %v3558, 0.0
      %vm3591 = vcmp.ge.f32.partialorder %v3561, 0.0
      %vm3592 = vcmp.ge.f32.partialorder %v3566, 0.0
      %vm3593 = vcmp.ge.f32.partialorder %v3569, 0.0
      %vm3594 = vcmp.ge.f32.partialorder %v3574, 0.0
      %vm3595 = vcmp.ge.f32.partialorder %v3577, 0.0
      %v3596 = vmul.f32 %v3518, 0.01
      %v3597 = vmul.f32 %v3521, 0.01
      %v3598 = vmul.f32 %v3526, 0.01
      %v3599 = vmul.f32 %v3529, 0.01
      %v3600 = vmul.f32 %v3534, 0.01
      %v3601 = vmul.f32 %v3537, 0.01
      %v3602 = vmul.f32 %v3542, 0.01
      %v3603 = vmul.f32 %v3545, 0.01
      %v3604 = vmul.f32 %v3550, 0.01
      %v3605 = vmul.f32 %v3553, 0.01
      %v3606 = vmul.f32 %v3558, 0.01
      %v3607 = vmul.f32 %v3561, 0.01
      %v3608 = vmul.f32 %v3566, 0.01
      %v3609 = vmul.f32 %v3569, 0.01
      %v3610 = vmul.f32 %v3574, 0.01
      %v3611 = vmul.f32 %v3577, 0.01
      %v3612 = vsel %vm3580, %v3518, %v3596
      %v3613 = vsel %vm3581, %v3521, %v3597
      %v3614 = vsel %vm3582, %v3526, %v3598
      %v3615 = vsel %vm3583, %v3529, %v3599
      %v3616 = vsel %vm3584, %v3534, %v3600
      %v3617 = vsel %vm3585, %v3537, %v3601
      %v3618 = vsel %vm3586, %v3542, %v3602
      %v3619 = vsel %vm3587, %v3545, %v3603
      %v3620 = vsel %vm3588, %v3550, %v3604
      %v3621 = vsel %vm3589, %v3553, %v3605
      %v3622 = vsel %vm3590, %v3558, %v3606
      %v3623 = vsel %vm3591, %v3561, %v3607
      %v3624 = vsel %vm3592, %v3566, %v3608
      %v3625 = vsel %vm3593, %v3569, %v3609
      %v3626 = vsel %vm3594, %v3574, %v3610
      %v3627 = vsel %vm3595, %v3577, %v3611
      %vm3628 = vcmp.lt.s32.totalorder %v848, 10
      %vm3629 = vcmp.lt.s32.totalorder %v849, 10
      %vm3630 = vcmp.lt.s32.totalorder %v850, 10
      %vm3631 = vcmp.lt.s32.totalorder %v851, 10
      %vm3632 = vcmp.lt.s32.totalorder %v852, 10
      %vm3633 = vcmp.lt.s32.totalorder %v853, 10
      %vm3634 = vcmp.lt.s32.totalorder %v854, 10
      %vm3635 = vcmp.lt.s32.totalorder %v855, 10
      %vm3636 = vcmp.lt.s32.totalorder %v856, 10
      %vm3637 = vcmp.lt.s32.totalorder %v857, 10
      %vm3638 = vcmp.lt.s32.totalorder %v858, 10
      %vm3639 = vcmp.lt.s32.totalorder %v859, 10
      %vm3640 = vcmp.lt.s32.totalorder %v860, 10
      %vm3641 = vcmp.lt.s32.totalorder %v861, 10
      %vm3642 = vcmp.lt.s32.totalorder %v862, 10
      %vm3643 = vcmp.lt.s32.totalorder %v863, 10
      %v3644 = vsel %vm3628, 1, 0
      %v3645 = vsel %vm3629, 1, 0
      %v3646 = vsel %vm3630, 1, 0
      %v3647 = vsel %vm3631, 1, 0
      %v3648 = vsel %vm3632, 1, 0
      %v3649 = vsel %vm3633, 1, 0
      %v3650 = vsel %vm3634, 1, 0
      %v3651 = vsel %vm3635, 1, 0
      %v3652 = vsel %vm3636, 1, 0
      %v3653 = vsel %vm3637, 1, 0
      %v3654 = vsel %vm3638, 1, 0
      %v3655 = vsel %vm3639, 1, 0
      %v3656 = vsel %vm3640, 1, 0
      %v3657 = vsel %vm3641, 1, 0
      %v3658 = vsel %vm3642, 1, 0
      %v3659 = vsel %vm3643, 1, 0
      %vm3660 = vcmp.eq.s32.totalorder %v3644, 1
      %vm3661 = vcmp.eq.s32.totalorder %v3645, 1
      %vm3662 = vcmp.eq.s32.totalorder %v3646, 1
      %vm3663 = vcmp.eq.s32.totalorder %v3647, 1
      %vm3664 = vcmp.eq.s32.totalorder %v3648, 1
      %vm3665 = vcmp.eq.s32.totalorder %v3649, 1
      %vm3666 = vcmp.eq.s32.totalorder %v3650, 1
      %vm3667 = vcmp.eq.s32.totalorder %v3651, 1
      %vm3668 = vcmp.eq.s32.totalorder %v3652, 1
      %vm3669 = vcmp.eq.s32.totalorder %v3653, 1
      %vm3670 = vcmp.eq.s32.totalorder %v3654, 1
      %vm3671 = vcmp.eq.s32.totalorder %v3655, 1
      %vm3672 = vcmp.eq.s32.totalorder %v3656, 1
      %vm3673 = vcmp.eq.s32.totalorder %v3657, 1
      %vm3674 = vcmp.eq.s32.totalorder %v3658, 1
      %vm3675 = vcmp.eq.s32.totalorder %v3659, 1
      %v3676 = vsel %vm3660, %v3612, 0.0
      %v3677 = vsel %vm3661, %v3613, 0.0
      %v3678 = vsel %vm3662, %v3614, 0.0
      %v3679 = vsel %vm3663, %v3615, 0.0
      %v3680 = vsel %vm3664, %v3616, 0.0
      %v3681 = vsel %vm3665, %v3617, 0.0
      %v3682 = vsel %vm3666, %v3618, 0.0
      %v3683 = vsel %vm3667, %v3619, 0.0
      %v3684 = vsel %vm3668, %v3620, 0.0
      %v3685 = vsel %vm3669, %v3621, 0.0
      %v3686 = vsel %vm3670, %v3622, 0.0
      %v3687 = vsel %vm3671, %v3623, 0.0
      %v3688 = vsel %vm3672, %v3624, 0.0
      %v3689 = vsel %vm3673, %v3625, 0.0
      %v3690 = vsel %vm3674, %v3626, 0.0
      %v3691 = vsel %vm3675, %v3627, 0.0
      %v3692 = vpack.c.bf16 %v3677, %v3676
      %v3693 = vpack.c.bf16 %v3679, %v3678
      %v3694 = vpack.c.bf16 %v3681, %v3680
      %v3695 = vpack.c.bf16 %v3683, %v3682
      %v3696 = vpack.c.bf16 %v3685, %v3684
      %v3697 = vpack.c.bf16 %v3687, %v3686
      %v3698 = vpack.c.bf16 %v3689, %v3688
      %v3699 = vpack.c.bf16 %v3691, %v3690
      %v3701 = vshrl.u32 %v3692, 16
      %v3703 = vrot.slane %v3701, 7
      %v3704 = vshll.u32 %v3692, 16
      %v3706 = vor.u32 %v3703, %v3704
      %v3708 = vshrl.u32 %v3693, 16
      %v3710 = vrot.slane %v3708, 7
      %v3711 = vshll.u32 %v3693, 16
      %v3713 = vor.u32 %v3710, %v3711
      %v3714 = vsel %vm2971, %v3703, %v3713
      %v3716 = vshrl.u32 %v3694, 16
      %v3718 = vrot.slane %v3716, 7
      %v3719 = vshll.u32 %v3694, 16
      %v3721 = vor.u32 %v3718, %v3719
      %v3722 = vsel %vm2971, %v3710, %v3721
      %v3724 = vshrl.u32 %v3695, 16
      %v3726 = vrot.slane %v3724, 7
      %v3727 = vshll.u32 %v3695, 16
      %v3729 = vor.u32 %v3726, %v3727
      %v3730 = vsel %vm2971, %v3718, %v3729
      %v3732 = vshrl.u32 %v3696, 16
      %v3734 = vrot.slane %v3732, 7
      %v3735 = vshll.u32 %v3696, 16
      %v3737 = vor.u32 %v3734, %v3735
      %v3738 = vsel %vm2971, %v3726, %v3737
      %v3740 = vshrl.u32 %v3697, 16
      %v3742 = vrot.slane %v3740, 7
      %v3743 = vshll.u32 %v3697, 16
      %v3745 = vor.u32 %v3742, %v3743
      %v3746 = vsel %vm2971, %v3734, %v3745
      %v3748 = vshrl.u32 %v3698, 16
      %v3750 = vrot.slane %v3748, 7
      %v3751 = vshll.u32 %v3698, 16
      %v3753 = vor.u32 %v3750, %v3751
      %v3754 = vsel %vm2971, %v3742, %v3753
      %v3756 = vshrl.u32 %v3699, 16
      %v3758 = vrot.slane %v3756, 7
      %v3759 = vshll.u32 %v3699, 16
      %v3761 = vor.u32 %v3758, %v3759
      %v3762 = vsel %vm2971, %v3750, %v3761
      %v3764 = vsel %vm3044, 0, %v3706
      %v3773 = vrot.slane %v3692, 7
      %v3774 = vrot.slane %v3693, 7
      %v3775 = vsel %vm3043, %v3773, %v3774
      %v3776 = vrot.slane %v3694, 7
      %v3777 = vsel %vm3043, %v3774, %v3776
      %v3778 = vrot.slane %v3695, 7
      %v3779 = vsel %vm3043, %v3776, %v3778
      %v3780 = vrot.slane %v3696, 7
      %v3781 = vsel %vm3043, %v3778, %v3780
      %v3782 = vrot.slane %v3697, 7
      %v3783 = vsel %vm3043, %v3780, %v3782
      %v3784 = vrot.slane %v3698, 7
      %v3785 = vsel %vm3043, %v3782, %v3784
      %v3786 = vrot.slane %v3699, 7
      %v3787 = vsel %vm3043, %v3784, %v3786
      %v3789 = vsel %vm3076, 0, %v3773
      %v3790 = vrot.slane %v3701, 6
      %v3791 = vrot.slane %v3704, 7
      %v3792 = vor.u32 %v3790, %v3791
      %v3793 = vrot.slane %v3708, 6
      %v3794 = vrot.slane %v3711, 7
      %v3795 = vor.u32 %v3793, %v3794
      %v3796 = vsel %vm3080, %v3792, %v3795
      %v3797 = vrot.slane %v3716, 6
      %v3798 = vrot.slane %v3719, 7
      %v3799 = vor.u32 %v3797, %v3798
      %v3800 = vsel %vm3080, %v3795, %v3799
      %v3801 = vrot.slane %v3724, 6
      %v3802 = vrot.slane %v3727, 7
      %v3803 = vor.u32 %v3801, %v3802
      %v3804 = vsel %vm3080, %v3799, %v3803
      %v3805 = vrot.slane %v3732, 6
      %v3806 = vrot.slane %v3735, 7
      %v3807 = vor.u32 %v3805, %v3806
      %v3808 = vsel %vm3080, %v3803, %v3807
      %v3809 = vrot.slane %v3740, 6
      %v3810 = vrot.slane %v3743, 7
      %v3811 = vor.u32 %v3809, %v3810
      %v3812 = vsel %vm3080, %v3807, %v3811
      %v3813 = vrot.slane %v3748, 6
      %v3814 = vrot.slane %v3751, 7
      %v3815 = vor.u32 %v3813, %v3814
      %v3816 = vsel %vm3080, %v3811, %v3815
      %v3817 = vrot.slane %v3756, 6
      %v3818 = vrot.slane %v3759, 7
      %v3819 = vor.u32 %v3817, %v3818
      %v3820 = vsel %vm3080, %v3815, %v3819
      %v3822 = vsel %vm3121, 0, %v3792
      %3824 = vrot.lane.b32.xlu0 %v3764, 64
      %v3825 = vpop.permute.xlu0 %3824
      %3826 = vrot.lane.b32.xlu0 %v3714, 64
      %v3827 = vpop.permute.xlu0 %3826
      %3828 = vrot.lane.b32.xlu0 %v3722, 64
      %v3829 = vpop.permute.xlu0 %3828
      %3830 = vrot.lane.b32.xlu0 %v3730, 64
      %v3831 = vpop.permute.xlu0 %3830
      %3832 = vrot.lane.b32.xlu0 %v3738, 64
      %v3833 = vpop.permute.xlu0 %3832
      %3834 = vrot.lane.b32.xlu0 %v3746, 64
      %v3835 = vpop.permute.xlu0 %3834
      %3836 = vrot.lane.b32.xlu0 %v3754, 64
      %v3837 = vpop.permute.xlu0 %3836
      %3838 = vrot.lane.b32.xlu0 %v3762, 64
      %v3839 = vpop.permute.xlu0 %3838
      %3841 = vrot.lane.b32.xlu0 %v3822, 64
      %v3842 = vpop.permute.xlu0 %3841
      %3843 = vrot.lane.b32.xlu0 %v3796, 64
      %v3844 = vpop.permute.xlu0 %3843
      %3845 = vrot.lane.b32.xlu0 %v3800, 64
      %v3846 = vpop.permute.xlu0 %3845
      %3847 = vrot.lane.b32.xlu0 %v3804, 64
      %v3848 = vpop.permute.xlu0 %3847
      %3849 = vrot.lane.b32.xlu0 %v3808, 64
      %v3850 = vpop.permute.xlu0 %3849
      %3851 = vrot.lane.b32.xlu0 %v3812, 64
      %v3852 = vpop.permute.xlu0 %3851
      %3853 = vrot.lane.b32.xlu0 %v3816, 64
      %v3854 = vpop.permute.xlu0 %3853
      %3855 = vrot.lane.b32.xlu0 %v3820, 64
      %v3856 = vpop.permute.xlu0 %3855
      %v3858 = vsel %vm1700, %v3692, %v3825
      %v3861 = vsel %vm1700, %v3693, %v3827
      %v3864 = vsel %vm1700, %v3694, %v3829
      %v3867 = vsel %vm1700, %v3695, %v3831
      %v3870 = vsel %vm1700, %v3696, %v3833
      %v3873 = vsel %vm1700, %v3697, %v3835
      %v3876 = vsel %vm1700, %v3698, %v3837
      %v3879 = vsel %vm1700, %v3699, %v3839
      %v3882 = vsel %vm1700, %v3789, %v3842
      %v3886 = vsel %vm1700, %v3775, %v3844
      %v3890 = vsel %vm1700, %v3777, %v3846
      %v3894 = vsel %vm1700, %v3779, %v3848
      %v3898 = vsel %vm1700, %v3781, %v3850
      %v3902 = vsel %vm1700, %v3783, %v3852
      %v3906 = vsel %vm1700, %v3785, %v3854
      %v3910 = vsel %vm1700, %v3787, %v3856
      %v3912 = vld [vmem:[%s11] sm:$0xf]
      %v3913 = vld [vmem:[%s11 + $0x4] sm:$0xf]
      %v3914 = vld [vmem:[%s11 + $0x8] sm:$0xf]
      %v3915 = vld [vmem:[%s11 + $0xc] sm:$0xf]
      %v3916 = vld [vmem:[%s11 + $0x10] sm:$0xf]
      %v3917 = vld [vmem:[%s11 + $0x14] sm:$0xf]
      %v3918 = vld [vmem:[%s11 + $0x18] sm:$0xf]
      %v3919 = vld [vmem:[%s11 + $0x1c] sm:$0xf]
      %v3920 = vld [vmem:[%s11 + $0x20] sm:$0xf]
      %v3921 = vld [vmem:[%s11 + $0x24] sm:$0xf]
      %v3922 = vld [vmem:[%s11 + $0x28] sm:$0xf]
      %v3923 = vld [vmem:[%s11 + $0x2c] sm:$0xf]
      %v3924 = vld [vmem:[%s11 + $0x30] sm:$0xf]
      %v3925 = vld [vmem:[%s11 + $0x34] sm:$0xf]
      %v3926 = vld [vmem:[%s11 + $0x38] sm:$0xf]
      %v3927 = vld [vmem:[%s11 + $0x3c] sm:$0xf]
      %v3928 = vld [vmem:[%s11 + $0x40] sm:$0xf]
      %v3929 = vld [vmem:[%s11 + $0x44] sm:$0xf]
      %v3930 = vld [vmem:[%s11 + $0x48] sm:$0xf]
      %v3931 = vld [vmem:[%s11 + $0x4c] sm:$0xf]
      %v3932 = vld [vmem:[%s11 + $0x50] sm:$0xf]
      %v3933 = vld [vmem:[%s11 + $0x54] sm:$0xf]
      %v3934 = vld [vmem:[%s11 + $0x58] sm:$0xf]
      %v3935 = vld [vmem:[%s11 + $0x5c] sm:$0xf]
      %v3936 = vld [vmem:[%s11 + $0x60] sm:$0xf]
      %v3937 = vld [vmem:[%s11 + $0x64] sm:$0xf]
      %v3938 = vld [vmem:[%s11 + $0x68] sm:$0xf]
      %v3939 = vld [vmem:[%s11 + $0x6c] sm:$0xf]
      %v3940 = vld [vmem:[%s11 + $0x70] sm:$0xf]
      %v3941 = vld [vmem:[%s11 + $0x74] sm:$0xf]
      %v3942 = vld [vmem:[%s11 + $0x78] sm:$0xf]
      %v3943 = vld [vmem:[%s11 + $0x7c] sm:$0xf]
      %v3944 = vld [vmem:[%s12] sm:$0x1]
      %v3946 = vlaneseq
      %v3947 = vshrl.u32 %v3946, 7
      %v3948 = vsub.s32 0, %v3947
      %v3949 = vrot.slane %v3944, %v3948
      %v3983 = vunpack.c.l.b16 %v3912
      %v3984 = vunpack.c.l.b16 %v3913
      %v3985 = vunpack.c.l.b16 %v3914
      %v3986 = vunpack.c.l.b16 %v3915
      %v3987 = vunpack.c.l.b16 %v3916
      %v3988 = vunpack.c.l.b16 %v3917
      %v3989 = vunpack.c.l.b16 %v3918
      %v3990 = vunpack.c.l.b16 %v3919
      %v3991 = vunpack.c.l.b16 %v3920
      %v3992 = vunpack.c.l.b16 %v3921
      %v3993 = vunpack.c.l.b16 %v3922
      %v3994 = vunpack.c.l.b16 %v3923
      %v3995 = vunpack.c.l.b16 %v3924
      %v3996 = vunpack.c.l.b16 %v3925
      %v3997 = vunpack.c.l.b16 %v3926
      %v3998 = vunpack.c.l.b16 %v3927
      %v3999 = vunpack.c.l.b16 %v3928
      %v4000 = vunpack.c.l.b16 %v3929
      %v4001 = vunpack.c.l.b16 %v3930
      %v4002 = vunpack.c.l.b16 %v3931
      %v4003 = vunpack.c.l.b16 %v3932
      %v4004 = vunpack.c.l.b16 %v3933
      %v4005 = vunpack.c.l.b16 %v3934
      %v4006 = vunpack.c.l.b16 %v3935
      %v4007 = vunpack.c.l.b16 %v3936
      %v4008 = vunpack.c.l.b16 %v3937
      %v4009 = vunpack.c.l.b16 %v3938
      %v4010 = vunpack.c.l.b16 %v3939
      %v4011 = vunpack.c.l.b16 %v3940
      %v4012 = vunpack.c.l.b16 %v3941
      %v4013 = vunpack.c.l.b16 %v3942
      %v4014 = vunpack.c.l.b16 %v3943
      %v4015 = vpack.c.b16 %v3984, %v3983
      %v4016 = vpack.c.b16 %v3986, %v3985
      %v4017 = vpack.c.b16 %v3988, %v3987
      %v4018 = vpack.c.b16 %v3990, %v3989
      %v4019 = vpack.c.b16 %v3992, %v3991
      %v4020 = vpack.c.b16 %v3994, %v3993
      %v4021 = vpack.c.b16 %v3996, %v3995
      %v4022 = vpack.c.b16 %v3998, %v3997
      %v4023 = vpack.c.b16 %v4000, %v3999
      %v4024 = vpack.c.b16 %v4002, %v4001
      %v4025 = vpack.c.b16 %v4004, %v4003
      %v4026 = vpack.c.b16 %v4006, %v4005
      %v4027 = vpack.c.b16 %v4008, %v4007
      %v4028 = vpack.c.b16 %v4010, %v4009
      %v4029 = vpack.c.b16 %v4012, %v4011
      %v4030 = vpack.c.b16 %v4014, %v4013
      %4047 = vmatprep.subr.bf16.mxu0 0
      %4048 = vmatpush1.bf16.msra.mxu0 %v4022
      %4049 = vmatprep.subr.bf16.mxu0 0
      %4050 = vmatpush1.bf16.msra.mxu0 %v4021
      %4051 = vmatprep.subr.bf16.mxu0 0
      %4052 = vmatpush1.bf16.msra.mxu0 %v4020
      %4053 = vmatprep.subr.bf16.mxu0 0
      %4054 = vmatpush1.bf16.msra.mxu0 %v4019
      %4055 = vmatprep.subr.bf16.mxu0 0
      %4056 = vmatpush1.bf16.msra.mxu0 %v4018
      %4057 = vmatprep.subr.bf16.mxu0 0
      %4058 = vmatpush1.bf16.msra.mxu0 %v4017
      %4059 = vmatprep.subr.bf16.mxu0 0
      %4060 = vmatpush1.bf16.msra.mxu0 %v4016
      %4061 = vmatprep.subr.bf16.mxu0 0
      %4062 = vmatpush1.bf16.msra.mxu0 %v4015
      %4063 = vmatprep.subr.bf16.mxu0 0
      %4064 = vmatpush2.bf16.msra.mxu0 %v4030
      %4065 = vmatprep.subr.bf16.mxu0 0
      %4066 = vmatpush2.bf16.msra.mxu0 %v4029
      %4067 = vmatprep.subr.bf16.mxu0 0
      %4068 = vmatpush2.bf16.msra.mxu0 %v4028
      %4069 = vmatprep.subr.bf16.mxu0 0
      %4070 = vmatpush2.bf16.msra.mxu0 %v4027
      %4071 = vmatprep.subr.bf16.mxu0 0
      %4072 = vmatpush2.bf16.msra.mxu0 %v4026
      %4073 = vmatprep.subr.bf16.mxu0 0
      %4074 = vmatpush2.bf16.msra.mxu0 %v4025
      %4075 = vmatprep.subr.bf16.mxu0 0
      %4076 = vmatpush2.bf16.msra.mxu0 %v4024
      %4077 = vmatprep.subr.bf16.mxu0 0
      %4078 = vmatpush2.bf16.msra.mxu0 %v4023
      %4079 = vmatprep.mubr.bf16.mxu0 %v3882
      %4080 = vmatmul.mubr.bf16.gmra.mxu0 %v3858
      %v4081 = vpop.f32.mrf.mxu0
      %v4082 = vadd.f32 %v3949, %v4081
      %v4083 = vpop.f32.mrf.mxu0
      %v4084 = vpop.f32.mrf.mxu0
      %v4085 = vadd.f32 %v3949, %v4084
      %v4086 = vpop.f32.mrf.mxu0
      %4087 = vmatprep.mubr.bf16.mxu0 %v3886
      %4088 = vmatmul.mubr.bf16.gmra.mxu0 %v3861
      %v4089 = vpop.f32.mrf.mxu0
      %v4090 = vadd.f32 %v3949, %v4089
      %v4091 = vpop.f32.mrf.mxu0
      %v4092 = vpop.f32.mrf.mxu0
      %v4093 = vadd.f32 %v3949, %v4092
      %v4094 = vpop.f32.mrf.mxu0
      %4095 = vmatprep.mubr.bf16.mxu0 %v3890
      %4096 = vmatmul.mubr.bf16.gmra.mxu0 %v3864
      %v4097 = vpop.f32.mrf.mxu0
      %v4098 = vadd.f32 %v3949, %v4097
      %v4099 = vpop.f32.mrf.mxu0
      %v4100 = vpop.f32.mrf.mxu0
      %v4101 = vadd.f32 %v3949, %v4100
      %v4102 = vpop.f32.mrf.mxu0
      %4103 = vmatprep.mubr.bf16.mxu0 %v3894
      %4104 = vmatmul.mubr.bf16.gmra.mxu0 %v3867
      %v4105 = vpop.f32.mrf.mxu0
      %v4106 = vadd.f32 %v3949, %v4105
      %v4107 = vpop.f32.mrf.mxu0
      %v4108 = vpop.f32.mrf.mxu0
      %v4109 = vadd.f32 %v3949, %v4108
      %v4110 = vpop.f32.mrf.mxu0
      %4111 = vmatprep.mubr.bf16.mxu0 %v3898
      %4112 = vmatmul.mubr.bf16.gmra.mxu0 %v3870
      %v4113 = vpop.f32.mrf.mxu0
      %v4114 = vadd.f32 %v3949, %v4113
      %v4115 = vpop.f32.mrf.mxu0
      %v4116 = vpop.f32.mrf.mxu0
      %v4117 = vadd.f32 %v3949, %v4116
      %v4118 = vpop.f32.mrf.mxu0
      %4119 = vmatprep.mubr.bf16.mxu0 %v3902
      %4120 = vmatmul.mubr.bf16.gmra.mxu0 %v3873
      %v4121 = vpop.f32.mrf.mxu0
      %v4122 = vadd.f32 %v3949, %v4121
      %v4123 = vpop.f32.mrf.mxu0
      %v4124 = vpop.f32.mrf.mxu0
      %v4125 = vadd.f32 %v3949, %v4124
      %v4126 = vpop.f32.mrf.mxu0
      %4127 = vmatprep.mubr.bf16.mxu0 %v3906
      %4128 = vmatmul.mubr.bf16.gmra.mxu0 %v3876
      %v4129 = vpop.f32.mrf.mxu0
      %v4130 = vadd.f32 %v3949, %v4129
      %v4131 = vpop.f32.mrf.mxu0
      %v4132 = vpop.f32.mrf.mxu0
      %v4133 = vadd.f32 %v3949, %v4132
      %v4134 = vpop.f32.mrf.mxu0
      %4135 = vmatprep.mubr.bf16.mxu0 %v3910
      %4136 = vmatmul.mubr.bf16.gmra.mxu0 %v3879
      %v4137 = vpop.f32.mrf.mxu0
      %v4138 = vadd.f32 %v3949, %v4137
      %v4139 = vpop.f32.mrf.mxu0
      %v4140 = vpop.f32.mrf.mxu0
      %v4141 = vadd.f32 %v3949, %v4140
      %v4142 = vpop.f32.mrf.mxu0
      %4143 = vdwg.mxu0
      %vm4144 = vcmp.ge.f32.partialorder %v4082, 0.0
      %vm4145 = vcmp.ge.f32.partialorder %v4085, 0.0
      %vm4146 = vcmp.ge.f32.partialorder %v4090, 0.0
      %vm4147 = vcmp.ge.f32.partialorder %v4093, 0.0
      %vm4148 = vcmp.ge.f32.partialorder %v4098, 0.0
      %vm4149 = vcmp.ge.f32.partialorder %v4101, 0.0
      %vm4150 = vcmp.ge.f32.partialorder %v4106, 0.0
      %vm4151 = vcmp.ge.f32.partialorder %v4109, 0.0
      %vm4152 = vcmp.ge.f32.partialorder %v4114, 0.0
      %vm4153 = vcmp.ge.f32.partialorder %v4117, 0.0
      %vm4154 = vcmp.ge.f32.partialorder %v4122, 0.0
      %vm4155 = vcmp.ge.f32.partialorder %v4125, 0.0
      %vm4156 = vcmp.ge.f32.partialorder %v4130, 0.0
      %vm4157 = vcmp.ge.f32.partialorder %v4133, 0.0
      %vm4158 = vcmp.ge.f32.partialorder %v4138, 0.0
      %vm4159 = vcmp.ge.f32.partialorder %v4141, 0.0
      %v4160 = vmul.f32 %v4082, 0.01
      %v4161 = vmul.f32 %v4085, 0.01
      %v4162 = vmul.f32 %v4090, 0.01
      %v4163 = vmul.f32 %v4093, 0.01
      %v4164 = vmul.f32 %v4098, 0.01
      %v4165 = vmul.f32 %v4101, 0.01
      %v4166 = vmul.f32 %v4106, 0.01
      %v4167 = vmul.f32 %v4109, 0.01
      %v4168 = vmul.f32 %v4114, 0.01
      %v4169 = vmul.f32 %v4117, 0.01
      %v4170 = vmul.f32 %v4122, 0.01
      %v4171 = vmul.f32 %v4125, 0.01
      %v4172 = vmul.f32 %v4130, 0.01
      %v4173 = vmul.f32 %v4133, 0.01
      %v4174 = vmul.f32 %v4138, 0.01
      %v4175 = vmul.f32 %v4141, 0.01
      %v4176 = vsel %vm4144, %v4082, %v4160
      %v4177 = vsel %vm4145, %v4085, %v4161
      %v4178 = vsel %vm4146, %v4090, %v4162
      %v4179 = vsel %vm4147, %v4093, %v4163
      %v4180 = vsel %vm4148, %v4098, %v4164
      %v4181 = vsel %vm4149, %v4101, %v4165
      %v4182 = vsel %vm4150, %v4106, %v4166
      %v4183 = vsel %vm4151, %v4109, %v4167
      %v4184 = vsel %vm4152, %v4114, %v4168
      %v4185 = vsel %vm4153, %v4117, %v4169
      %v4186 = vsel %vm4154, %v4122, %v4170
      %v4187 = vsel %vm4155, %v4125, %v4171
      %v4188 = vsel %vm4156, %v4130, %v4172
      %v4189 = vsel %vm4157, %v4133, %v4173
      %v4190 = vsel %vm4158, %v4138, %v4174
      %v4191 = vsel %vm4159, %v4141, %v4175
      %vm4192 = vcmp.lt.s32.totalorder %v848, 13
      %vm4193 = vcmp.lt.s32.totalorder %v849, 13
      %vm4194 = vcmp.lt.s32.totalorder %v850, 13
      %vm4195 = vcmp.lt.s32.totalorder %v851, 13
      %vm4196 = vcmp.lt.s32.totalorder %v852, 13
      %vm4197 = vcmp.lt.s32.totalorder %v853, 13
      %vm4198 = vcmp.lt.s32.totalorder %v854, 13
      %vm4199 = vcmp.lt.s32.totalorder %v855, 13
      %vm4200 = vcmp.lt.s32.totalorder %v856, 13
      %vm4201 = vcmp.lt.s32.totalorder %v857, 13
      %vm4202 = vcmp.lt.s32.totalorder %v858, 13
      %vm4203 = vcmp.lt.s32.totalorder %v859, 13
      %vm4204 = vcmp.lt.s32.totalorder %v860, 13
      %vm4205 = vcmp.lt.s32.totalorder %v861, 13
      %vm4206 = vcmp.lt.s32.totalorder %v862, 13
      %vm4207 = vcmp.lt.s32.totalorder %v863, 13
      %v4208 = vsel %vm4192, 1, 0
      %v4209 = vsel %vm4193, 1, 0
      %v4210 = vsel %vm4194, 1, 0
      %v4211 = vsel %vm4195, 1, 0
      %v4212 = vsel %vm4196, 1, 0
      %v4213 = vsel %vm4197, 1, 0
      %v4214 = vsel %vm4198, 1, 0
      %v4215 = vsel %vm4199, 1, 0
      %v4216 = vsel %vm4200, 1, 0
      %v4217 = vsel %vm4201, 1, 0
      %v4218 = vsel %vm4202, 1, 0
      %v4219 = vsel %vm4203, 1, 0
      %v4220 = vsel %vm4204, 1, 0
      %v4221 = vsel %vm4205, 1, 0
      %v4222 = vsel %vm4206, 1, 0
      %v4223 = vsel %vm4207, 1, 0
      %vm4224 = vcmp.eq.s32.totalorder %v4208, 1
      %vm4225 = vcmp.eq.s32.totalorder %v4209, 1
      %vm4226 = vcmp.eq.s32.totalorder %v4210, 1
      %vm4227 = vcmp.eq.s32.totalorder %v4211, 1
      %vm4228 = vcmp.eq.s32.totalorder %v4212, 1
      %vm4229 = vcmp.eq.s32.totalorder %v4213, 1
      %vm4230 = vcmp.eq.s32.totalorder %v4214, 1
      %vm4231 = vcmp.eq.s32.totalorder %v4215, 1
      %vm4232 = vcmp.eq.s32.totalorder %v4216, 1
      %vm4233 = vcmp.eq.s32.totalorder %v4217, 1
      %vm4234 = vcmp.eq.s32.totalorder %v4218, 1
      %vm4235 = vcmp.eq.s32.totalorder %v4219, 1
      %vm4236 = vcmp.eq.s32.totalorder %v4220, 1
      %vm4237 = vcmp.eq.s32.totalorder %v4221, 1
      %vm4238 = vcmp.eq.s32.totalorder %v4222, 1
      %vm4239 = vcmp.eq.s32.totalorder %v4223, 1
      %v4240 = vsel %vm4224, %v4176, 0.0
      %v4241 = vsel %vm4225, %v4177, 0.0
      %v4242 = vsel %vm4226, %v4178, 0.0
      %v4243 = vsel %vm4227, %v4179, 0.0
      %v4244 = vsel %vm4228, %v4180, 0.0
      %v4245 = vsel %vm4229, %v4181, 0.0
      %v4246 = vsel %vm4230, %v4182, 0.0
      %v4247 = vsel %vm4231, %v4183, 0.0
      %v4248 = vsel %vm4232, %v4184, 0.0
      %v4249 = vsel %vm4233, %v4185, 0.0
      %v4250 = vsel %vm4234, %v4186, 0.0
      %v4251 = vsel %vm4235, %v4187, 0.0
      %v4252 = vsel %vm4236, %v4188, 0.0
      %v4253 = vsel %vm4237, %v4189, 0.0
      %v4254 = vsel %vm4238, %v4190, 0.0
      %v4255 = vsel %vm4239, %v4191, 0.0
      %v4256 = vpack.c.bf16 %v4241, %v4240
      %v4257 = vpack.c.bf16 %v4243, %v4242
      %v4258 = vpack.c.bf16 %v4245, %v4244
      %v4259 = vpack.c.bf16 %v4247, %v4246
      %v4260 = vpack.c.bf16 %v4249, %v4248
      %v4261 = vpack.c.bf16 %v4251, %v4250
      %v4262 = vpack.c.bf16 %v4253, %v4252
      %v4263 = vpack.c.bf16 %v4255, %v4254
      %v4264 = vld [vmem:[%s15] sm:$0x1]
      %v4266 = vshrl.u32 %v4256, 16
      %v4268 = vrot.slane %v4266, 7
      %v4269 = vshll.u32 %v4256, 16
      %v4271 = vor.u32 %v4268, %v4269
      %v4273 = vshrl.u32 %v4257, 16
      %v4275 = vrot.slane %v4273, 7
      %v4276 = vshll.u32 %v4257, 16
      %v4278 = vor.u32 %v4275, %v4276
      %v4279 = vsel %vm2971, %v4268, %v4278
      %v4281 = vshrl.u32 %v4258, 16
      %v4283 = vrot.slane %v4281, 7
      %v4284 = vshll.u32 %v4258, 16
      %v4286 = vor.u32 %v4283, %v4284
      %v4287 = vsel %vm2971, %v4275, %v4286
      %v4289 = vshrl.u32 %v4259, 16
      %v4291 = vrot.slane %v4289, 7
      %v4292 = vshll.u32 %v4259, 16
      %v4294 = vor.u32 %v4291, %v4292
      %v4295 = vsel %vm2971, %v4283, %v4294
      %v4297 = vshrl.u32 %v4260, 16
      %v4299 = vrot.slane %v4297, 7
      %v4300 = vshll.u32 %v4260, 16
      %v4302 = vor.u32 %v4299, %v4300
      %v4303 = vsel %vm2971, %v4291, %v4302
      %v4305 = vshrl.u32 %v4261, 16
      %v4307 = vrot.slane %v4305, 7
      %v4308 = vshll.u32 %v4261, 16
      %v4310 = vor.u32 %v4307, %v4308
      %v4311 = vsel %vm2971, %v4299, %v4310
      %v4313 = vshrl.u32 %v4262, 16
      %v4315 = vrot.slane %v4313, 7
      %v4316 = vshll.u32 %v4262, 16
      %v4318 = vor.u32 %v4315, %v4316
      %v4319 = vsel %vm2971, %v4307, %v4318
      %v4321 = vshrl.u32 %v4263, 16
      %v4323 = vrot.slane %v4321, 7
      %v4324 = vshll.u32 %v4263, 16
      %v4326 = vor.u32 %v4323, %v4324
      %v4327 = vsel %vm2971, %v4315, %v4326
      %v4329 = vsel %vm3044, 0, %v4271
      %v4338 = vrot.slane %v4256, 7
      %v4339 = vrot.slane %v4257, 7
      %v4340 = vsel %vm3043, %v4338, %v4339
      %v4341 = vrot.slane %v4258, 7
      %v4342 = vsel %vm3043, %v4339, %v4341
      %v4343 = vrot.slane %v4259, 7
      %v4344 = vsel %vm3043, %v4341, %v4343
      %v4345 = vrot.slane %v4260, 7
      %v4346 = vsel %vm3043, %v4343, %v4345
      %v4347 = vrot.slane %v4261, 7
      %v4348 = vsel %vm3043, %v4345, %v4347
      %v4349 = vrot.slane %v4262, 7
      %v4350 = vsel %vm3043, %v4347, %v4349
      %v4351 = vrot.slane %v4263, 7
      %v4352 = vsel %vm3043, %v4349, %v4351
      %v4354 = vsel %vm3076, 0, %v4338
      %4356 = vrot.lane.b32.xlu0 %v4329, 32
      %v4357 = vpop.permute.xlu0 %4356
      %4358 = vrot.lane.b32.xlu0 %v4279, 32
      %v4359 = vpop.permute.xlu0 %4358
      %4360 = vrot.lane.b32.xlu0 %v4287, 32
      %v4361 = vpop.permute.xlu0 %4360
      %4362 = vrot.lane.b32.xlu0 %v4295, 32
      %v4363 = vpop.permute.xlu0 %4362
      %4364 = vrot.lane.b32.xlu0 %v4303, 32
      %v4365 = vpop.permute.xlu0 %4364
      %4366 = vrot.lane.b32.xlu0 %v4311, 32
      %v4367 = vpop.permute.xlu0 %4366
      %4368 = vrot.lane.b32.xlu0 %v4319, 32
      %v4369 = vpop.permute.xlu0 %4368
      %4370 = vrot.lane.b32.xlu0 %v4327, 32
      %v4371 = vpop.permute.xlu0 %4370
      %4373 = vrot.lane.b32.xlu0 %v4354, 64
      %v4374 = vpop.permute.xlu0 %4373
      %4375 = vrot.lane.b32.xlu0 %v4340, 64
      %v4376 = vpop.permute.xlu0 %4375
      %4377 = vrot.lane.b32.xlu0 %v4342, 64
      %v4378 = vpop.permute.xlu0 %4377
      %4379 = vrot.lane.b32.xlu0 %v4344, 64
      %v4380 = vpop.permute.xlu0 %4379
      %4381 = vrot.lane.b32.xlu0 %v4346, 64
      %v4382 = vpop.permute.xlu0 %4381
      %4383 = vrot.lane.b32.xlu0 %v4348, 64
      %v4384 = vpop.permute.xlu0 %4383
      %4385 = vrot.lane.b32.xlu0 %v4350, 64
      %v4386 = vpop.permute.xlu0 %4385
      %4387 = vrot.lane.b32.xlu0 %v4352, 64
      %v4388 = vpop.permute.xlu0 %4387
      %v4390 = vsel %vm1666, %v4256, %v4357
      %v4392 = vsel %vm1666, %v4257, %v4359
      %v4394 = vsel %vm1666, %v4258, %v4361
      %v4396 = vsel %vm1666, %v4259, %v4363
      %v4398 = vsel %vm1666, %v4260, %v4365
      %v4400 = vsel %vm1666, %v4261, %v4367
      %v4402 = vsel %vm1666, %v4262, %v4369
      %v4404 = vsel %vm1666, %v4263, %v4371
      %v4406 = vsel %vm1700, %v4390, %v4374
      %v4408 = vsel %vm1700, %v4392, %v4376
      %v4410 = vsel %vm1700, %v4394, %v4378
      %v4412 = vsel %vm1700, %v4396, %v4380
      %v4414 = vsel %vm1700, %v4398, %v4382
      %v4416 = vsel %vm1700, %v4400, %v4384
      %v4418 = vsel %vm1700, %v4402, %v4386
      %v4420 = vsel %vm1700, %v4404, %v4388
      %v4421 = vld [vmem:[%s13] sm:$0xf]
      %v4422 = vld [vmem:[%s13 + $0x4] sm:$0xf]
      %v4423 = vld [vmem:[%s13 + $0x8] sm:$0xf]
      %v4424 = vld [vmem:[%s13 + $0xc] sm:$0xf]
      %v4425 = vld [vmem:[%s13 + $0x10] sm:$0xf]
      %v4426 = vld [vmem:[%s13 + $0x14] sm:$0xf]
      %v4427 = vld [vmem:[%s13 + $0x18] sm:$0xf]
      %v4428 = vld [vmem:[%s13 + $0x1c] sm:$0xf]
      %v4429 = vld [vmem:[%s13 + $0x20] sm:$0xf]
      %v4430 = vld [vmem:[%s13 + $0x24] sm:$0xf]
      %v4431 = vld [vmem:[%s13 + $0x28] sm:$0xf]
      %v4432 = vld [vmem:[%s13 + $0x2c] sm:$0xf]
      %v4434 = vlaneseq
      %v4435 = vshrl.u32 %v4434, 7
      %v4436 = vsub.s32 0, %v4435
      %v4437 = vrot.slane %v4264, %v4436
      %v4451 = vunpack.c.l.b16 %v4421
      %v4452 = vunpack.c.l.b16 %v4422
      %v4453 = vunpack.c.l.b16 %v4423
      %v4454 = vunpack.c.l.b16 %v4424
      %v4455 = vunpack.c.l.b16 %v4425
      %v4456 = vunpack.c.l.b16 %v4426
      %v4457 = vunpack.c.l.b16 %v4427
      %v4458 = vunpack.c.l.b16 %v4428
      %v4459 = vunpack.c.l.b16 %v4429
      %v4460 = vunpack.c.l.b16 %v4430
      %v4461 = vunpack.c.l.b16 %v4431
      %v4462 = vunpack.c.l.b16 %v4432
      %v4463 = vpack.c.b16 %v4452, %v4451
      %v4464 = vpack.c.b16 %v4454, %v4453
      %v4465 = vpack.c.b16 %v4456, %v4455
      %v4466 = vpack.c.b16 %v4458, %v4457
      %v4467 = vpack.c.b16 %v4460, %v4459
      %v4468 = vpack.c.b16 %v4462, %v4461
      %v4475 = vsel %vm2142, %v4406, 0
      %v4477 = vsel %vm2142, %v4408, 0
      %v4479 = vsel %vm2142, %v4410, 0
      %v4481 = vsel %vm2142, %v4412, 0
      %v4483 = vsel %vm2142, %v4414, 0
      %v4485 = vsel %vm2142, %v4416, 0
      %v4487 = vsel %vm2142, %v4418, 0
      %v4489 = vsel %vm2142, %v4420, 0
      %4491 = vmatprep.subr.bf16.mxu0 0
      %4492 = vmatpush1.bf16.msra.mxu0 0
      %4493 = vmatprep.subr.bf16.mxu0 0
      %4494 = vmatpush1.bf16.msra.mxu0 0
      %4495 = vmatprep.subr.bf16.mxu0 0
      %4496 = vmatpush1.bf16.msra.mxu0 %v4468
      %4497 = vmatprep.subr.bf16.mxu0 0
      %4498 = vmatpush1.bf16.msra.mxu0 %v4467
      %4499 = vmatprep.subr.bf16.mxu0 0
      %4500 = vmatpush1.bf16.msra.mxu0 %v4466
      %4501 = vmatprep.subr.bf16.mxu0 0
      %4502 = vmatpush1.bf16.msra.mxu0 %v4465
      %4503 = vmatprep.subr.bf16.mxu0 0
      %4504 = vmatpush1.bf16.msra.mxu0 %v4464
      %4505 = vmatprep.subr.bf16.mxu0 0
      %4506 = vmatpush1.bf16.msra.mxu0 %v4463
      %4507 = vmatprep.subr.bf16.mxu0 0
      %4508 = vmatpush2.bf16.msra.mxu0 0
      %4509 = vmatprep.subr.bf16.mxu0 0
      %4510 = vmatpush2.bf16.msra.mxu0 0
      %4511 = vmatprep.subr.bf16.mxu0 0
      %4512 = vmatpush2.bf16.msra.mxu0 0
      %4513 = vmatprep.subr.bf16.mxu0 0
      %4514 = vmatpush2.bf16.msra.mxu0 0
      %4515 = vmatprep.subr.bf16.mxu0 0
      %4516 = vmatpush2.bf16.msra.mxu0 0
      %4517 = vmatprep.subr.bf16.mxu0 0
      %4518 = vmatpush2.bf16.msra.mxu0 0
      %4519 = vmatprep.subr.bf16.mxu0 0
      %4520 = vmatpush2.bf16.msra.mxu0 0
      %4521 = vmatprep.subr.bf16.mxu0 0
      %4522 = vmatpush2.bf16.msra.mxu0 0
      %4523 = vmatprep.mubr.bf16.mxu0 0
      %4524 = vmatmul.mubr.bf16.gmra.mxu0 %v4475
      %v4525 = vpop.f32.mrf.mxu0
      %v4526 = vadd.f32 %v4437, %v4525
      %v4527 = vpop.f32.mrf.mxu0
      %v4528 = vpop.f32.mrf.mxu0
      %v4529 = vadd.f32 %v4437, %v4528
      %v4530 = vpop.f32.mrf.mxu0
      %4531 = vmatprep.mubr.bf16.mxu0 0
      %4532 = vmatmul.mubr.bf16.gmra.mxu0 %v4477
      %v4533 = vpop.f32.mrf.mxu0
      %v4534 = vadd.f32 %v4437, %v4533
      %v4535 = vpop.f32.mrf.mxu0
      %v4536 = vpop.f32.mrf.mxu0
      %v4537 = vadd.f32 %v4437, %v4536
      %v4538 = vpop.f32.mrf.mxu0
      %4539 = vmatprep.mubr.bf16.mxu0 0
      %4540 = vmatmul.mubr.bf16.gmra.mxu0 %v4479
      %v4541 = vpop.f32.mrf.mxu0
      %v4542 = vadd.f32 %v4437, %v4541
      %v4543 = vpop.f32.mrf.mxu0
      %v4544 = vpop.f32.mrf.mxu0
      %v4545 = vadd.f32 %v4437, %v4544
      %v4546 = vpop.f32.mrf.mxu0
      %4547 = vmatprep.mubr.bf16.mxu0 0
      %4548 = vmatmul.mubr.bf16.gmra.mxu0 %v4481
      %v4549 = vpop.f32.mrf.mxu0
      %v4550 = vadd.f32 %v4437, %v4549
      %v4551 = vpop.f32.mrf.mxu0
      %v4552 = vpop.f32.mrf.mxu0
      %v4553 = vadd.f32 %v4437, %v4552
      %v4554 = vpop.f32.mrf.mxu0
      %4555 = vmatprep.mubr.bf16.mxu0 0
      %4556 = vmatmul.mubr.bf16.gmra.mxu0 %v4483
      %v4557 = vpop.f32.mrf.mxu0
      %v4558 = vadd.f32 %v4437, %v4557
      %v4559 = vpop.f32.mrf.mxu0
      %v4560 = vpop.f32.mrf.mxu0
      %v4561 = vadd.f32 %v4437, %v4560
      %v4562 = vpop.f32.mrf.mxu0
      %4563 = vmatprep.mubr.bf16.mxu0 0
      %4564 = vmatmul.mubr.bf16.gmra.mxu0 %v4485
      %v4565 = vpop.f32.mrf.mxu0
      %v4566 = vadd.f32 %v4437, %v4565
      %v4567 = vpop.f32.mrf.mxu0
      %v4568 = vpop.f32.mrf.mxu0
      %v4569 = vadd.f32 %v4437, %v4568
      %v4570 = vpop.f32.mrf.mxu0
      %4571 = vmatprep.mubr.bf16.mxu0 0
      %4572 = vmatmul.mubr.bf16.gmra.mxu0 %v4487
      %v4573 = vpop.f32.mrf.mxu0
      %v4574 = vadd.f32 %v4437, %v4573
      %v4575 = vpop.f32.mrf.mxu0
      %v4576 = vpop.f32.mrf.mxu0
      %v4577 = vadd.f32 %v4437, %v4576
      %v4578 = vpop.f32.mrf.mxu0
      %4579 = vmatprep.mubr.bf16.mxu0 0
      %4580 = vmatmul.mubr.bf16.gmra.mxu0 %v4489
      %v4581 = vpop.f32.mrf.mxu0
      %v4582 = vadd.f32 %v4437, %v4581
      %v4583 = vpop.f32.mrf.mxu0
      %v4584 = vpop.f32.mrf.mxu0
      %v4585 = vadd.f32 %v4437, %v4584
      %v4586 = vpop.f32.mrf.mxu0
      %4587 = vdwg.mxu0
      %vm4588 = vcmp.ge.f32.partialorder %v4526, 0.0
      %vm4589 = vcmp.ge.f32.partialorder %v4529, 0.0
      %vm4590 = vcmp.ge.f32.partialorder %v4534, 0.0
      %vm4591 = vcmp.ge.f32.partialorder %v4537, 0.0
      %vm4592 = vcmp.ge.f32.partialorder %v4542, 0.0
      %vm4593 = vcmp.ge.f32.partialorder %v4545, 0.0
      %vm4594 = vcmp.ge.f32.partialorder %v4550, 0.0
      %vm4595 = vcmp.ge.f32.partialorder %v4553, 0.0
      %vm4596 = vcmp.ge.f32.partialorder %v4558, 0.0
      %vm4597 = vcmp.ge.f32.partialorder %v4561, 0.0
      %vm4598 = vcmp.ge.f32.partialorder %v4566, 0.0
      %vm4599 = vcmp.ge.f32.partialorder %v4569, 0.0
      %vm4600 = vcmp.ge.f32.partialorder %v4574, 0.0
      %vm4601 = vcmp.ge.f32.partialorder %v4577, 0.0
      %vm4602 = vcmp.ge.f32.partialorder %v4582, 0.0
      %vm4603 = vcmp.ge.f32.partialorder %v4585, 0.0
      %v4604 = vmul.f32 %v4526, 0.01
      %v4605 = vmul.f32 %v4529, 0.01
      %v4606 = vmul.f32 %v4534, 0.01
      %v4607 = vmul.f32 %v4537, 0.01
      %v4608 = vmul.f32 %v4542, 0.01
      %v4609 = vmul.f32 %v4545, 0.01
      %v4610 = vmul.f32 %v4550, 0.01
      %v4611 = vmul.f32 %v4553, 0.01
      %v4612 = vmul.f32 %v4558, 0.01
      %v4613 = vmul.f32 %v4561, 0.01
      %v4614 = vmul.f32 %v4566, 0.01
      %v4615 = vmul.f32 %v4569, 0.01
      %v4616 = vmul.f32 %v4574, 0.01
      %v4617 = vmul.f32 %v4577, 0.01
      %v4618 = vmul.f32 %v4582, 0.01
      %v4619 = vmul.f32 %v4585, 0.01
      %v4620 = vsel %vm4588, %v4526, %v4604
      %v4621 = vsel %vm4589, %v4529, %v4605
      %v4622 = vsel %vm4590, %v4534, %v4606
      %v4623 = vsel %vm4591, %v4537, %v4607
      %v4624 = vsel %vm4592, %v4542, %v4608
      %v4625 = vsel %vm4593, %v4545, %v4609
      %v4626 = vsel %vm4594, %v4550, %v4610
      %v4627 = vsel %vm4595, %v4553, %v4611
      %v4628 = vsel %vm4596, %v4558, %v4612
      %v4629 = vsel %vm4597, %v4561, %v4613
      %v4630 = vsel %vm4598, %v4566, %v4614
      %v4631 = vsel %vm4599, %v4569, %v4615
      %v4632 = vsel %vm4600, %v4574, %v4616
      %v4633 = vsel %vm4601, %v4577, %v4617
      %v4634 = vsel %vm4602, %v4582, %v4618
      %v4635 = vsel %vm4603, %v4585, %v4619
      %vm4636 = vcmp.lt.s32.totalorder %v848, 15
      %vm4637 = vcmp.lt.s32.totalorder %v849, 15
      %vm4638 = vcmp.lt.s32.totalorder %v850, 15
      %vm4639 = vcmp.lt.s32.totalorder %v851, 15
      %vm4640 = vcmp.lt.s32.totalorder %v852, 15
      %vm4641 = vcmp.lt.s32.totalorder %v853, 15
      %vm4642 = vcmp.lt.s32.totalorder %v854, 15
      %vm4643 = vcmp.lt.s32.totalorder %v855, 15
      %vm4644 = vcmp.lt.s32.totalorder %v856, 15
      %vm4645 = vcmp.lt.s32.totalorder %v857, 15
      %vm4646 = vcmp.lt.s32.totalorder %v858, 15
      %vm4647 = vcmp.lt.s32.totalorder %v859, 15
      %vm4648 = vcmp.lt.s32.totalorder %v860, 15
      %vm4649 = vcmp.lt.s32.totalorder %v861, 15
      %vm4650 = vcmp.lt.s32.totalorder %v862, 15
      %vm4651 = vcmp.lt.s32.totalorder %v863, 15
      %v4652 = vsel %vm4636, 1, 0
      %v4653 = vsel %vm4637, 1, 0
      %v4654 = vsel %vm4638, 1, 0
      %v4655 = vsel %vm4639, 1, 0
      %v4656 = vsel %vm4640, 1, 0
      %v4657 = vsel %vm4641, 1, 0
      %v4658 = vsel %vm4642, 1, 0
      %v4659 = vsel %vm4643, 1, 0
      %v4660 = vsel %vm4644, 1, 0
      %v4661 = vsel %vm4645, 1, 0
      %v4662 = vsel %vm4646, 1, 0
      %v4663 = vsel %vm4647, 1, 0
      %v4664 = vsel %vm4648, 1, 0
      %v4665 = vsel %vm4649, 1, 0
      %v4666 = vsel %vm4650, 1, 0
      %v4667 = vsel %vm4651, 1, 0
      %vm4668 = vcmp.eq.s32.totalorder %v4652, 1
      %vm4669 = vcmp.eq.s32.totalorder %v4653, 1
      %vm4670 = vcmp.eq.s32.totalorder %v4654, 1
      %vm4671 = vcmp.eq.s32.totalorder %v4655, 1
      %vm4672 = vcmp.eq.s32.totalorder %v4656, 1
      %vm4673 = vcmp.eq.s32.totalorder %v4657, 1
      %vm4674 = vcmp.eq.s32.totalorder %v4658, 1
      %vm4675 = vcmp.eq.s32.totalorder %v4659, 1
      %vm4676 = vcmp.eq.s32.totalorder %v4660, 1
      %vm4677 = vcmp.eq.s32.totalorder %v4661, 1
      %vm4678 = vcmp.eq.s32.totalorder %v4662, 1
      %vm4679 = vcmp.eq.s32.totalorder %v4663, 1
      %vm4680 = vcmp.eq.s32.totalorder %v4664, 1
      %vm4681 = vcmp.eq.s32.totalorder %v4665, 1
      %vm4682 = vcmp.eq.s32.totalorder %v4666, 1
      %vm4683 = vcmp.eq.s32.totalorder %v4667, 1
      %v4684 = vsel %vm4668, %v4620, 0.0
      %v4685 = vsel %vm4669, %v4621, 0.0
      %v4686 = vsel %vm4670, %v4622, 0.0
      %v4687 = vsel %vm4671, %v4623, 0.0
      %v4688 = vsel %vm4672, %v4624, 0.0
      %v4689 = vsel %vm4673, %v4625, 0.0
      %v4690 = vsel %vm4674, %v4626, 0.0
      %v4691 = vsel %vm4675, %v4627, 0.0
      %v4692 = vsel %vm4676, %v4628, 0.0
      %v4693 = vsel %vm4677, %v4629, 0.0
      %v4694 = vsel %vm4678, %v4630, 0.0
      %v4695 = vsel %vm4679, %v4631, 0.0
      %v4696 = vsel %vm4680, %v4632, 0.0
      %v4697 = vsel %vm4681, %v4633, 0.0
      %v4698 = vsel %vm4682, %v4634, 0.0
      %v4699 = vsel %vm4683, %v4635, 0.0
      %v4700 = vpack.c.bf16 %v4685, %v4684
      %v4701 = vpack.c.bf16 %v4687, %v4686
      %v4702 = vpack.c.bf16 %v4689, %v4688
      %v4703 = vpack.c.bf16 %v4691, %v4690
      %v4704 = vpack.c.bf16 %v4693, %v4692
      %v4705 = vpack.c.bf16 %v4695, %v4694
      %v4706 = vpack.c.bf16 %v4697, %v4696
      %v4707 = vpack.c.bf16 %v4699, %v4698
      %v4708 = vld [vmem:[%s14] sm:$0xf]
      %v4709 = vld [vmem:[%s14 + $0x4] sm:$0xf]
      %v4710 = vld [vmem:[%s14 + $0x8] sm:$0xf]
      %v4711 = vld [vmem:[%s14 + $0xc] sm:$0xf]
      %v4712 = vld [vmem:[%s14 + $0x10] sm:$0xf]
      %v4713 = vld [vmem:[%s14 + $0x14] sm:$0xf]
      %v4714 = vld [vmem:[%s14 + $0x18] sm:$0xf]
      %v4715 = vld [vmem:[%s14 + $0x1c] sm:$0xf]
      %v4724 = vunpack.c.l.b16 %v4708
      %v4725 = vunpack.c.l.b16 %v4709
      %v4726 = vunpack.c.l.b16 %v4710
      %v4727 = vunpack.c.l.b16 %v4711
      %v4728 = vunpack.c.l.b16 %v4712
      %v4729 = vunpack.c.l.b16 %v4713
      %v4730 = vunpack.c.l.b16 %v4714
      %v4731 = vunpack.c.l.b16 %v4715
      %v4732 = vpack.c.b16 %v4725, %v4724
      %v4733 = vpack.c.b16 %v4727, %v4726
      %v4734 = vpack.c.b16 %v4729, %v4728
      %v4735 = vpack.c.b16 %v4731, %v4730
      %v4740 = vsel %vm1700, %v4390, 0
      %v4742 = vsel %vm1700, %v4392, 0
      %v4744 = vsel %vm1700, %v4394, 0
      %v4746 = vsel %vm1700, %v4396, 0
      %v4748 = vsel %vm1700, %v4398, 0
      %v4750 = vsel %vm1700, %v4400, 0
      %v4752 = vsel %vm1700, %v4402, 0
      %v4754 = vsel %vm1700, %v4404, 0
      %4756 = vmatprep.subr.bf16.mxu0 0
      %4757 = vmatpush1.bf16.msra.mxu0 0
      %4758 = vmatprep.subr.bf16.mxu0 0
      %4759 = vmatpush1.bf16.msra.mxu0 0
      %4760 = vmatprep.subr.bf16.mxu0 0
      %4761 = vmatpush1.bf16.msra.mxu0 0
      %4762 = vmatprep.subr.bf16.mxu0 0
      %4763 = vmatpush1.bf16.msra.mxu0 0
      %4764 = vmatprep.subr.bf16.mxu0 0
      %4765 = vmatpush1.bf16.msra.mxu0 %v4735
      %4766 = vmatprep.subr.bf16.mxu0 0
      %4767 = vmatpush1.bf16.msra.mxu0 %v4734
      %4768 = vmatprep.subr.bf16.mxu0 0
      %4769 = vmatpush1.bf16.msra.mxu0 %v4733
      %4770 = vmatprep.subr.bf16.mxu0 0
      %4771 = vmatpush1.bf16.msra.mxu0 %v4732
      %4772 = vmatprep.subr.bf16.mxu0 0
      %4773 = vmatpush2.bf16.msra.mxu0 0
      %4774 = vmatprep.subr.bf16.mxu0 0
      %4775 = vmatpush2.bf16.msra.mxu0 0
      %4776 = vmatprep.subr.bf16.mxu0 0
      %4777 = vmatpush2.bf16.msra.mxu0 0
      %4778 = vmatprep.subr.bf16.mxu0 0
      %4779 = vmatpush2.bf16.msra.mxu0 0
      %4780 = vmatprep.subr.bf16.mxu0 0
      %4781 = vmatpush2.bf16.msra.mxu0 0
      %4782 = vmatprep.subr.bf16.mxu0 0
      %4783 = vmatpush2.bf16.msra.mxu0 0
      %4784 = vmatprep.subr.bf16.mxu0 0
      %4785 = vmatpush2.bf16.msra.mxu0 0
      %4786 = vmatprep.subr.bf16.mxu0 0
      %4787 = vmatpush2.bf16.msra.mxu0 0
      %4788 = vmatprep.mubr.bf16.mxu0 0
      %4789 = vmatmul.mubr.bf16.gmra.mxu0 %v4740
      %v4790 = vpop.f32.mrf.mxu0
      %v4791 = vadd.f32 %v4437, %v4790
      %v4792 = vpop.f32.mrf.mxu0
      %v4793 = vpop.f32.mrf.mxu0
      %v4794 = vadd.f32 %v4437, %v4793
      %v4795 = vpop.f32.mrf.mxu0
      %4796 = vmatprep.mubr.bf16.mxu0 0
      %4797 = vmatmul.mubr.bf16.gmra.mxu0 %v4742
      %v4798 = vpop.f32.mrf.mxu0
      %v4799 = vadd.f32 %v4437, %v4798
      %v4800 = vpop.f32.mrf.mxu0
      %v4801 = vpop.f32.mrf.mxu0
      %v4802 = vadd.f32 %v4437, %v4801
      %v4803 = vpop.f32.mrf.mxu0
      %4804 = vmatprep.mubr.bf16.mxu0 0
      %4805 = vmatmul.mubr.bf16.gmra.mxu0 %v4744
      %v4806 = vpop.f32.mrf.mxu0
      %v4807 = vadd.f32 %v4437, %v4806
      %v4808 = vpop.f32.mrf.mxu0
      %v4809 = vpop.f32.mrf.mxu0
      %v4810 = vadd.f32 %v4437, %v4809
      %v4811 = vpop.f32.mrf.mxu0
      %4812 = vmatprep.mubr.bf16.mxu0 0
      %4813 = vmatmul.mubr.bf16.gmra.mxu0 %v4746
      %v4814 = vpop.f32.mrf.mxu0
      %v4815 = vadd.f32 %v4437, %v4814
      %v4816 = vpop.f32.mrf.mxu0
      %v4817 = vpop.f32.mrf.mxu0
      %v4818 = vadd.f32 %v4437, %v4817
      %v4819 = vpop.f32.mrf.mxu0
      %4820 = vmatprep.mubr.bf16.mxu0 0
      %4821 = vmatmul.mubr.bf16.gmra.mxu0 %v4748
      %v4822 = vpop.f32.mrf.mxu0
      %v4823 = vadd.f32 %v4437, %v4822
      %v4824 = vpop.f32.mrf.mxu0
      %v4825 = vpop.f32.mrf.mxu0
      %v4826 = vadd.f32 %v4437, %v4825
      %v4827 = vpop.f32.mrf.mxu0
      %4828 = vmatprep.mubr.bf16.mxu0 0
      %4829 = vmatmul.mubr.bf16.gmra.mxu0 %v4750
      %v4830 = vpop.f32.mrf.mxu0
      %v4831 = vadd.f32 %v4437, %v4830
      %v4832 = vpop.f32.mrf.mxu0
      %v4833 = vpop.f32.mrf.mxu0
      %v4834 = vadd.f32 %v4437, %v4833
      %v4835 = vpop.f32.mrf.mxu0
      %4836 = vmatprep.mubr.bf16.mxu0 0
      %4837 = vmatmul.mubr.bf16.gmra.mxu0 %v4752
      %v4838 = vpop.f32.mrf.mxu0
      %v4839 = vadd.f32 %v4437, %v4838
      %v4840 = vpop.f32.mrf.mxu0
      %v4841 = vpop.f32.mrf.mxu0
      %v4842 = vadd.f32 %v4437, %v4841
      %v4843 = vpop.f32.mrf.mxu0
      %4844 = vmatprep.mubr.bf16.mxu0 0
      %4845 = vmatmul.mubr.bf16.gmra.mxu0 %v4754
      %v4846 = vpop.f32.mrf.mxu0
      %v4847 = vadd.f32 %v4437, %v4846
      %v4848 = vpop.f32.mrf.mxu0
      %v4849 = vpop.f32.mrf.mxu0
      %v4850 = vadd.f32 %v4437, %v4849
      %v4851 = vpop.f32.mrf.mxu0
      %4852 = vdwg.mxu0
      %vm4853 = vcmp.ge.f32.partialorder %v4791, 0.0
      %vm4854 = vcmp.ge.f32.partialorder %v4794, 0.0
      %vm4855 = vcmp.ge.f32.partialorder %v4799, 0.0
      %vm4856 = vcmp.ge.f32.partialorder %v4802, 0.0
      %vm4857 = vcmp.ge.f32.partialorder %v4807, 0.0
      %vm4858 = vcmp.ge.f32.partialorder %v4810, 0.0
      %vm4859 = vcmp.ge.f32.partialorder %v4815, 0.0
      %vm4860 = vcmp.ge.f32.partialorder %v4818, 0.0
      %vm4861 = vcmp.ge.f32.partialorder %v4823, 0.0
      %vm4862 = vcmp.ge.f32.partialorder %v4826, 0.0
      %vm4863 = vcmp.ge.f32.partialorder %v4831, 0.0
      %vm4864 = vcmp.ge.f32.partialorder %v4834, 0.0
      %vm4865 = vcmp.ge.f32.partialorder %v4839, 0.0
      %vm4866 = vcmp.ge.f32.partialorder %v4842, 0.0
      %vm4867 = vcmp.ge.f32.partialorder %v4847, 0.0
      %vm4868 = vcmp.ge.f32.partialorder %v4850, 0.0
      %v4869 = vmul.f32 %v4791, 0.01
      %v4870 = vmul.f32 %v4794, 0.01
      %v4871 = vmul.f32 %v4799, 0.01
      %v4872 = vmul.f32 %v4802, 0.01
      %v4873 = vmul.f32 %v4807, 0.01
      %v4874 = vmul.f32 %v4810, 0.01
      %v4875 = vmul.f32 %v4815, 0.01
      %v4876 = vmul.f32 %v4818, 0.01
      %v4877 = vmul.f32 %v4823, 0.01
      %v4878 = vmul.f32 %v4826, 0.01
      %v4879 = vmul.f32 %v4831, 0.01
      %v4880 = vmul.f32 %v4834, 0.01
      %v4881 = vmul.f32 %v4839, 0.01
      %v4882 = vmul.f32 %v4842, 0.01
      %v4883 = vmul.f32 %v4847, 0.01
      %v4884 = vmul.f32 %v4850, 0.01
      %v4885 = vsel %vm4853, %v4791, %v4869
      %v4886 = vsel %vm4854, %v4794, %v4870
      %v4887 = vsel %vm4855, %v4799, %v4871
      %v4888 = vsel %vm4856, %v4802, %v4872
      %v4889 = vsel %vm4857, %v4807, %v4873
      %v4890 = vsel %vm4858, %v4810, %v4874
      %v4891 = vsel %vm4859, %v4815, %v4875
      %v4892 = vsel %vm4860, %v4818, %v4876
      %v4893 = vsel %vm4861, %v4823, %v4877
      %v4894 = vsel %vm4862, %v4826, %v4878
      %v4895 = vsel %vm4863, %v4831, %v4879
      %v4896 = vsel %vm4864, %v4834, %v4880
      %v4897 = vsel %vm4865, %v4839, %v4881
      %v4898 = vsel %vm4866, %v4842, %v4882
      %v4899 = vsel %vm4867, %v4847, %v4883
      %v4900 = vsel %vm4868, %v4850, %v4884
      %vm4901 = vcmp.lt.s32.totalorder %v848, 14
      %vm4902 = vcmp.lt.s32.totalorder %v849, 14
      %vm4903 = vcmp.lt.s32.totalorder %v850, 14
      %vm4904 = vcmp.lt.s32.totalorder %v851, 14
      %vm4905 = vcmp.lt.s32.totalorder %v852, 14
      %vm4906 = vcmp.lt.s32.totalorder %v853, 14
      %vm4907 = vcmp.lt.s32.totalorder %v854, 14
      %vm4908 = vcmp.lt.s32.totalorder %v855, 14
      %vm4909 = vcmp.lt.s32.totalorder %v856, 14
      %vm4910 = vcmp.lt.s32.totalorder %v857, 14
      %vm4911 = vcmp.lt.s32.totalorder %v858, 14
      %vm4912 = vcmp.lt.s32.totalorder %v859, 14
      %vm4913 = vcmp.lt.s32.totalorder %v860, 14
      %vm4914 = vcmp.lt.s32.totalorder %v861, 14
      %vm4915 = vcmp.lt.s32.totalorder %v862, 14
      %vm4916 = vcmp.lt.s32.totalorder %v863, 14
      %v4917 = vsel %vm4901, 1, 0
      %v4918 = vsel %vm4902, 1, 0
      %v4919 = vsel %vm4903, 1, 0
      %v4920 = vsel %vm4904, 1, 0
      %v4921 = vsel %vm4905, 1, 0
      %v4922 = vsel %vm4906, 1, 0
      %v4923 = vsel %vm4907, 1, 0
      %v4924 = vsel %vm4908, 1, 0
      %v4925 = vsel %vm4909, 1, 0
      %v4926 = vsel %vm4910, 1, 0
      %v4927 = vsel %vm4911, 1, 0
      %v4928 = vsel %vm4912, 1, 0
      %v4929 = vsel %vm4913, 1, 0
      %v4930 = vsel %vm4914, 1, 0
      %v4931 = vsel %vm4915, 1, 0
      %v4932 = vsel %vm4916, 1, 0
      %vm4933 = vcmp.eq.s32.totalorder %v4917, 1
      %vm4934 = vcmp.eq.s32.totalorder %v4918, 1
      %vm4935 = vcmp.eq.s32.totalorder %v4919, 1
      %vm4936 = vcmp.eq.s32.totalorder %v4920, 1
      %vm4937 = vcmp.eq.s32.totalorder %v4921, 1
      %vm4938 = vcmp.eq.s32.totalorder %v4922, 1
      %vm4939 = vcmp.eq.s32.totalorder %v4923, 1
      %vm4940 = vcmp.eq.s32.totalorder %v4924, 1
      %vm4941 = vcmp.eq.s32.totalorder %v4925, 1
      %vm4942 = vcmp.eq.s32.totalorder %v4926, 1
      %vm4943 = vcmp.eq.s32.totalorder %v4927, 1
      %vm4944 = vcmp.eq.s32.totalorder %v4928, 1
      %vm4945 = vcmp.eq.s32.totalorder %v4929, 1
      %vm4946 = vcmp.eq.s32.totalorder %v4930, 1
      %vm4947 = vcmp.eq.s32.totalorder %v4931, 1
      %vm4948 = vcmp.eq.s32.totalorder %v4932, 1
      %v4949 = vsel %vm4933, %v4885, 0.0
      %v4950 = vsel %vm4934, %v4886, 0.0
      %v4951 = vsel %vm4935, %v4887, 0.0
      %v4952 = vsel %vm4936, %v4888, 0.0
      %v4953 = vsel %vm4937, %v4889, 0.0
      %v4954 = vsel %vm4938, %v4890, 0.0
      %v4955 = vsel %vm4939, %v4891, 0.0
      %v4956 = vsel %vm4940, %v4892, 0.0
      %v4957 = vsel %vm4941, %v4893, 0.0
      %v4958 = vsel %vm4942, %v4894, 0.0
      %v4959 = vsel %vm4943, %v4895, 0.0
      %v4960 = vsel %vm4944, %v4896, 0.0
      %v4961 = vsel %vm4945, %v4897, 0.0
      %v4962 = vsel %vm4946, %v4898, 0.0
      %v4963 = vsel %vm4947, %v4899, 0.0
      %v4964 = vsel %vm4948, %v4900, 0.0
      %v4965 = vpack.c.bf16 %v4950, %v4949
      %v4966 = vpack.c.bf16 %v4952, %v4951
      %v4967 = vpack.c.bf16 %v4954, %v4953
      %v4968 = vpack.c.bf16 %v4956, %v4955
      %v4969 = vpack.c.bf16 %v4958, %v4957
      %v4970 = vpack.c.bf16 %v4960, %v4959
      %v4971 = vpack.c.bf16 %v4962, %v4961
      %v4972 = vpack.c.bf16 %v4964, %v4963
      %v4974 = vshrl.u32 %v4700, 16
      %v4976 = vrot.slane %v4974, 7
      %v4977 = vshll.u32 %v4700, 16
      %v4979 = vor.u32 %v4976, %v4977
      %v4981 = vshrl.u32 %v4701, 16
      %v4983 = vrot.slane %v4981, 7
      %v4984 = vshll.u32 %v4701, 16
      %v4986 = vor.u32 %v4983, %v4984
      %v4987 = vsel %vm2971, %v4976, %v4986
      %v4989 = vshrl.u32 %v4702, 16
      %v4991 = vrot.slane %v4989, 7
      %v4992 = vshll.u32 %v4702, 16
      %v4994 = vor.u32 %v4991, %v4992
      %v4995 = vsel %vm2971, %v4983, %v4994
      %v4997 = vshrl.u32 %v4703, 16
      %v4999 = vrot.slane %v4997, 7
      %v5000 = vshll.u32 %v4703, 16
      %v5002 = vor.u32 %v4999, %v5000
      %v5003 = vsel %vm2971, %v4991, %v5002
      %v5005 = vshrl.u32 %v4704, 16
      %v5007 = vrot.slane %v5005, 7
      %v5008 = vshll.u32 %v4704, 16
      %v5010 = vor.u32 %v5007, %v5008
      %v5011 = vsel %vm2971, %v4999, %v5010
      %v5013 = vshrl.u32 %v4705, 16
      %v5015 = vrot.slane %v5013, 7
      %v5016 = vshll.u32 %v4705, 16
      %v5018 = vor.u32 %v5015, %v5016
      %v5019 = vsel %vm2971, %v5007, %v5018
      %v5021 = vshrl.u32 %v4706, 16
      %v5023 = vrot.slane %v5021, 7
      %v5024 = vshll.u32 %v4706, 16
      %v5026 = vor.u32 %v5023, %v5024
      %v5027 = vsel %vm2971, %v5015, %v5026
      %v5029 = vshrl.u32 %v4707, 16
      %v5031 = vrot.slane %v5029, 7
      %v5032 = vshll.u32 %v4707, 16
      %v5034 = vor.u32 %v5031, %v5032
      %v5035 = vsel %vm2971, %v5023, %v5034
      %v5037 = vsel %vm3044, 0, %v4979
      %v5039 = vshrl.u32 %v4965, 16
      %v5041 = vrot.slane %v5039, 7
      %v5042 = vshll.u32 %v4965, 16
      %v5044 = vor.u32 %v5041, %v5042
      %v5046 = vshrl.u32 %v4966, 16
      %v5048 = vrot.slane %v5046, 7
      %v5049 = vshll.u32 %v4966, 16
      %v5051 = vor.u32 %v5048, %v5049
      %v5052 = vsel %vm2971, %v5041, %v5051
      %v5054 = vshrl.u32 %v4967, 16
      %v5056 = vrot.slane %v5054, 7
      %v5057 = vshll.u32 %v4967, 16
      %v5059 = vor.u32 %v5056, %v5057
      %v5060 = vsel %vm2971, %v5048, %v5059
      %v5062 = vshrl.u32 %v4968, 16
      %v5064 = vrot.slane %v5062, 7
      %v5065 = vshll.u32 %v4968, 16
      %v5067 = vor.u32 %v5064, %v5065
      %v5068 = vsel %vm2971, %v5056, %v5067
      %v5070 = vshrl.u32 %v4969, 16
      %v5072 = vrot.slane %v5070, 7
      %v5073 = vshll.u32 %v4969, 16
      %v5075 = vor.u32 %v5072, %v5073
      %v5076 = vsel %vm2971, %v5064, %v5075
      %v5078 = vshrl.u32 %v4970, 16
      %v5080 = vrot.slane %v5078, 7
      %v5081 = vshll.u32 %v4970, 16
      %v5083 = vor.u32 %v5080, %v5081
      %v5084 = vsel %vm2971, %v5072, %v5083
      %v5086 = vshrl.u32 %v4971, 16
      %v5088 = vrot.slane %v5086, 7
      %v5089 = vshll.u32 %v4971, 16
      %v5091 = vor.u32 %v5088, %v5089
      %v5092 = vsel %vm2971, %v5080, %v5091
      %v5094 = vshrl.u32 %v4972, 16
      %v5096 = vrot.slane %v5094, 7
      %v5097 = vshll.u32 %v4972, 16
      %v5099 = vor.u32 %v5096, %v5097
      %v5100 = vsel %vm2971, %v5088, %v5099
      %v5102 = vsel %vm3044, 0, %v5044
      %v5103 = vld [vmem:[%s16] sm:$0xf]
      %v5104 = vld [vmem:[%s16 + $0x4] sm:$0xf]
      %v5105 = vld [vmem:[%s16 + $0x8] sm:$0xf]
      %v5106 = vld [vmem:[%s16 + $0xc] sm:$0xf]
      %v5107 = vld [vmem:[%s16 + $0x10] sm:$0xf]
      %v5108 = vld [vmem:[%s16 + $0x14] sm:$0xf]
      %v5109 = vld [vmem:[%s17] sm:$0xf]
      %v5110 = vld [vmem:[%s17 + $0x4] sm:$0xf]
      %v5111 = vld [vmem:[%s17 + $0x8] sm:$0xf]
      %v5112 = vld [vmem:[%s17 + $0xc] sm:$0xf]
      %v5113 = vld [vmem:[%s18] sm:$0x1]
      %5115 = vrot.lane.b32.xlu0 %v5102, 16
      %v5116 = vpop.permute.xlu0 %5115
      %5117 = vrot.lane.b32.xlu0 %v5052, 16
      %v5118 = vpop.permute.xlu0 %5117
      %5119 = vrot.lane.b32.xlu0 %v5060, 16
      %v5120 = vpop.permute.xlu0 %5119
      %5121 = vrot.lane.b32.xlu0 %v5068, 16
      %v5122 = vpop.permute.xlu0 %5121
      %5123 = vrot.lane.b32.xlu0 %v5076, 16
      %v5124 = vpop.permute.xlu0 %5123
      %5125 = vrot.lane.b32.xlu0 %v5084, 16
      %v5126 = vpop.permute.xlu0 %5125
      %5127 = vrot.lane.b32.xlu0 %v5092, 16
      %v5128 = vpop.permute.xlu0 %5127
      %5129 = vrot.lane.b32.xlu0 %v5100, 16
      %v5130 = vpop.permute.xlu0 %5129
      %5132 = vrot.lane.b32.xlu0 %v5037, 32
      %v5133 = vpop.permute.xlu0 %5132
      %5134 = vrot.lane.b32.xlu0 %v4987, 32
      %v5135 = vpop.permute.xlu0 %5134
      %5136 = vrot.lane.b32.xlu0 %v4995, 32
      %v5137 = vpop.permute.xlu0 %5136
      %5138 = vrot.lane.b32.xlu0 %v5003, 32
      %v5139 = vpop.permute.xlu0 %5138
      %5140 = vrot.lane.b32.xlu0 %v5011, 32
      %v5141 = vpop.permute.xlu0 %5140
      %5142 = vrot.lane.b32.xlu0 %v5019, 32
      %v5143 = vpop.permute.xlu0 %5142
      %5144 = vrot.lane.b32.xlu0 %v5027, 32
      %v5145 = vpop.permute.xlu0 %5144
      %5146 = vrot.lane.b32.xlu0 %v5035, 32
      %v5147 = vpop.permute.xlu0 %5146
      %v5149 = vsel %vm977, %v4700, %v5116
      %v5151 = vsel %vm977, %v4701, %v5118
      %v5153 = vsel %vm977, %v4702, %v5120
      %v5155 = vsel %vm977, %v4703, %v5122
      %v5157 = vsel %vm977, %v4704, %v5124
      %v5159 = vsel %vm977, %v4705, %v5126
      %v5161 = vsel %vm977, %v4706, %v5128
      %v5163 = vsel %vm977, %v4707, %v5130
      %v5165 = vsel %vm1666, %v5149, %v5133
      %v5167 = vsel %vm1666, %v5151, %v5135
      %v5169 = vsel %vm1666, %v5153, %v5137
      %v5171 = vsel %vm1666, %v5155, %v5139
      %v5173 = vsel %vm1666, %v5157, %v5141
      %v5175 = vsel %vm1666, %v5159, %v5143
      %v5177 = vsel %vm1666, %v5161, %v5145
      %v5179 = vsel %vm1666, %v5163, %v5147
      %v5181 = vlaneseq
      %v5182 = vshrl.u32 %v5181, 7
      %v5183 = vsub.s32 0, %v5182
      %v5184 = vrot.slane %v5113, %v5183
      %v5192 = vunpack.c.l.b16 %v5103
      %v5193 = vunpack.c.l.b16 %v5104
      %v5194 = vunpack.c.l.b16 %v5105
      %v5195 = vunpack.c.l.b16 %v5106
      %v5196 = vunpack.c.l.b16 %v5107
      %v5197 = vunpack.c.l.b16 %v5108
      %v5198 = vpack.c.b16 %v5193, %v5192
      %v5199 = vpack.c.b16 %v5195, %v5194
      %v5200 = vpack.c.b16 %v5197, %v5196
      %v5204 = vsel %vm1683, %v5165, 0
      %v5206 = vsel %vm1683, %v5167, 0
      %v5208 = vsel %vm1683, %v5169, 0
      %v5210 = vsel %vm1683, %v5171, 0
      %v5212 = vsel %vm1683, %v5173, 0
      %v5214 = vsel %vm1683, %v5175, 0
      %v5216 = vsel %vm1683, %v5177, 0
      %v5218 = vsel %vm1683, %v5179, 0
      %5220 = vmatprep.subr.bf16.mxu0 0
      %5221 = vmatpush1.bf16.msra.mxu0 0
      %5222 = vmatprep.subr.bf16.mxu0 0
      %5223 = vmatpush1.bf16.msra.mxu0 0
      %5224 = vmatprep.subr.bf16.mxu0 0
      %5225 = vmatpush1.bf16.msra.mxu0 0
      %5226 = vmatprep.subr.bf16.mxu0 0
      %5227 = vmatpush1.bf16.msra.mxu0 0
      %5228 = vmatprep.subr.bf16.mxu0 0
      %5229 = vmatpush1.bf16.msra.mxu0 0
      %5230 = vmatprep.subr.bf16.mxu0 0
      %5231 = vmatpush1.bf16.msra.mxu0 %v5200
      %5232 = vmatprep.subr.bf16.mxu0 0
      %5233 = vmatpush1.bf16.msra.mxu0 %v5199
      %5234 = vmatprep.subr.bf16.mxu0 0
      %5235 = vmatpush1.bf16.msra.mxu0 %v5198
      %5236 = vmatprep.subr.bf16.mxu0 0
      %5237 = vmatpush2.bf16.msra.mxu0 0
      %5238 = vmatprep.subr.bf16.mxu0 0
      %5239 = vmatpush2.bf16.msra.mxu0 0
      %5240 = vmatprep.subr.bf16.mxu0 0
      %5241 = vmatpush2.bf16.msra.mxu0 0
      %5242 = vmatprep.subr.bf16.mxu0 0
      %5243 = vmatpush2.bf16.msra.mxu0 0
      %5244 = vmatprep.subr.bf16.mxu0 0
      %5245 = vmatpush2.bf16.msra.mxu0 0
      %5246 = vmatprep.subr.bf16.mxu0 0
      %5247 = vmatpush2.bf16.msra.mxu0 0
      %5248 = vmatprep.subr.bf16.mxu0 0
      %5249 = vmatpush2.bf16.msra.mxu0 0
      %5250 = vmatprep.subr.bf16.mxu0 0
      %5251 = vmatpush2.bf16.msra.mxu0 0
      %5252 = vmatprep.mubr.bf16.mxu0 0
      %5253 = vmatmul.mubr.bf16.gmra.mxu0 %v5204
      %v5254 = vpop.f32.mrf.mxu0
      %v5255 = vadd.f32 %v5184, %v5254
      %v5256 = vpop.f32.mrf.mxu0
      %v5257 = vpop.f32.mrf.mxu0
      %v5258 = vadd.f32 %v5184, %v5257
      %v5259 = vpop.f32.mrf.mxu0
      %5260 = vmatprep.mubr.bf16.mxu0 0
      %5261 = vmatmul.mubr.bf16.gmra.mxu0 %v5206
      %v5262 = vpop.f32.mrf.mxu0
      %v5263 = vadd.f32 %v5184, %v5262
      %v5264 = vpop.f32.mrf.mxu0
      %v5265 = vpop.f32.mrf.mxu0
      %v5266 = vadd.f32 %v5184, %v5265
      %v5267 = vpop.f32.mrf.mxu0
      %5268 = vmatprep.mubr.bf16.mxu0 0
      %5269 = vmatmul.mubr.bf16.gmra.mxu0 %v5208
      %v5270 = vpop.f32.mrf.mxu0
      %v5271 = vadd.f32 %v5184, %v5270
      %v5272 = vpop.f32.mrf.mxu0
      %v5273 = vpop.f32.mrf.mxu0
      %v5274 = vadd.f32 %v5184, %v5273
      %v5275 = vpop.f32.mrf.mxu0
      %5276 = vmatprep.mubr.bf16.mxu0 0
      %5277 = vmatmul.mubr.bf16.gmra.mxu0 %v5210
      %v5278 = vpop.f32.mrf.mxu0
      %v5279 = vadd.f32 %v5184, %v5278
      %v5280 = vpop.f32.mrf.mxu0
      %v5281 = vpop.f32.mrf.mxu0
      %v5282 = vadd.f32 %v5184, %v5281
      %v5283 = vpop.f32.mrf.mxu0
      %5284 = vmatprep.mubr.bf16.mxu0 0
      %5285 = vmatmul.mubr.bf16.gmra.mxu0 %v5212
      %v5286 = vpop.f32.mrf.mxu0
      %v5287 = vadd.f32 %v5184, %v5286
      %v5288 = vpop.f32.mrf.mxu0
      %v5289 = vpop.f32.mrf.mxu0
      %v5290 = vadd.f32 %v5184, %v5289
      %v5291 = vpop.f32.mrf.mxu0
      %5292 = vmatprep.mubr.bf16.mxu0 0
      %5293 = vmatmul.mubr.bf16.gmra.mxu0 %v5214
      %v5294 = vpop.f32.mrf.mxu0
      %v5295 = vadd.f32 %v5184, %v5294
      %v5296 = vpop.f32.mrf.mxu0
      %v5297 = vpop.f32.mrf.mxu0
      %v5298 = vadd.f32 %v5184, %v5297
      %v5299 = vpop.f32.mrf.mxu0
      %5300 = vmatprep.mubr.bf16.mxu0 0
      %5301 = vmatmul.mubr.bf16.gmra.mxu0 %v5216
      %v5302 = vpop.f32.mrf.mxu0
      %v5303 = vadd.f32 %v5184, %v5302
      %v5304 = vpop.f32.mrf.mxu0
      %v5305 = vpop.f32.mrf.mxu0
      %v5306 = vadd.f32 %v5184, %v5305
      %v5307 = vpop.f32.mrf.mxu0
      %5308 = vmatprep.mubr.bf16.mxu0 0
      %5309 = vmatmul.mubr.bf16.gmra.mxu0 %v5218
      %v5310 = vpop.f32.mrf.mxu0
      %v5311 = vadd.f32 %v5184, %v5310
      %v5312 = vpop.f32.mrf.mxu0
      %v5313 = vpop.f32.mrf.mxu0
      %v5314 = vadd.f32 %v5184, %v5313
      %v5315 = vpop.f32.mrf.mxu0
      %5316 = vdwg.mxu0
      %v5321 = vunpack.c.l.b16 %v5109
      %v5322 = vunpack.c.l.b16 %v5110
      %v5323 = vunpack.c.l.b16 %v5111
      %v5324 = vunpack.c.l.b16 %v5112
      %v5325 = vpack.c.b16 %v5322, %v5321
      %v5326 = vpack.c.b16 %v5324, %v5323
      %v5329 = vsel %vm1666, %v5149, 0
      %v5331 = vsel %vm1666, %v5151, 0
      %v5333 = vsel %vm1666, %v5153, 0
      %v5335 = vsel %vm1666, %v5155, 0
      %v5337 = vsel %vm1666, %v5157, 0
      %v5339 = vsel %vm1666, %v5159, 0
      %v5341 = vsel %vm1666, %v5161, 0
      %v5343 = vsel %vm1666, %v5163, 0
      %5345 = vmatprep.subr.bf16.mxu0 0
      %5346 = vmatpush1.bf16.msra.mxu0 0
      %5347 = vmatprep.subr.bf16.mxu0 0
      %5348 = vmatpush1.bf16.msra.mxu0 0
      %5349 = vmatprep.subr.bf16.mxu0 0
      %5350 = vmatpush1.bf16.msra.mxu0 0
      %5351 = vmatprep.subr.bf16.mxu0 0
      %5352 = vmatpush1.bf16.msra.mxu0 0
      %5353 = vmatprep.subr.bf16.mxu0 0
      %5354 = vmatpush1.bf16.msra.mxu0 0
      %5355 = vmatprep.subr.bf16.mxu0 0
      %5356 = vmatpush1.bf16.msra.mxu0 0
      %5357 = vmatprep.subr.bf16.mxu0 0
      %5358 = vmatpush1.bf16.msra.mxu0 %v5326
      %5359 = vmatprep.subr.bf16.mxu0 0
      %5360 = vmatpush1.bf16.msra.mxu0 %v5325
      %5361 = vmatprep.subr.bf16.mxu0 0
      %5362 = vmatpush2.bf16.msra.mxu0 0
      %5363 = vmatprep.subr.bf16.mxu0 0
      %5364 = vmatpush2.bf16.msra.mxu0 0
      %5365 = vmatprep.subr.bf16.mxu0 0
      %5366 = vmatpush2.bf16.msra.mxu0 0
      %5367 = vmatprep.subr.bf16.mxu0 0
      %5368 = vmatpush2.bf16.msra.mxu0 0
      %5369 = vmatprep.subr.bf16.mxu0 0
      %5370 = vmatpush2.bf16.msra.mxu0 0
      %5371 = vmatprep.subr.bf16.mxu0 0
      %5372 = vmatpush2.bf16.msra.mxu0 0
      %5373 = vmatprep.subr.bf16.mxu0 0
      %5374 = vmatpush2.bf16.msra.mxu0 0
      %5375 = vmatprep.subr.bf16.mxu0 0
      %5376 = vmatpush2.bf16.msra.mxu0 0
      %5377 = vmatprep.mubr.bf16.mxu0 0
      %5378 = vmatmul.mubr.bf16.gmra.mxu0 %v5329
      %v5379 = vpop.f32.mrf.mxu0
      %v5380 = vadd.f32 %v5184, %v5379
      %v5381 = vpop.f32.mrf.mxu0
      %v5382 = vpop.f32.mrf.mxu0
      %v5383 = vadd.f32 %v5184, %v5382
      %v5384 = vpop.f32.mrf.mxu0
      %5385 = vmatprep.mubr.bf16.mxu0 0
      %5386 = vmatmul.mubr.bf16.gmra.mxu0 %v5331
      %v5387 = vpop.f32.mrf.mxu0
      %v5388 = vadd.f32 %v5184, %v5387
      %v5389 = vpop.f32.mrf.mxu0
      %v5390 = vpop.f32.mrf.mxu0
      %v5391 = vadd.f32 %v5184, %v5390
      %v5392 = vpop.f32.mrf.mxu0
      %5393 = vmatprep.mubr.bf16.mxu0 0
      %5394 = vmatmul.mubr.bf16.gmra.mxu0 %v5333
      %v5395 = vpop.f32.mrf.mxu0
      %v5396 = vadd.f32 %v5184, %v5395
      %v5397 = vpop.f32.mrf.mxu0
      %v5398 = vpop.f32.mrf.mxu0
      %v5399 = vadd.f32 %v5184, %v5398
      %v5400 = vpop.f32.mrf.mxu0
      %5401 = vmatprep.mubr.bf16.mxu0 0
      %5402 = vmatmul.mubr.bf16.gmra.mxu0 %v5335
      %v5403 = vpop.f32.mrf.mxu0
      %v5404 = vadd.f32 %v5184, %v5403
      %v5405 = vpop.f32.mrf.mxu0
      %v5406 = vpop.f32.mrf.mxu0
      %v5407 = vadd.f32 %v5184, %v5406
      %v5408 = vpop.f32.mrf.mxu0
      %5409 = vmatprep.mubr.bf16.mxu0 0
      %5410 = vmatmul.mubr.bf16.gmra.mxu0 %v5337
      %v5411 = vpop.f32.mrf.mxu0
      %v5412 = vadd.f32 %v5184, %v5411
      %v5413 = vpop.f32.mrf.mxu0
      %v5414 = vpop.f32.mrf.mxu0
      %v5415 = vadd.f32 %v5184, %v5414
      %v5416 = vpop.f32.mrf.mxu0
      %5417 = vmatprep.mubr.bf16.mxu0 0
      %5418 = vmatmul.mubr.bf16.gmra.mxu0 %v5339
      %v5419 = vpop.f32.mrf.mxu0
      %v5420 = vadd.f32 %v5184, %v5419
      %v5421 = vpop.f32.mrf.mxu0
      %v5422 = vpop.f32.mrf.mxu0
      %v5423 = vadd.f32 %v5184, %v5422
      %v5424 = vpop.f32.mrf.mxu0
      %5425 = vmatprep.mubr.bf16.mxu0 0
      %5426 = vmatmul.mubr.bf16.gmra.mxu0 %v5341
      %v5427 = vpop.f32.mrf.mxu0
      %v5428 = vadd.f32 %v5184, %v5427
      %v5429 = vpop.f32.mrf.mxu0
      %v5430 = vpop.f32.mrf.mxu0
      %v5431 = vadd.f32 %v5184, %v5430
      %v5432 = vpop.f32.mrf.mxu0
      %5433 = vmatprep.mubr.bf16.mxu0 0
      %5434 = vmatmul.mubr.bf16.gmra.mxu0 %v5343
      %v5435 = vpop.f32.mrf.mxu0
      %v5436 = vadd.f32 %v5184, %v5435
      %v5437 = vpop.f32.mrf.mxu0
      %v5438 = vpop.f32.mrf.mxu0
      %v5439 = vadd.f32 %v5184, %v5438
      %v5440 = vpop.f32.mrf.mxu0
      %5441 = vdwg.mxu0
      %5450 = vrot.lane.b32.xlu0 %v4700, 16
      %v5451 = vpop.permute.xlu0 %5450
      %5452 = vrot.lane.b32.xlu0 %v4701, 16
      %v5453 = vpop.permute.xlu0 %5452
      %5454 = vrot.lane.b32.xlu0 %v4702, 16
      %v5455 = vpop.permute.xlu0 %5454
      %5456 = vrot.lane.b32.xlu0 %v4703, 16
      %v5457 = vpop.permute.xlu0 %5456
      %5458 = vrot.lane.b32.xlu0 %v4704, 16
      %v5459 = vpop.permute.xlu0 %5458
      %5460 = vrot.lane.b32.xlu0 %v4705, 16
      %v5461 = vpop.permute.xlu0 %5460
      %5462 = vrot.lane.b32.xlu0 %v4706, 16
      %v5463 = vpop.permute.xlu0 %5462
      %5464 = vrot.lane.b32.xlu0 %v4707, 16
      %v5465 = vpop.permute.xlu0 %5464
      %5466 = vrot.lane.b32.xlu0 %v5102, 32
      %v5467 = vpop.permute.xlu0 %5466
      %5468 = vrot.lane.b32.xlu0 %v5052, 32
      %v5469 = vpop.permute.xlu0 %5468
      %5470 = vrot.lane.b32.xlu0 %v5060, 32
      %v5471 = vpop.permute.xlu0 %5470
      %5472 = vrot.lane.b32.xlu0 %v5068, 32
      %v5473 = vpop.permute.xlu0 %5472
      %5474 = vrot.lane.b32.xlu0 %v5076, 32
      %v5475 = vpop.permute.xlu0 %5474
      %5476 = vrot.lane.b32.xlu0 %v5084, 32
      %v5477 = vpop.permute.xlu0 %5476
      %5478 = vrot.lane.b32.xlu0 %v5092, 32
      %v5479 = vpop.permute.xlu0 %5478
      %5480 = vrot.lane.b32.xlu0 %v5100, 32
      %v5481 = vpop.permute.xlu0 %5480
      %v5483 = vsel %vm977, %v4965, %v5451
      %v5485 = vsel %vm977, %v4966, %v5453
      %v5487 = vsel %vm977, %v4967, %v5455
      %v5489 = vsel %vm977, %v4968, %v5457
      %v5491 = vsel %vm977, %v4969, %v5459
      %v5493 = vsel %vm977, %v4970, %v5461
      %v5495 = vsel %vm977, %v4971, %v5463
      %v5497 = vsel %vm977, %v4972, %v5465
      %v5499 = vsel %vm1666, %v5483, %v5467
      %v5501 = vsel %vm1666, %v5485, %v5469
      %v5503 = vsel %vm1666, %v5487, %v5471
      %v5505 = vsel %vm1666, %v5489, %v5473
      %v5507 = vsel %vm1666, %v5491, %v5475
      %v5509 = vsel %vm1666, %v5493, %v5477
      %v5511 = vsel %vm1666, %v5495, %v5479
      %v5513 = vsel %vm1666, %v5497, %v5481
      %v5514 = vsel %vm1683, %v5499, 0
      %v5516 = vsel %vm1683, %v5501, 0
      %v5518 = vsel %vm1683, %v5503, 0
      %v5520 = vsel %vm1683, %v5505, 0
      %v5522 = vsel %vm1683, %v5507, 0
      %v5524 = vsel %vm1683, %v5509, 0
      %v5526 = vsel %vm1683, %v5511, 0
      %v5528 = vsel %vm1683, %v5513, 0
      %5530 = vmatprep.subr.bf16.mxu0 0
      %5531 = vmatpush1.bf16.msra.mxu0 0
      %5532 = vmatprep.subr.bf16.mxu0 0
      %5533 = vmatpush1.bf16.msra.mxu0 0
      %5534 = vmatprep.subr.bf16.mxu0 0
      %5535 = vmatpush1.bf16.msra.mxu0 0
      %5536 = vmatprep.subr.bf16.mxu0 0
      %5537 = vmatpush1.bf16.msra.mxu0 0
      %5538 = vmatprep.subr.bf16.mxu0 0
      %5539 = vmatpush1.bf16.msra.mxu0 0
      %5540 = vmatprep.subr.bf16.mxu0 0
      %5541 = vmatpush1.bf16.msra.mxu0 %v5200
      %5542 = vmatprep.subr.bf16.mxu0 0
      %5543 = vmatpush1.bf16.msra.mxu0 %v5199
      %5544 = vmatprep.subr.bf16.mxu0 0
      %5545 = vmatpush1.bf16.msra.mxu0 %v5198
      %5546 = vmatprep.subr.bf16.mxu0 0
      %5547 = vmatpush2.bf16.msra.mxu0 0
      %5548 = vmatprep.subr.bf16.mxu0 0
      %5549 = vmatpush2.bf16.msra.mxu0 0
      %5550 = vmatprep.subr.bf16.mxu0 0
      %5551 = vmatpush2.bf16.msra.mxu0 0
      %5552 = vmatprep.subr.bf16.mxu0 0
      %5553 = vmatpush2.bf16.msra.mxu0 0
      %5554 = vmatprep.subr.bf16.mxu0 0
      %5555 = vmatpush2.bf16.msra.mxu0 0
      %5556 = vmatprep.subr.bf16.mxu0 0
      %5557 = vmatpush2.bf16.msra.mxu0 0
      %5558 = vmatprep.subr.bf16.mxu0 0
      %5559 = vmatpush2.bf16.msra.mxu0 0
      %5560 = vmatprep.subr.bf16.mxu0 0
      %5561 = vmatpush2.bf16.msra.mxu0 0
      %5562 = vmatprep.mubr.bf16.mxu0 0
      %5563 = vmatmul.mubr.bf16.gmra.mxu0 %v5514
      %v5564 = vpop.f32.mrf.mxu0
      %v5565 = vadd.f32 %v5184, %v5564
      %v5566 = vpop.f32.mrf.mxu0
      %v5567 = vpop.f32.mrf.mxu0
      %v5568 = vadd.f32 %v5184, %v5567
      %v5569 = vpop.f32.mrf.mxu0
      %5570 = vmatprep.mubr.bf16.mxu0 0
      %5571 = vmatmul.mubr.bf16.gmra.mxu0 %v5516
      %v5572 = vpop.f32.mrf.mxu0
      %v5573 = vadd.f32 %v5184, %v5572
      %v5574 = vpop.f32.mrf.mxu0
      %v5575 = vpop.f32.mrf.mxu0
      %v5576 = vadd.f32 %v5184, %v5575
      %v5577 = vpop.f32.mrf.mxu0
      %5578 = vmatprep.mubr.bf16.mxu0 0
      %5579 = vmatmul.mubr.bf16.gmra.mxu0 %v5518
      %v5580 = vpop.f32.mrf.mxu0
      %v5581 = vadd.f32 %v5184, %v5580
      %v5582 = vpop.f32.mrf.mxu0
      %v5583 = vpop.f32.mrf.mxu0
      %v5584 = vadd.f32 %v5184, %v5583
      %v5585 = vpop.f32.mrf.mxu0
      %5586 = vmatprep.mubr.bf16.mxu0 0
      %5587 = vmatmul.mubr.bf16.gmra.mxu0 %v5520
      %v5588 = vpop.f32.mrf.mxu0
      %v5589 = vadd.f32 %v5184, %v5588
      %v5590 = vpop.f32.mrf.mxu0
      %v5591 = vpop.f32.mrf.mxu0
      %v5592 = vadd.f32 %v5184, %v5591
      %v5593 = vpop.f32.mrf.mxu0
      %5594 = vmatprep.mubr.bf16.mxu0 0
      %5595 = vmatmul.mubr.bf16.gmra.mxu0 %v5522
      %v5596 = vpop.f32.mrf.mxu0
      %v5597 = vadd.f32 %v5184, %v5596
      %v5598 = vpop.f32.mrf.mxu0
      %v5599 = vpop.f32.mrf.mxu0
      %v5600 = vadd.f32 %v5184, %v5599
      %v5601 = vpop.f32.mrf.mxu0
      %5602 = vmatprep.mubr.bf16.mxu0 0
      %5603 = vmatmul.mubr.bf16.gmra.mxu0 %v5524
      %v5604 = vpop.f32.mrf.mxu0
      %v5605 = vadd.f32 %v5184, %v5604
      %v5606 = vpop.f32.mrf.mxu0
      %v5607 = vpop.f32.mrf.mxu0
      %v5608 = vadd.f32 %v5184, %v5607
      %v5609 = vpop.f32.mrf.mxu0
      %5610 = vmatprep.mubr.bf16.mxu0 0
      %5611 = vmatmul.mubr.bf16.gmra.mxu0 %v5526
      %v5612 = vpop.f32.mrf.mxu0
      %v5613 = vadd.f32 %v5184, %v5612
      %v5614 = vpop.f32.mrf.mxu0
      %v5615 = vpop.f32.mrf.mxu0
      %v5616 = vadd.f32 %v5184, %v5615
      %v5617 = vpop.f32.mrf.mxu0
      %5618 = vmatprep.mubr.bf16.mxu0 0
      %5619 = vmatmul.mubr.bf16.gmra.mxu0 %v5528
      %v5620 = vpop.f32.mrf.mxu0
      %v5621 = vadd.f32 %v5184, %v5620
      %v5622 = vpop.f32.mrf.mxu0
      %v5623 = vpop.f32.mrf.mxu0
      %v5624 = vadd.f32 %v5184, %v5623
      %v5625 = vpop.f32.mrf.mxu0
      %5626 = vdwg.mxu0
      %v5627 = vsel %vm1666, %v5483, 0
      %v5629 = vsel %vm1666, %v5485, 0
      %v5631 = vsel %vm1666, %v5487, 0
      %v5633 = vsel %vm1666, %v5489, 0
      %v5635 = vsel %vm1666, %v5491, 0
      %v5637 = vsel %vm1666, %v5493, 0
      %v5639 = vsel %vm1666, %v5495, 0
      %v5641 = vsel %vm1666, %v5497, 0
      %5643 = vmatprep.subr.bf16.mxu0 0
      %5644 = vmatpush1.bf16.msra.mxu0 0
      %5645 = vmatprep.subr.bf16.mxu0 0
      %5646 = vmatpush1.bf16.msra.mxu0 0
      %5647 = vmatprep.subr.bf16.mxu0 0
      %5648 = vmatpush1.bf16.msra.mxu0 0
      %5649 = vmatprep.subr.bf16.mxu0 0
      %5650 = vmatpush1.bf16.msra.mxu0 0
      %5651 = vmatprep.subr.bf16.mxu0 0
      %5652 = vmatpush1.bf16.msra.mxu0 0
      %5653 = vmatprep.subr.bf16.mxu0 0
      %5654 = vmatpush1.bf16.msra.mxu0 0
      %5655 = vmatprep.subr.bf16.mxu0 0
      %5656 = vmatpush1.bf16.msra.mxu0 %v5326
      %5657 = vmatprep.subr.bf16.mxu0 0
      %5658 = vmatpush1.bf16.msra.mxu0 %v5325
      %5659 = vmatprep.subr.bf16.mxu0 0
      %5660 = vmatpush2.bf16.msra.mxu0 0
      %5661 = vmatprep.subr.bf16.mxu0 0
      %5662 = vmatpush2.bf16.msra.mxu0 0
      %5663 = vmatprep.subr.bf16.mxu0 0
      %5664 = vmatpush2.bf16.msra.mxu0 0
      %5665 = vmatprep.subr.bf16.mxu0 0
      %5666 = vmatpush2.bf16.msra.mxu0 0
      %5667 = vmatprep.subr.bf16.mxu0 0
      %5668 = vmatpush2.bf16.msra.mxu0 0
      %5669 = vmatprep.subr.bf16.mxu0 0
      %5670 = vmatpush2.bf16.msra.mxu0 0
      %5671 = vmatprep.subr.bf16.mxu0 0
      %5672 = vmatpush2.bf16.msra.mxu0 0
      %5673 = vmatprep.subr.bf16.mxu0 0
      %5674 = vmatpush2.bf16.msra.mxu0 0
      %5675 = vmatprep.mubr.bf16.mxu0 0
      %5676 = vmatmul.mubr.bf16.gmra.mxu0 %v5627
      %v5677 = vpop.f32.mrf.mxu0
      %v5678 = vadd.f32 %v5184, %v5677
      %v5679 = vpop.f32.mrf.mxu0
      %v5680 = vpop.f32.mrf.mxu0
      %v5681 = vadd.f32 %v5184, %v5680
      %v5682 = vpop.f32.mrf.mxu0
      %5683 = vmatprep.mubr.bf16.mxu0 0
      %5684 = vmatmul.mubr.bf16.gmra.mxu0 %v5629
      %v5685 = vpop.f32.mrf.mxu0
      %v5686 = vadd.f32 %v5184, %v5685
      %v5687 = vpop.f32.mrf.mxu0
      %v5688 = vpop.f32.mrf.mxu0
      %v5689 = vadd.f32 %v5184, %v5688
      %v5690 = vpop.f32.mrf.mxu0
      %5691 = vmatprep.mubr.bf16.mxu0 0
      %5692 = vmatmul.mubr.bf16.gmra.mxu0 %v5631
      %v5693 = vpop.f32.mrf.mxu0
      %v5694 = vadd.f32 %v5184, %v5693
      %v5695 = vpop.f32.mrf.mxu0
      %v5696 = vpop.f32.mrf.mxu0
      %v5697 = vadd.f32 %v5184, %v5696
      %v5698 = vpop.f32.mrf.mxu0
      %5699 = vmatprep.mubr.bf16.mxu0 0
      %5700 = vmatmul.mubr.bf16.gmra.mxu0 %v5633
      %v5701 = vpop.f32.mrf.mxu0
      %v5702 = vadd.f32 %v5184, %v5701
      %v5703 = vpop.f32.mrf.mxu0
      %v5704 = vpop.f32.mrf.mxu0
      %v5705 = vadd.f32 %v5184, %v5704
      %v5706 = vpop.f32.mrf.mxu0
      %5707 = vmatprep.mubr.bf16.mxu0 0
      %5708 = vmatmul.mubr.bf16.gmra.mxu0 %v5635
      %v5709 = vpop.f32.mrf.mxu0
      %v5710 = vadd.f32 %v5184, %v5709
      %v5711 = vpop.f32.mrf.mxu0
      %v5712 = vpop.f32.mrf.mxu0
      %v5713 = vadd.f32 %v5184, %v5712
      %v5714 = vpop.f32.mrf.mxu0
      %5715 = vmatprep.mubr.bf16.mxu0 0
      %5716 = vmatmul.mubr.bf16.gmra.mxu0 %v5637
      %v5717 = vpop.f32.mrf.mxu0
      %v5718 = vadd.f32 %v5184, %v5717
      %v5719 = vpop.f32.mrf.mxu0
      %v5720 = vpop.f32.mrf.mxu0
      %v5721 = vadd.f32 %v5184, %v5720
      %v5722 = vpop.f32.mrf.mxu0
      %5723 = vmatprep.mubr.bf16.mxu0 0
      %5724 = vmatmul.mubr.bf16.gmra.mxu0 %v5639
      %v5725 = vpop.f32.mrf.mxu0
      %v5726 = vadd.f32 %v5184, %v5725
      %v5727 = vpop.f32.mrf.mxu0
      %v5728 = vpop.f32.mrf.mxu0
      %v5729 = vadd.f32 %v5184, %v5728
      %v5730 = vpop.f32.mrf.mxu0
      %5731 = vmatprep.mubr.bf16.mxu0 0
      %5732 = vmatmul.mubr.bf16.gmra.mxu0 %v5641
      %v5733 = vpop.f32.mrf.mxu0
      %v5734 = vadd.f32 %v5184, %v5733
      %v5735 = vpop.f32.mrf.mxu0
      %v5736 = vpop.f32.mrf.mxu0
      %v5737 = vadd.f32 %v5184, %v5736
      %v5738 = vpop.f32.mrf.mxu0
      %5739 = vdwg.mxu0
      %5756 = vrot.lane.b32.xlu0 %v5380, 4
      %v5757 = vpop.permute.xlu0 %5756
      %5758 = vrot.lane.b32.xlu0 %v5383, 4
      %v5759 = vpop.permute.xlu0 %5758
      %5760 = vrot.lane.b32.xlu0 %v5388, 4
      %v5761 = vpop.permute.xlu0 %5760
      %5762 = vrot.lane.b32.xlu0 %v5391, 4
      %v5763 = vpop.permute.xlu0 %5762
      %5764 = vrot.lane.b32.xlu0 %v5396, 4
      %v5765 = vpop.permute.xlu0 %5764
      %5766 = vrot.lane.b32.xlu0 %v5399, 4
      %v5767 = vpop.permute.xlu0 %5766
      %5768 = vrot.lane.b32.xlu0 %v5404, 4
      %v5769 = vpop.permute.xlu0 %5768
      %5770 = vrot.lane.b32.xlu0 %v5407, 4
      %v5771 = vpop.permute.xlu0 %5770
      %5772 = vrot.lane.b32.xlu0 %v5412, 4
      %v5773 = vpop.permute.xlu0 %5772
      %5774 = vrot.lane.b32.xlu0 %v5415, 4
      %v5775 = vpop.permute.xlu0 %5774
      %5776 = vrot.lane.b32.xlu0 %v5420, 4
      %v5777 = vpop.permute.xlu0 %5776
      %5778 = vrot.lane.b32.xlu0 %v5423, 4
      %v5779 = vpop.permute.xlu0 %5778
      %5780 = vrot.lane.b32.xlu0 %v5428, 4
      %v5781 = vpop.permute.xlu0 %5780
      %5782 = vrot.lane.b32.xlu0 %v5431, 4
      %v5783 = vpop.permute.xlu0 %5782
      %5784 = vrot.lane.b32.xlu0 %v5436, 4
      %v5785 = vpop.permute.xlu0 %5784
      %5786 = vrot.lane.b32.xlu0 %v5439, 4
      %v5787 = vpop.permute.xlu0 %5786
      %5820 = vrot.lane.b32.xlu0 %v5565, 8
      %v5821 = vpop.permute.xlu0 %5820
      %5822 = vrot.lane.b32.xlu0 %v5568, 8
      %v5823 = vpop.permute.xlu0 %5822
      %5824 = vrot.lane.b32.xlu0 %v5573, 8
      %v5825 = vpop.permute.xlu0 %5824
      %5826 = vrot.lane.b32.xlu0 %v5576, 8
      %v5827 = vpop.permute.xlu0 %5826
      %5828 = vrot.lane.b32.xlu0 %v5581, 8
      %v5829 = vpop.permute.xlu0 %5828
      %5830 = vrot.lane.b32.xlu0 %v5584, 8
      %v5831 = vpop.permute.xlu0 %5830
      %5832 = vrot.lane.b32.xlu0 %v5589, 8
      %v5833 = vpop.permute.xlu0 %5832
      %5834 = vrot.lane.b32.xlu0 %v5592, 8
      %v5835 = vpop.permute.xlu0 %5834
      %5836 = vrot.lane.b32.xlu0 %v5597, 8
      %v5837 = vpop.permute.xlu0 %5836
      %5838 = vrot.lane.b32.xlu0 %v5600, 8
      %v5839 = vpop.permute.xlu0 %5838
      %5840 = vrot.lane.b32.xlu0 %v5605, 8
      %v5841 = vpop.permute.xlu0 %5840
      %5842 = vrot.lane.b32.xlu0 %v5608, 8
      %v5843 = vpop.permute.xlu0 %5842
      %5844 = vrot.lane.b32.xlu0 %v5613, 8
      %v5845 = vpop.permute.xlu0 %5844
      %5846 = vrot.lane.b32.xlu0 %v5616, 8
      %v5847 = vpop.permute.xlu0 %5846
      %5848 = vrot.lane.b32.xlu0 %v5621, 8
      %v5849 = vpop.permute.xlu0 %5848
      %5850 = vrot.lane.b32.xlu0 %v5624, 8
      %v5851 = vpop.permute.xlu0 %5850
      %5884 = vrot.lane.b32.xlu0 %v5678, 12
      %v5885 = vpop.permute.xlu0 %5884
      %5886 = vrot.lane.b32.xlu0 %v5681, 12
      %v5887 = vpop.permute.xlu0 %5886
      %5888 = vrot.lane.b32.xlu0 %v5686, 12
      %v5889 = vpop.permute.xlu0 %5888
      %5890 = vrot.lane.b32.xlu0 %v5689, 12
      %v5891 = vpop.permute.xlu0 %5890
      %5892 = vrot.lane.b32.xlu0 %v5694, 12
      %v5893 = vpop.permute.xlu0 %5892
      %5894 = vrot.lane.b32.xlu0 %v5697, 12
      %v5895 = vpop.permute.xlu0 %5894
      %5896 = vrot.lane.b32.xlu0 %v5702, 12
      %v5897 = vpop.permute.xlu0 %5896
      %5898 = vrot.lane.b32.xlu0 %v5705, 12
      %v5899 = vpop.permute.xlu0 %5898
      %5900 = vrot.lane.b32.xlu0 %v5710, 12
      %v5901 = vpop.permute.xlu0 %5900
      %5902 = vrot.lane.b32.xlu0 %v5713, 12
      %v5903 = vpop.permute.xlu0 %5902
      %5904 = vrot.lane.b32.xlu0 %v5718, 12
      %v5905 = vpop.permute.xlu0 %5904
      %5906 = vrot.lane.b32.xlu0 %v5721, 12
      %v5907 = vpop.permute.xlu0 %5906
      %5908 = vrot.lane.b32.xlu0 %v5726, 12
      %v5909 = vpop.permute.xlu0 %5908
      %5910 = vrot.lane.b32.xlu0 %v5729, 12
      %v5911 = vpop.permute.xlu0 %5910
      %5912 = vrot.lane.b32.xlu0 %v5734, 12
      %v5913 = vpop.permute.xlu0 %5912
      %5914 = vrot.lane.b32.xlu0 %v5737, 12
      %v5915 = vpop.permute.xlu0 %5914
      %vm5932 = vcmask 31744
      %v5933 = vsel %vm5932, %v5255, %v5757
      %v5934 = vsel %vm5932, %v5258, %v5759
      %v5935 = vsel %vm5932, %v5263, %v5761
      %v5936 = vsel %vm5932, %v5266, %v5763
      %v5937 = vsel %vm5932, %v5271, %v5765
      %v5938 = vsel %vm5932, %v5274, %v5767
      %v5939 = vsel %vm5932, %v5279, %v5769
      %v5940 = vsel %vm5932, %v5282, %v5771
      %v5941 = vsel %vm5932, %v5287, %v5773
      %v5942 = vsel %vm5932, %v5290, %v5775
      %v5943 = vsel %vm5932, %v5295, %v5777
      %v5944 = vsel %vm5932, %v5298, %v5779
      %v5945 = vsel %vm5932, %v5303, %v5781
      %v5946 = vsel %vm5932, %v5306, %v5783
      %v5947 = vsel %vm5932, %v5311, %v5785
      %v5948 = vsel %vm5932, %v5314, %v5787
      %v5949 = vsel %vm1034, %v5933, %v5821
      %v5950 = vsel %vm1034, %v5934, %v5823
      %v5951 = vsel %vm1034, %v5935, %v5825
      %v5952 = vsel %vm1034, %v5936, %v5827
      %v5953 = vsel %vm1034, %v5937, %v5829
      %v5954 = vsel %vm1034, %v5938, %v5831
      %v5955 = vsel %vm1034, %v5939, %v5833
      %v5956 = vsel %vm1034, %v5940, %v5835
      %v5957 = vsel %vm1034, %v5941, %v5837
      %v5958 = vsel %vm1034, %v5942, %v5839
      %v5959 = vsel %vm1034, %v5943, %v5841
      %v5960 = vsel %vm1034, %v5944, %v5843
      %v5961 = vsel %vm1034, %v5945, %v5845
      %v5962 = vsel %vm1034, %v5946, %v5847
      %v5963 = vsel %vm1034, %v5947, %v5849
      %v5964 = vsel %vm1034, %v5948, %v5851
      %vm5965 = vcmask 97280
      %v5966 = vsel %vm5965, %v5949, %v5885
      %v5967 = vsel %vm5965, %v5950, %v5887
      %v5968 = vsel %vm5965, %v5951, %v5889
      %v5969 = vsel %vm5965, %v5952, %v5891
      %v5970 = vsel %vm5965, %v5953, %v5893
      %v5971 = vsel %vm5965, %v5954, %v5895
      %v5972 = vsel %vm5965, %v5955, %v5897
      %v5973 = vsel %vm5965, %v5956, %v5899
      %v5974 = vsel %vm5965, %v5957, %v5901
      %v5975 = vsel %vm5965, %v5958, %v5903
      %v5976 = vsel %vm5965, %v5959, %v5905
      %v5977 = vsel %vm5965, %v5960, %v5907
      %v5978 = vsel %vm5965, %v5961, %v5909
      %v5979 = vsel %vm5965, %v5962, %v5911
      %v5980 = vsel %vm5965, %v5963, %v5913
      %v5981 = vsel %vm5965, %v5964, %v5915
      %v5982 = vmul.f32 %v5966, 0.5
      %v5983 = vmul.f32 %v5967, 0.5
      %v5984 = vmul.f32 %v5968, 0.5
      %v5985 = vmul.f32 %v5969, 0.5
      %v5986 = vmul.f32 %v5970, 0.5
      %v5987 = vmul.f32 %v5971, 0.5
      %v5988 = vmul.f32 %v5972, 0.5
      %v5989 = vmul.f32 %v5973, 0.5
      %v5990 = vmul.f32 %v5974, 0.5
      %v5991 = vmul.f32 %v5975, 0.5
      %v5992 = vmul.f32 %v5976, 0.5
      %v5993 = vmul.f32 %v5977, 0.5
      %v5994 = vmul.f32 %v5978, 0.5
      %v5995 = vmul.f32 %v5979, 0.5
      %v5996 = vmul.f32 %v5980, 0.5
      %v5997 = vmul.f32 %v5981, 0.5
      %v5998 = vtanh.pop %v5982
      %v5999 = vtanh.pop %v5983
      %v6000 = vtanh.pop %v5984
      %v6001 = vtanh.pop %v5985
      %v6002 = vtanh.pop %v5986
      %v6003 = vtanh.pop %v5987
      %v6004 = vtanh.pop %v5988
      %v6005 = vtanh.pop %v5989
      %v6006 = vtanh.pop %v5990
      %v6007 = vtanh.pop %v5991
      %v6008 = vtanh.pop %v5992
      %v6009 = vtanh.pop %v5993
      %v6010 = vtanh.pop %v5994
      %v6011 = vtanh.pop %v5995
      %v6012 = vtanh.pop %v5996
      %v6013 = vtanh.pop %v5997
      %v6014 = vmul.f32 %v5998, 0.5
      %v6015 = vmul.f32 %v5999, 0.5
      %v6016 = vmul.f32 %v6000, 0.5
      %v6017 = vmul.f32 %v6001, 0.5
      %v6018 = vmul.f32 %v6002, 0.5
      %v6019 = vmul.f32 %v6003, 0.5
      %v6020 = vmul.f32 %v6004, 0.5
      %v6021 = vmul.f32 %v6005, 0.5
      %v6022 = vmul.f32 %v6006, 0.5
      %v6023 = vmul.f32 %v6007, 0.5
      %v6024 = vmul.f32 %v6008, 0.5
      %v6025 = vmul.f32 %v6009, 0.5
      %v6026 = vmul.f32 %v6010, 0.5
      %v6027 = vmul.f32 %v6011, 0.5
      %v6028 = vmul.f32 %v6012, 0.5
      %v6029 = vmul.f32 %v6013, 0.5
      %v6030 = vadd.f32 %v6014, 0.5
      %v6031 = vadd.f32 %v6015, 0.5
      %v6032 = vadd.f32 %v6016, 0.5
      %v6033 = vadd.f32 %v6017, 0.5
      %v6034 = vadd.f32 %v6018, 0.5
      %v6035 = vadd.f32 %v6019, 0.5
      %v6036 = vadd.f32 %v6020, 0.5
      %v6037 = vadd.f32 %v6021, 0.5
      %v6038 = vadd.f32 %v6022, 0.5
      %v6039 = vadd.f32 %v6023, 0.5
      %v6040 = vadd.f32 %v6024, 0.5
      %v6041 = vadd.f32 %v6025, 0.5
      %v6042 = vadd.f32 %v6026, 0.5
      %v6043 = vadd.f32 %v6027, 0.5
      %v6044 = vadd.f32 %v6028, 0.5
      %v6045 = vadd.f32 %v6029, 0.5
      %6046 = vst.msk [vmem:[%s645] sm:$0xff] %vm977, %v6030
      %6047 = vst.msk [vmem:[%s645 + $0x8] sm:$0xff] %vm977, %v6031
      %6048 = vst.msk [vmem:[%s645 + $0x10] sm:$0xff] %vm977, %v6032
      %6049 = vst.msk [vmem:[%s645 + $0x18] sm:$0xff] %vm977, %v6033
      %6050 = vst.msk [vmem:[%s645 + $0x20] sm:$0xff] %vm977, %v6034
      %6051 = vst.msk [vmem:[%s645 + $0x28] sm:$0xff] %vm977, %v6035
      %6052 = vst.msk [vmem:[%s645 + $0x30] sm:$0xff] %vm977, %v6036
      %6053 = vst.msk [vmem:[%s645 + $0x38] sm:$0xff] %vm977, %v6037
      %6054 = vst.msk [vmem:[%s645 + $0x40] sm:$0xff] %vm977, %v6038
      %6055 = vst.msk [vmem:[%s645 + $0x48] sm:$0xff] %vm977, %v6039
      %6056 = vst.msk [vmem:[%s645 + $0x50] sm:$0xff] %vm977, %v6040
      %6057 = vst.msk [vmem:[%s645 + $0x58] sm:$0xff] %vm977, %v6041
      %6058 = vst.msk [vmem:[%s645 + $0x60] sm:$0xff] %vm977, %v6042
      %6059 = vst.msk [vmem:[%s645 + $0x68] sm:$0xff] %vm977, %v6043
      %6060 = vst.msk [vmem:[%s645 + $0x70] sm:$0xff] %vm977, %v6044
      %6061 = vst.msk [vmem:[%s645 + $0x78] sm:$0xff] %vm977, %v6045
      %s6062 = smul.u32 8, %s32
      %p6063 = scmp.lt.s32.totalorder %s6062, 15
      %s6064 = scalar_select %p6063, %s6062, 15
      %s6065 = smul.addr %s6064, 2
      %s6066 = smul.addr %s6065, 8
      %s6067 = scalar_lea.vmem %s19, %s6066
      %s6068 = smul.u32 8, %s32
      %p6069 = scmp.lt.s32.totalorder %s6068, 15
      %s6070 = scalar_select %p6069, %s6068, 15
      %s6071 = smul.addr %s6070, 2
      %s6072 = smul.addr %s6071, 8
      %s6073 = scalar_lea.vmem %s20, %s6072
      // Predicated region
      $region97: #{cae4_forward.1} parent=95 // pred_check
        %p6074 = pneg %p454
      $region98: #{cae4_forward.1} parent=95 // pred_check_branch
        %6076 = sbr.rel (%p6074) target = $region100
      $region99: #{cae4_forward.1} parent=95 // pred_region
        %s6077 = smul.u32 8, %s32
      $region100: #{cae4_forward.1} parent=95 // pred_fallthru
        _
      // Predicated region
      $region101: #{cae4_forward.1} parent=95 // pred_check
        %p6078 = pneg %p480
      $region102: #{cae4_forward.1} parent=95 // pred_check_branch
        %6080 = sbr.rel (%p6078) target = $region104
      $region103: #{cae4_forward.1} parent=95 // pred_region
        %s6081 = smul.u32 8, %s32
      $region104: #{cae4_forward.1} parent=95 // pred_fallthru
        _
    $region96: #{cae4_forward.1} parent=5 // pred_fallthru
      _
    %p6082 = scmp.le.s32.totalorder 2, %s27
    // Predicated region
    $region105: #{cae4_forward.1} parent=5 // pred_check
      %p6083 = pneg %p6082
    $region106: #{cae4_forward.1} parent=5 // pred_check_branch
      %6085 = sbr.rel (%p6083) target = $region108
    $region107: #{cae4_forward.1} parent=5 // pred_region
      %s6086 = ssub.s32 %s27, 2
      // Predicated region
      $region109: #{cae4_forward.1} parent=107 // pred_check
        %p6087 = pneg %p460
      $region110: #{cae4_forward.1} parent=107 // pred_check_branch
        %6089 = sbr.rel (%p6087) target = $region112
      $region111: #{cae4_forward.1} parent=107 // pred_region
        %s6090 = smul.u32 8, %s33
        %p6091 = scmp.lt.s32.totalorder %s6090, 15
        %s6092 = scalar_select %p6091, %s6090, 15
        %s6093 = smul.addr %s6092, 2
        %s6094 = smul.addr %s6093, 8
        %s6095 = scalar_lea.vmem %s19, %s6094
      $region112: #{cae4_forward.1} parent=107 // pred_fallthru
        _
      // Predicated region
      $region113: #{cae4_forward.1} parent=107 // pred_check
        %p6096 = pneg %p486
      $region114: #{cae4_forward.1} parent=107 // pred_check_branch
        %6098 = sbr.rel (%p6096) target = $region116
      $region115: #{cae4_forward.1} parent=107 // pred_region
        %s6099 = smul.u32 8, %s33
        %p6100 = scmp.lt.s32.totalorder %s6099, 15
        %s6101 = scalar_select %p6100, %s6099, 15
        %s6102 = smul.addr %s6101, 2
        %s6103 = smul.addr %s6102, 8
        %s6104 = scalar_lea.vmem %s20, %s6103
      $region116: #{cae4_forward.1} parent=107 // pred_fallthru
        _
    $region108: #{cae4_forward.1} parent=5 // pred_fallthru
      _
  $region6: #{cae4_forward.1} parent=0 // loop_footer
    %s31 = sadd.s32 1, %s27
  $region7: #{cae4_forward.1} parent=0 // loop_footer_branch
    %26 = sbr.rel target = $region3
  $region8: #{cae4_forward.1} parent=0 // loop_exit
    _

</llo_original>
